<compile_context>
chip_gen: v7x
topology: tpu7x:2x2x1
jax: 0.10.0
libtpu: 0.0.40
codegen_flags: <defaults>
</compile_context>

<pallas_src>
import jax
import jax.numpy as jnp
from jax import lax
from jax.experimental import pallas as pl
from jax.experimental.pallas import tpu as pltpu

BN_EPS = 1e-5

# stride-2 (3x3, pad=1) tap tables on the phase-split, pre-padded input:
#   rows: both phases stored at [1:15] with a leading zero -> phase (1,0,1), start (0,1,1)
#   cols: even phase at [0:14] (zero appended), odd phase at [1:15] (zero prepended)
#         -> phase (1,0,1), start (0,0,1)
_RPH = (1, 0, 1)
_RST = (0, 1, 1)
_CPH = (1, 0, 1)
_CST = (0, 0, 1)


# ------------------------------- Pallas kernel -------------------------------

def _lfe_kernel(x_ref, w1_ref, b1_ref, w2_ref, b2_ref, o_ref, ipad_ref):
    """Fused 4-patch (dw3x3 s2 + BN + ReLU -> dw3x3 s1 + BN + ReLU).

    x_ref    : (B, 4, 15, 15, 4C) pre-padded phase-split input; phase f = 2*r+s
               with r/s the row/col parity; lanes = (col_half, row_half, C).
    w1_ref   : (9, 4C)  conv1 weights (BN1 scale folded in), tap = 3*kh+kw
    b1_ref   : (1, 4C)  BN1 shift
    w2_ref   : (9, 4C)  conv2 weights (BN2 scale folded in)
    b2_ref   : (1, 4C)  BN2 shift
    o_ref    : (B, 14, 14, 4C) quadrant-major output
    ipad_ref : (16, 24, 4C) VMEM scratch for the zero-padded conv1 output
    """
    B = x_ref.shape[0]
    C4 = o_ref.shape[-1]
    f32 = jnp.float32

    # hoist the (tiny) per-tap weight / shift loads out of the per-image loop
    w1v = [w1_ref[t, :][None, None, :] for t in range(9)]
    w2v = [w2_ref[t, :][None, None, :] for t in range(9)]
    b1v = b1_ref[0, :][None, None, :]
    b2v = b2_ref[0, :][None, None, :]

    # re-zero only the pad borders of the conv2 scratch each grid step (cheap,
    # aligned stores; done per step so "parallel" megacore execution is safe).
    ipad_ref[0, :, :] = jnp.zeros((24, C4), f32)
    ipad_ref[15, :, :] = jnp.zeros((24, C4), f32)
    ipad_ref[1:15, 0:8, :] = jnp.zeros((14, 8, C4), f32)
    ipad_ref[1:15, 16:24, :] = jnp.zeros((14, 8, C4), f32)

    for b in range(B):
        # ---- depthwise 3x3, stride 2, pad 1: computed directly at stride 2 on
        #      the pre-padded phase-split input (no staging copies). ----
        acc = None
        for kh in range(3):
            for kw in range(3):
                f = 2 * _RPH[kh] + _CPH[kw]
                win = x_ref[b, f,
                            _RST[kh]:_RST[kh] + 14,
                            _CST[kw]:_CST[kw] + 14, :]
                tap = win * w1v[3 * kh + kw]
                acc = tap if acc is None else acc + tap
        y = jnp.maximum(acc + b1v, 0.0)            # folded BN shift + ReLU

        # ---- depthwise 3x3, stride 1, pad 1 on the VMEM-resident intermediate.
        #      y sits at rows [1:15] (major dim, offset free) and cols [8:22]
        #      (sublane offset 8 -> tile-aligned store); the zero borders at
        #      rows 0/15 and cols 7/22 supply the conv padding, so all 9 taps
        #      are plain static-slice reads. ----
        ipad_ref[1:15, 8:22, :] = y
        acc = None
        for kh in range(3):
            for kw in range(3):
                win = ipad_ref[kh:kh + 14, 7 + kw:21 + kw, :]
                tap = win * w2v[3 * kh + kw]
                acc = tap if acc is None else acc + tap
        o_ref[b, :, :, :] = jnp.maximum(acc + b2v, 0.0).astype(o_ref.dtype)


def _lfe_pallas_call(x_ph, w1, b1, w2, b2, block_n):
    Np, _, _, _, C4 = x_ph.shape
    grid = (Np // block_n,)
    return pl.pallas_call(
        _lfe_kernel,
        out_shape=jax.ShapeDtypeStruct((Np, 14, 14, C4), jnp.float32),
        grid_spec=pltpu.PrefetchScalarGridSpec(
            num_scalar_prefetch=0,
            grid=grid,
            in_specs=[
                pl.BlockSpec((block_n, 4, 15, 15, C4), lambda n: (n, 0, 0, 0, 0)),
                pl.BlockSpec((9, C4), lambda n: (0, 0)),
                pl.BlockSpec((1, C4), lambda n: (0, 0)),
                pl.BlockSpec((9, C4), lambda n: (0, 0)),
                pl.BlockSpec((1, C4), lambda n: (0, 0)),
            ],
            out_specs=pl.BlockSpec((block_n, 14, 14, C4), lambda n: (n, 0, 0, 0)),
            scratch_shapes=[
                pltpu.VMEM((16, 24, C4), jnp.float32),   # padded conv1 output
            ],
        ),
        compiler_params=pltpu.CompilerParams(
            dimension_semantics=("parallel",),
            vmem_limit_bytes=32 * 1024 * 1024,
        ),
    )(x_ph, w1, b1, w2, b2)


# ----------------------------- parameter handling -----------------------------

def _fold_bn(gamma, beta, mean, var, eps=BN_EPS):
    scale = gamma / jnp.sqrt(var + eps)
    shift = beta - mean * scale
    return scale, shift


def _init_bn(key, c):
    k1, k2, k3, k4 = jax.random.split(key, 4)
    gamma = 1.0 + 0.1 * jax.random.normal(k1, (c,), jnp.float32)
    beta = 0.1 * jax.random.normal(k2, (c,), jnp.float32)
    mean = 0.1 * jax.random.normal(k3, (c,), jnp.float32)
    var = 1.0 + 0.1 * jnp.abs(jax.random.normal(k4, (c,), jnp.float32))
    return gamma, beta, mean, var


class LocalFeatureExtractorPallas:
    """JAX/Pallas port of efficientFace's LocalFeatureExtractor (eval mode)."""

    def __init__(self, inplanes, planes, index, key):
        assert planes % inplanes == 0, "depthwise multiplier must be integral"
        self.inplanes, self.planes, self.index = inplanes, planes, index
        self.mult = planes // inplanes

        # branches in PyTorch order: 0->conv1_* (patch_11), 1->conv2_* (patch_21),
        #                            2->conv3_* (patch_12), 3->conv4_* (patch_22)
        keys = jax.random.split(key, 16)
        self.branches = []
        for b in range(4):
            kw1, kb1, kw2, kb2 = keys[4 * b:4 * b + 4]
            wa = 0.1 * jax.random.normal(kw1, (planes, 3, 3), jnp.float32)
            bn1 = _init_bn(kb1, planes)
            wb = 0.1 * jax.random.normal(kw2, (planes, 3, 3), jnp.float32)
            bn2 = _init_bn(kb2, planes)
            self.branches.append((wa, bn1, wb, bn2))

        # pack for the kernel: branches concatenated along the lane axis in
        # order p = 2*col_half + row_half == branch index; BN scale folded in.
        w1p, b1p, w2p, b2p = [], [], [], []
        for b in range(4):
            wa, bn1, wb, bn2 = self.branches[b]
            s1, sh1 = _fold_bn(*bn1)
            s2, sh2 = _fold_bn(*bn2)
            w1p.append(wa.reshape(planes, 9).T * s1[None, :])   # (9, planes)
            w2p.append(wb.reshape(planes, 9).T * s2[None, :])
            b1p.append(sh1)
            b2p.append(sh2)
        C4 = 4 * planes
        self.w1 = jnp.concatenate(w1p, axis=1)            # (9, 4*planes)
        self.w2 = jnp.concatenate(w2p, axis=1)            # (9, 4*planes)
        self.b1 = jnp.concatenate(b1p).reshape(1, C4)      # (1, 4*planes)
        self.b2 = jnp.concatenate(b2p).reshape(1, C4)

    def __call__(self, x_nchw):
        N, Cin, H, W = x_nchw.shape
        assert Cin == self.inplanes and H >= 56 and W >= 56
        Cout, m = self.planes, self.mult
        C4 = 4 * Cout

        x = x_nchw[:, :, :56, :56]
        # Depthwise-multiplier channel expansion fused into the layout op.
        # (On v5e this could instead be replicated in-kernel to save HBM bytes.)
        x = x[:, jnp.arange(Cout) // m]                     # (N, Cout, 56, 56)
        # split rows/cols into (half, out_index, parity) and move patch+channel
        # onto the lane axis: lane = (col_half, row_half, Cout)
        x = x.reshape(N, Cout, 2, 14, 2, 2, 14, 2)          # (N,C,rh,i,r,ch,j,s)
        x = jnp.transpose(x, (0, 4, 7, 3, 6, 5, 2, 1))      # (N,r,s,i,j,ch,rh,C)
        x = x.reshape(N, 2, 2, 14, 14, C4)
        # asymmetric zero padding: rows -> leading zero (both parities);
        # cols -> even parity data at [0:14], odd parity data at [1:15]
        x_ev = jnp.pad(x[:, :, 0], ((0, 0), (0, 0), (1, 0), (0, 1), (0, 0)))
        x_od = jnp.pad(x[:, :, 1], ((0, 0), (0, 0), (1, 0), (1, 0), (0, 0)))
        x_ph = jnp.stack([x_ev, x_od], axis=2).reshape(N, 4, 15, 15, C4)

        # several images per grid step (amortize per-step overhead / DMA size)
        B = min(N, 8)
        Np = -(-N // B) * B
        if Np != N:
            x_ph = jnp.pad(x_ph, ((0, Np - N), (0, 0), (0, 0), (0, 0), (0, 0)))

        out = _lfe_pallas_call(x_ph, self.w1, self.b1, self.w2, self.b2, B)[:N]

        # (N,14,14,(ch,rh,C)) quadrant-major -> NCHW 28x28 quadrant layout
        out = out.reshape(N, 14, 14, 2, 2, Cout)            # (N,i,j,ch,rh,C)
        out = jnp.transpose(out, (0, 5, 4, 1, 3, 2))        # (N,C,rh,i,ch,j)
        return out.reshape(N, Cout, 28, 28)


# ----------------------- pure-JAX reference (for checking) --------------------

def _ref_dw_bn_relu(x_nchw, w, gamma, beta, mean, var, stride):
    cin = x_nchw.shape[1]
    y = lax.conv_general_dilated(
        x_nchw, w[:, None, :, :], (stride, stride), ((1, 1), (1, 1)),
        dimension_numbers=('NCHW', 'OIHW', 'NCHW'),
        feature_group_count=cin, precision=lax.Precision.HIGHEST)
    scale = gamma / jnp.sqrt(var + BN_EPS)
    shift = beta - mean * scale
    y = y * scale[None, :, None, None] + shift[None, :, None, None]
    return jnp.maximum(y, 0.0)


def ref_forward(mod, x):
    """Literal mirror of the PyTorch LocalFeatureExtractor.forward."""
    p11 = x[:, :, 0:28, 0:28]
    p21 = x[:, :, 28:56, 0:28]
    p12 = x[:, :, 0:28, 28:56]
    p22 = x[:, :, 28:56, 28:56]

    def run(p, branch):
        w1, bn1, w2, bn2 = branch
        y = _ref_dw_bn_relu(p, w1, *bn1, stride=2)
        y = _ref_dw_bn_relu(y, w2, *bn2, stride=1)
        return y

    o1 = run(p11, mod.branches[0])
    o2 = run(p21, mod.branches[1])
    o3 = run(p12, mod.branches[2])
    o4 = run(p22, mod.branches[3])
    out1 = jnp.concatenate([o1, o2], axis=2)
    out2 = jnp.concatenate([o3, o4], axis=2)
    return jnp.concatenate([out1, out2], axis=3)


# ------------------------------------ main ------------------------------------

if __name__ == "__main__":
    key = jax.random.PRNGKey(0)
    kx, kp = jax.random.split(key)

    # NCHW input; the forward's hard-coded 28/56 patch slicing implies 56x56.
    x = jax.random.normal(kx, (2, 4, 56, 56), jnp.float32)

    mod = LocalFeatureExtractorPallas(inplanes=4, planes=16, index=1, key=kp)

    fwd = jax.jit(lambda a: mod(a))
    out = jax.block_until_ready(fwd(x))
    assert out.shape == (2, 16, 28, 28), out.shape

    ref = ref_forward(mod, x)
    max_err = float(jnp.max(jnp.abs(out - ref)))
    assert bool(jnp.allclose(out, ref, atol=1e-4, rtol=1e-4)), \
        f"mismatch vs reference: max|diff|={max_err}"

    print("KERNEL_OK")
</pallas_src>

<mosaic_0001>
module attributes {stable_mosaic.version = 11 : i64} {
  func.func @_lfe_kernel(%arg0: i32, %arg1: memref<2x4x15x15x64xf32, #tpu.memory_space<vmem>>, %arg2: memref<9x64xf32, #tpu.memory_space<vmem>>, %arg3: memref<1x64xf32, #tpu.memory_space<vmem>>, %arg4: memref<9x64xf32, #tpu.memory_space<vmem>>, %arg5: memref<1x64xf32, #tpu.memory_space<vmem>>, %arg6: memref<2x14x14x64xf32, #tpu.memory_space<vmem>>, %arg7: memref<16x24x64xf32, #tpu.memory_space<vmem>>) attributes {dimension_semantics = [#tpu.dimension_semantics<parallel>], iteration_bounds = array<i64: 1>, scalar_prefetch = 0 : i64, scratch_operands = 1 : i64, tpu.core_type = #tpu.core_type<tc>, window_params = [{transform_indices = @transform_0, window_bounds = array<i64: 2, 4, 15, 15, 64>}, {pipeline_mode = #tpu.pipeline_mode<synchronous>, transform_indices = @transform_1, window_bounds = array<i64: 9, 64>}, {pipeline_mode = #tpu.pipeline_mode<synchronous>, transform_indices = @transform_2, window_bounds = array<i64: 1, 64>}, {pipeline_mode = #tpu.pipeline_mode<synchronous>, transform_indices = @transform_3, window_bounds = array<i64: 9, 64>}, {pipeline_mode = #tpu.pipeline_mode<synchronous>, transform_indices = @transform_4, window_bounds = array<i64: 1, 64>}, {transform_indices = @transform_5, window_bounds = array<i64: 2, 14, 14, 64>}]} {
    %c0 = arith.constant 0 : index
    %c0_0 = arith.constant 0 : index
    %0 = vector.load %arg2[%c0, %c0_0] : memref<9x64xf32, #tpu.memory_space<vmem>>, vector<1x64xf32>
    %1 = vector.shape_cast %0 : vector<1x64xf32> to vector<64xf32>
    %2 = vector.shape_cast %1 : vector<64xf32> to vector<1x1x64xf32>
    %c1 = arith.constant 1 : index
    %c0_1 = arith.constant 0 : index
    %3 = vector.load %arg2[%c1, %c0_1] : memref<9x64xf32, #tpu.memory_space<vmem>>, vector<1x64xf32>
    %4 = vector.shape_cast %3 : vector<1x64xf32> to vector<64xf32>
    %5 = vector.shape_cast %4 : vector<64xf32> to vector<1x1x64xf32>
    %c2 = arith.constant 2 : index
    %c0_2 = arith.constant 0 : index
    %6 = vector.load %arg2[%c2, %c0_2] : memref<9x64xf32, #tpu.memory_space<vmem>>, vector<1x64xf32>
    %7 = vector.shape_cast %6 : vector<1x64xf32> to vector<64xf32>
    %8 = vector.shape_cast %7 : vector<64xf32> to vector<1x1x64xf32>
    %c3 = arith.constant 3 : index
    %c0_3 = arith.constant 0 : index
    %9 = vector.load %arg2[%c3, %c0_3] : memref<9x64xf32, #tpu.memory_space<vmem>>, vector<1x64xf32>
    %10 = vector.shape_cast %9 : vector<1x64xf32> to vector<64xf32>
    %11 = vector.shape_cast %10 : vector<64xf32> to vector<1x1x64xf32>
    %c4 = arith.constant 4 : index
    %c0_4 = arith.constant 0 : index
    %12 = vector.load %arg2[%c4, %c0_4] : memref<9x64xf32, #tpu.memory_space<vmem>>, vector<1x64xf32>
    %13 = vector.shape_cast %12 : vector<1x64xf32> to vector<64xf32>
    %14 = vector.shape_cast %13 : vector<64xf32> to vector<1x1x64xf32>
    %c5 = arith.constant 5 : index
    %c0_5 = arith.constant 0 : index
    %15 = vector.load %arg2[%c5, %c0_5] : memref<9x64xf32, #tpu.memory_space<vmem>>, vector<1x64xf32>
    %16 = vector.shape_cast %15 : vector<1x64xf32> to vector<64xf32>
    %17 = vector.shape_cast %16 : vector<64xf32> to vector<1x1x64xf32>
    %c6 = arith.constant 6 : index
    %c0_6 = arith.constant 0 : index
    %18 = vector.load %arg2[%c6, %c0_6] : memref<9x64xf32, #tpu.memory_space<vmem>>, vector<1x64xf32>
    %19 = vector.shape_cast %18 : vector<1x64xf32> to vector<64xf32>
    %20 = vector.shape_cast %19 : vector<64xf32> to vector<1x1x64xf32>
    %c7 = arith.constant 7 : index
    %c0_7 = arith.constant 0 : index
    %21 = vector.load %arg2[%c7, %c0_7] : memref<9x64xf32, #tpu.memory_space<vmem>>, vector<1x64xf32>
    %22 = vector.shape_cast %21 : vector<1x64xf32> to vector<64xf32>
    %23 = vector.shape_cast %22 : vector<64xf32> to vector<1x1x64xf32>
    %c8 = arith.constant 8 : index
    %c0_8 = arith.constant 0 : index
    %24 = vector.load %arg2[%c8, %c0_8] : memref<9x64xf32, #tpu.memory_space<vmem>>, vector<1x64xf32>
    %25 = vector.shape_cast %24 : vector<1x64xf32> to vector<64xf32>
    %26 = vector.shape_cast %25 : vector<64xf32> to vector<1x1x64xf32>
    %c0_9 = arith.constant 0 : index
    %c0_10 = arith.constant 0 : index
    %27 = vector.load %arg4[%c0_9, %c0_10] : memref<9x64xf32, #tpu.memory_space<vmem>>, vector<1x64xf32>
    %28 = vector.shape_cast %27 : vector<1x64xf32> to vector<64xf32>
    %29 = vector.shape_cast %28 : vector<64xf32> to vector<1x1x64xf32>
    %c1_11 = arith.constant 1 : index
    %c0_12 = arith.constant 0 : index
    %30 = vector.load %arg4[%c1_11, %c0_12] : memref<9x64xf32, #tpu.memory_space<vmem>>, vector<1x64xf32>
    %31 = vector.shape_cast %30 : vector<1x64xf32> to vector<64xf32>
    %32 = vector.shape_cast %31 : vector<64xf32> to vector<1x1x64xf32>
    %c2_13 = arith.constant 2 : index
    %c0_14 = arith.constant 0 : index
    %33 = vector.load %arg4[%c2_13, %c0_14] : memref<9x64xf32, #tpu.memory_space<vmem>>, vector<1x64xf32>
    %34 = vector.shape_cast %33 : vector<1x64xf32> to vector<64xf32>
    %35 = vector.shape_cast %34 : vector<64xf32> to vector<1x1x64xf32>
    %c3_15 = arith.constant 3 : index
    %c0_16 = arith.constant 0 : index
    %36 = vector.load %arg4[%c3_15, %c0_16] : memref<9x64xf32, #tpu.memory_space<vmem>>, vector<1x64xf32>
    %37 = vector.shape_cast %36 : vector<1x64xf32> to vector<64xf32>
    %38 = vector.shape_cast %37 : vector<64xf32> to vector<1x1x64xf32>
    %c4_17 = arith.constant 4 : index
    %c0_18 = arith.constant 0 : index
    %39 = vector.load %arg4[%c4_17, %c0_18] : memref<9x64xf32, #tpu.memory_space<vmem>>, vector<1x64xf32>
    %40 = vector.shape_cast %39 : vector<1x64xf32> to vector<64xf32>
    %41 = vector.shape_cast %40 : vector<64xf32> to vector<1x1x64xf32>
    %c5_19 = arith.constant 5 : index
    %c0_20 = arith.constant 0 : index
    %42 = vector.load %arg4[%c5_19, %c0_20] : memref<9x64xf32, #tpu.memory_space<vmem>>, vector<1x64xf32>
    %43 = vector.shape_cast %42 : vector<1x64xf32> to vector<64xf32>
    %44 = vector.shape_cast %43 : vector<64xf32> to vector<1x1x64xf32>
    %c6_21 = arith.constant 6 : index
    %c0_22 = arith.constant 0 : index
    %45 = vector.load %arg4[%c6_21, %c0_22] : memref<9x64xf32, #tpu.memory_space<vmem>>, vector<1x64xf32>
    %46 = vector.shape_cast %45 : vector<1x64xf32> to vector<64xf32>
    %47 = vector.shape_cast %46 : vector<64xf32> to vector<1x1x64xf32>
    %c7_23 = arith.constant 7 : index
    %c0_24 = arith.constant 0 : index
    %48 = vector.load %arg4[%c7_23, %c0_24] : memref<9x64xf32, #tpu.memory_space<vmem>>, vector<1x64xf32>
    %49 = vector.shape_cast %48 : vector<1x64xf32> to vector<64xf32>
    %50 = vector.shape_cast %49 : vector<64xf32> to vector<1x1x64xf32>
    %c8_25 = arith.constant 8 : index
    %c0_26 = arith.constant 0 : index
    %51 = vector.load %arg4[%c8_25, %c0_26] : memref<9x64xf32, #tpu.memory_space<vmem>>, vector<1x64xf32>
    %52 = vector.shape_cast %51 : vector<1x64xf32> to vector<64xf32>
    %53 = vector.shape_cast %52 : vector<64xf32> to vector<1x1x64xf32>
    %c0_27 = arith.constant 0 : index
    %c0_28 = arith.constant 0 : index
    %54 = vector.load %arg3[%c0_27, %c0_28] : memref<1x64xf32, #tpu.memory_space<vmem>>, vector<1x64xf32>
    %55 = vector.shape_cast %54 : vector<1x64xf32> to vector<64xf32>
    %56 = vector.shape_cast %55 : vector<64xf32> to vector<1x1x64xf32>
    %c0_29 = arith.constant 0 : index
    %c0_30 = arith.constant 0 : index
    %57 = vector.load %arg5[%c0_29, %c0_30] : memref<1x64xf32, #tpu.memory_space<vmem>>, vector<1x64xf32>
    %58 = vector.shape_cast %57 : vector<1x64xf32> to vector<64xf32>
    %59 = vector.shape_cast %58 : vector<64xf32> to vector<1x1x64xf32>
    %cst = arith.constant 0.000000e+00 : f32
    %60 = vector.broadcast %cst : f32 to vector<24x64xf32>
    %c0_31 = arith.constant 0 : index
    %c0_32 = arith.constant 0 : index
    %c0_33 = arith.constant 0 : index
    %61 = vector.load %arg7[%c0_31, %c0_32, %c0_33] : memref<16x24x64xf32, #tpu.memory_space<vmem>>, vector<1x24x64xf32>
    %62 = vector.shape_cast %61 : vector<1x24x64xf32> to vector<24x64xf32>
    %63 = vector.shape_cast %60 : vector<24x64xf32> to vector<1x24x64xf32>
    tpu.vector_store %arg7[%c0_31, %c0_32, %c0_33], %63 {strides = array<i32>} : memref<16x24x64xf32, #tpu.memory_space<vmem>>, vector<1x24x64xf32>,
    %cst_34 = arith.constant 0.000000e+00 : f32
    %64 = vector.broadcast %cst_34 : f32 to vector<24x64xf32>
    %c15 = arith.constant 15 : index
    %c0_35 = arith.constant 0 : index
    %c0_36 = arith.constant 0 : index
    %65 = vector.load %arg7[%c15, %c0_35, %c0_36] : memref<16x24x64xf32, #tpu.memory_space<vmem>>, vector<1x24x64xf32>
    %66 = vector.shape_cast %65 : vector<1x24x64xf32> to vector<24x64xf32>
    %67 = vector.shape_cast %64 : vector<24x64xf32> to vector<1x24x64xf32>
    tpu.vector_store %arg7[%c15, %c0_35, %c0_36], %67 {strides = array<i32>} : memref<16x24x64xf32, #tpu.memory_space<vmem>>, vector<1x24x64xf32>,
    %cst_37 = arith.constant 0.000000e+00 : f32
    %68 = vector.broadcast %cst_37 : f32 to vector<14x8x64xf32>
    %c1_38 = arith.constant 1 : index
    %c0_39 = arith.constant 0 : index
    %c0_40 = arith.constant 0 : index
    %69 = vector.load %arg7[%c1_38, %c0_39, %c0_40] : memref<16x24x64xf32, #tpu.memory_space<vmem>>, vector<14x8x64xf32>
    tpu.vector_store %arg7[%c1_38, %c0_39, %c0_40], %68 {strides = array<i32>} : memref<16x24x64xf32, #tpu.memory_space<vmem>>, vector<14x8x64xf32>,
    %cst_41 = arith.constant 0.000000e+00 : f32
    %70 = vector.broadcast %cst_41 : f32 to vector<14x8x64xf32>
    %c1_42 = arith.constant 1 : index
    %c16 = arith.constant 16 : index
    %c0_43 = arith.constant 0 : index
    %71 = vector.load %arg7[%c1_42, %c16, %c0_43] : memref<16x24x64xf32, #tpu.memory_space<vmem>>, vector<14x8x64xf32>
    tpu.vector_store %arg7[%c1_42, %c16, %c0_43], %70 {strides = array<i32>} : memref<16x24x64xf32, #tpu.memory_space<vmem>>, vector<14x8x64xf32>,
    %c0_44 = arith.constant 0 : index
    %c3_45 = arith.constant 3 : index
    %c0_46 = arith.constant 0 : index
    %c0_47 = arith.constant 0 : index
    %c0_48 = arith.constant 0 : index
    %72 = vector.load %arg1[%c0_44, %c3_45, %c0_46, %c0_47, %c0_48] : memref<2x4x15x15x64xf32, #tpu.memory_space<vmem>>, vector<1x1x14x14x64xf32>
    %73 = vector.shape_cast %72 : vector<1x1x14x14x64xf32> to vector<14x14x64xf32>
    %74 = vector.broadcast %2 : vector<1x1x64xf32> to vector<14x14x64xf32>
    %75 = arith.mulf %73, %74 : vector<14x14x64xf32>
    %c0_49 = arith.constant 0 : index
    %c2_50 = arith.constant 2 : index
    %c0_51 = arith.constant 0 : index
    %c0_52 = arith.constant 0 : index
    %c0_53 = arith.constant 0 : index
    %76 = vector.load %arg1[%c0_49, %c2_50, %c0_51, %c0_52, %c0_53] : memref<2x4x15x15x64xf32, #tpu.memory_space<vmem>>, vector<1x1x14x14x64xf32>
    %77 = vector.shape_cast %76 : vector<1x1x14x14x64xf32> to vector<14x14x64xf32>
    %78 = vector.broadcast %5 : vector<1x1x64xf32> to vector<14x14x64xf32>
    %79 = arith.mulf %77, %78 : vector<14x14x64xf32>
    %80 = arith.addf %75, %79 : vector<14x14x64xf32>
    %c0_54 = arith.constant 0 : index
    %c3_55 = arith.constant 3 : index
    %c0_56 = arith.constant 0 : index
    %c1_57 = arith.constant 1 : index
    %c0_58 = arith.constant 0 : index
    %81 = vector.load %arg1[%c0_54, %c3_55, %c0_56, %c1_57, %c0_58] : memref<2x4x15x15x64xf32, #tpu.memory_space<vmem>>, vector<1x1x14x14x64xf32>
    %82 = vector.shape_cast %81 : vector<1x1x14x14x64xf32> to vector<14x14x64xf32>
    %83 = vector.broadcast %8 : vector<1x1x64xf32> to vector<14x14x64xf32>
    %84 = arith.mulf %82, %83 : vector<14x14x64xf32>
    %85 = arith.addf %80, %84 : vector<14x14x64xf32>
    %c0_59 = arith.constant 0 : index
    %c1_60 = arith.constant 1 : index
    %c1_61 = arith.constant 1 : index
    %c0_62 = arith.constant 0 : index
    %c0_63 = arith.constant 0 : index
    %86 = vector.load %arg1[%c0_59, %c1_60, %c1_61, %c0_62, %c0_63] : memref<2x4x15x15x64xf32, #tpu.memory_space<vmem>>, vector<1x1x14x14x64xf32>
    %87 = vector.shape_cast %86 : vector<1x1x14x14x64xf32> to vector<14x14x64xf32>
    %88 = vector.broadcast %11 : vector<1x1x64xf32> to vector<14x14x64xf32>
    %89 = arith.mulf %87, %88 : vector<14x14x64xf32>
    %90 = arith.addf %85, %89 : vector<14x14x64xf32>
    %c0_64 = arith.constant 0 : index
    %c0_65 = arith.constant 0 : index
    %c1_66 = arith.constant 1 : index
    %c0_67 = arith.constant 0 : index
    %c0_68 = arith.constant 0 : index
    %91 = vector.load %arg1[%c0_64, %c0_65, %c1_66, %c0_67, %c0_68] : memref<2x4x15x15x64xf32, #tpu.memory_space<vmem>>, vector<1x1x14x14x64xf32>
    %92 = vector.shape_cast %91 : vector<1x1x14x14x64xf32> to vector<14x14x64xf32>
    %93 = vector.broadcast %14 : vector<1x1x64xf32> to vector<14x14x64xf32>
    %94 = arith.mulf %92, %93 : vector<14x14x64xf32>
    %95 = arith.addf %90, %94 : vector<14x14x64xf32>
    %c0_69 = arith.constant 0 : index
    %c1_70 = arith.constant 1 : index
    %c1_71 = arith.constant 1 : index
    %c1_72 = arith.constant 1 : index
    %c0_73 = arith.constant 0 : index
    %96 = vector.load %arg1[%c0_69, %c1_70, %c1_71, %c1_72, %c0_73] : memref<2x4x15x15x64xf32, #tpu.memory_space<vmem>>, vector<1x1x14x14x64xf32>
    %97 = vector.shape_cast %96 : vector<1x1x14x14x64xf32> to vector<14x14x64xf32>
    %98 = vector.broadcast %17 : vector<1x1x64xf32> to vector<14x14x64xf32>
    %99 = arith.mulf %97, %98 : vector<14x14x64xf32>
    %100 = arith.addf %95, %99 : vector<14x14x64xf32>
    %c0_74 = arith.constant 0 : index
    %c3_75 = arith.constant 3 : index
    %c1_76 = arith.constant 1 : index
    %c0_77 = arith.constant 0 : index
    %c0_78 = arith.constant 0 : index
    %101 = vector.load %arg1[%c0_74, %c3_75, %c1_76, %c0_77, %c0_78] : memref<2x4x15x15x64xf32, #tpu.memory_space<vmem>>, vector<1x1x14x14x64xf32>
    %102 = vector.shape_cast %101 : vector<1x1x14x14x64xf32> to vector<14x14x64xf32>
    %103 = vector.broadcast %20 : vector<1x1x64xf32> to vector<14x14x64xf32>
    %104 = arith.mulf %102, %103 : vector<14x14x64xf32>
    %105 = arith.addf %100, %104 : vector<14x14x64xf32>
    %c0_79 = arith.constant 0 : index
    %c2_80 = arith.constant 2 : index
    %c1_81 = arith.constant 1 : index
    %c0_82 = arith.constant 0 : index
    %c0_83 = arith.constant 0 : index
    %106 = vector.load %arg1[%c0_79, %c2_80, %c1_81, %c0_82, %c0_83] : memref<2x4x15x15x64xf32, #tpu.memory_space<vmem>>, vector<1x1x14x14x64xf32>
    %107 = vector.shape_cast %106 : vector<1x1x14x14x64xf32> to vector<14x14x64xf32>
    %108 = vector.broadcast %23 : vector<1x1x64xf32> to vector<14x14x64xf32>
    %109 = arith.mulf %107, %108 : vector<14x14x64xf32>
    %110 = arith.addf %105, %109 : vector<14x14x64xf32>
    %c0_84 = arith.constant 0 : index
    %c3_85 = arith.constant 3 : index
    %c1_86 = arith.constant 1 : index
    %c1_87 = arith.constant 1 : index
    %c0_88 = arith.constant 0 : index
    %111 = vector.load %arg1[%c0_84, %c3_85, %c1_86, %c1_87, %c0_88] : memref<2x4x15x15x64xf32, #tpu.memory_space<vmem>>, vector<1x1x14x14x64xf32>
    %112 = vector.shape_cast %111 : vector<1x1x14x14x64xf32> to vector<14x14x64xf32>
    %113 = vector.broadcast %26 : vector<1x1x64xf32> to vector<14x14x64xf32>
    %114 = arith.mulf %112, %113 : vector<14x14x64xf32>
    %115 = arith.addf %110, %114 : vector<14x14x64xf32>
    %116 = vector.broadcast %56 : vector<1x1x64xf32> to vector<14x14x64xf32>
    %117 = arith.addf %115, %116 : vector<14x14x64xf32>
    %cst_89 = arith.constant 0.000000e+00 : f32
    %118 = vector.broadcast %cst_89 : f32 to vector<14x14x64xf32>
    %119 = arith.maximumf %117, %118 : vector<14x14x64xf32>
    %c1_90 = arith.constant 1 : index
    %c8_91 = arith.constant 8 : index
    %c0_92 = arith.constant 0 : index
    %120 = vector.load %arg7[%c1_90, %c8_91, %c0_92] : memref<16x24x64xf32, #tpu.memory_space<vmem>>, vector<14x14x64xf32>
    tpu.vector_store %arg7[%c1_90, %c8_91, %c0_92], %119 {strides = array<i32>} : memref<16x24x64xf32, #tpu.memory_space<vmem>>, vector<14x14x64xf32>,
    %c0_93 = arith.constant 0 : index
    %c7_94 = arith.constant 7 : index
    %c0_95 = arith.constant 0 : index
    %121 = vector.load %arg7[%c0_93, %c7_94, %c0_95] : memref<16x24x64xf32, #tpu.memory_space<vmem>>, vector<14x14x64xf32>
    %122 = vector.broadcast %29 : vector<1x1x64xf32> to vector<14x14x64xf32>
    %123 = arith.mulf %121, %122 : vector<14x14x64xf32>
    %c0_96 = arith.constant 0 : index
    %c8_97 = arith.constant 8 : index
    %c0_98 = arith.constant 0 : index
    %124 = vector.load %arg7[%c0_96, %c8_97, %c0_98] : memref<16x24x64xf32, #tpu.memory_space<vmem>>, vector<14x14x64xf32>
    %125 = vector.broadcast %32 : vector<1x1x64xf32> to vector<14x14x64xf32>
    %126 = arith.mulf %124, %125 : vector<14x14x64xf32>
    %127 = arith.addf %123, %126 : vector<14x14x64xf32>
    %c0_99 = arith.constant 0 : index
    %c9 = arith.constant 9 : index
    %c0_100 = arith.constant 0 : index
    %128 = vector.load %arg7[%c0_99, %c9, %c0_100] : memref<16x24x64xf32, #tpu.memory_space<vmem>>, vector<14x14x64xf32>
    %129 = vector.broadcast %35 : vector<1x1x64xf32> to vector<14x14x64xf32>
    %130 = arith.mulf %128, %129 : vector<14x14x64xf32>
    %131 = arith.addf %127, %130 : vector<14x14x64xf32>
    %c1_101 = arith.constant 1 : index
    %c7_102 = arith.constant 7 : index
    %c0_103 = arith.constant 0 : index
    %132 = vector.load %arg7[%c1_101, %c7_102, %c0_103] : memref<16x24x64xf32, #tpu.memory_space<vmem>>, vector<14x14x64xf32>
    %133 = vector.broadcast %38 : vector<1x1x64xf32> to vector<14x14x64xf32>
    %134 = arith.mulf %132, %133 : vector<14x14x64xf32>
    %135 = arith.addf %131, %134 : vector<14x14x64xf32>
    %c1_104 = arith.constant 1 : index
    %c8_105 = arith.constant 8 : index
    %c0_106 = arith.constant 0 : index
    %136 = vector.load %arg7[%c1_104, %c8_105, %c0_106] : memref<16x24x64xf32, #tpu.memory_space<vmem>>, vector<14x14x64xf32>
    %137 = vector.broadcast %41 : vector<1x1x64xf32> to vector<14x14x64xf32>
    %138 = arith.mulf %136, %137 : vector<14x14x64xf32>
    %139 = arith.addf %135, %138 : vector<14x14x64xf32>
    %c1_107 = arith.constant 1 : index
    %c9_108 = arith.constant 9 : index
    %c0_109 = arith.constant 0 : index
    %140 = vector.load %arg7[%c1_107, %c9_108, %c0_109] : memref<16x24x64xf32, #tpu.memory_space<vmem>>, vector<14x14x64xf32>
    %141 = vector.broadcast %44 : vector<1x1x64xf32> to vector<14x14x64xf32>
    %142 = arith.mulf %140, %141 : vector<14x14x64xf32>
    %143 = arith.addf %139, %142 : vector<14x14x64xf32>
    %c2_110 = arith.constant 2 : index
    %c7_111 = arith.constant 7 : index
    %c0_112 = arith.constant 0 : index
    %144 = vector.load %arg7[%c2_110, %c7_111, %c0_112] : memref<16x24x64xf32, #tpu.memory_space<vmem>>, vector<14x14x64xf32>
    %145 = vector.broadcast %47 : vector<1x1x64xf32> to vector<14x14x64xf32>
    %146 = arith.mulf %144, %145 : vector<14x14x64xf32>
    %147 = arith.addf %143, %146 : vector<14x14x64xf32>
    %c2_113 = arith.constant 2 : index
    %c8_114 = arith.constant 8 : index
    %c0_115 = arith.constant 0 : index
    %148 = vector.load %arg7[%c2_113, %c8_114, %c0_115] : memref<16x24x64xf32, #tpu.memory_space<vmem>>, vector<14x14x64xf32>
    %149 = vector.broadcast %50 : vector<1x1x64xf32> to vector<14x14x64xf32>
    %150 = arith.mulf %148, %149 : vector<14x14x64xf32>
    %151 = arith.addf %147, %150 : vector<14x14x64xf32>
    %c2_116 = arith.constant 2 : index
    %c9_117 = arith.constant 9 : index
    %c0_118 = arith.constant 0 : index
    %152 = vector.load %arg7[%c2_116, %c9_117, %c0_118] : memref<16x24x64xf32, #tpu.memory_space<vmem>>, vector<14x14x64xf32>
    %153 = vector.broadcast %53 : vector<1x1x64xf32> to vector<14x14x64xf32>
    %154 = arith.mulf %152, %153 : vector<14x14x64xf32>
    %155 = arith.addf %151, %154 : vector<14x14x64xf32>
    %156 = vector.broadcast %59 : vector<1x1x64xf32> to vector<14x14x64xf32>
    %157 = arith.addf %155, %156 : vector<14x14x64xf32>
    %cst_119 = arith.constant 0.000000e+00 : f32
    %158 = vector.broadcast %cst_119 : f32 to vector<14x14x64xf32>
    %159 = arith.maximumf %157, %158 : vector<14x14x64xf32>
    %c0_120 = arith.constant 0 : index
    %c0_121 = arith.constant 0 : index
    %c0_122 = arith.constant 0 : index
    %c0_123 = arith.constant 0 : index
    %160 = vector.load %arg6[%c0_120, %c0_121, %c0_122, %c0_123] : memref<2x14x14x64xf32, #tpu.memory_space<vmem>>, vector<1x14x14x64xf32>
    %161 = vector.shape_cast %160 : vector<1x14x14x64xf32> to vector<14x14x64xf32>
    %162 = vector.shape_cast %159 : vector<14x14x64xf32> to vector<1x14x14x64xf32>
    tpu.vector_store %arg6[%c0_120, %c0_121, %c0_122, %c0_123], %162 {strides = array<i32>} : memref<2x14x14x64xf32, #tpu.memory_space<vmem>>, vector<1x14x14x64xf32>,
    %c1_124 = arith.constant 1 : index
    %c3_125 = arith.constant 3 : index
    %c0_126 = arith.constant 0 : index
    %c0_127 = arith.constant 0 : index
    %c0_128 = arith.constant 0 : index
    %163 = vector.load %arg1[%c1_124, %c3_125, %c0_126, %c0_127, %c0_128] : memref<2x4x15x15x64xf32, #tpu.memory_space<vmem>>, vector<1x1x14x14x64xf32>
    %164 = vector.shape_cast %163 : vector<1x1x14x14x64xf32> to vector<14x14x64xf32>
    %165 = vector.broadcast %2 : vector<1x1x64xf32> to vector<14x14x64xf32>
    %166 = arith.mulf %164, %165 : vector<14x14x64xf32>
    %c1_129 = arith.constant 1 : index
    %c2_130 = arith.constant 2 : index
    %c0_131 = arith.constant 0 : index
    %c0_132 = arith.constant 0 : index
    %c0_133 = arith.constant 0 : index
    %167 = vector.load %arg1[%c1_129, %c2_130, %c0_131, %c0_132, %c0_133] : memref<2x4x15x15x64xf32, #tpu.memory_space<vmem>>, vector<1x1x14x14x64xf32>
    %168 = vector.shape_cast %167 : vector<1x1x14x14x64xf32> to vector<14x14x64xf32>
    %169 = vector.broadcast %5 : vector<1x1x64xf32> to vector<14x14x64xf32>
    %170 = arith.mulf %168, %169 : vector<14x14x64xf32>
    %171 = arith.addf %166, %170 : vector<14x14x64xf32>
    %c1_134 = arith.constant 1 : index
    %c3_135 = arith.constant 3 : index
    %c0_136 = arith.constant 0 : index
    %c1_137 = arith.constant 1 : index
    %c0_138 = arith.constant 0 : index
    %172 = vector.load %arg1[%c1_134, %c3_135, %c0_136, %c1_137, %c0_138] : memref<2x4x15x15x64xf32, #tpu.memory_space<vmem>>, vector<1x1x14x14x64xf32>
    %173 = vector.shape_cast %172 : vector<1x1x14x14x64xf32> to vector<14x14x64xf32>
    %174 = vector.broadcast %8 : vector<1x1x64xf32> to vector<14x14x64xf32>
    %175 = arith.mulf %173, %174 : vector<14x14x64xf32>
    %176 = arith.addf %171, %175 : vector<14x14x64xf32>
    %c1_139 = arith.constant 1 : index
    %c1_140 = arith.constant 1 : index
    %c1_141 = arith.constant 1 : index
    %c0_142 = arith.constant 0 : index
    %c0_143 = arith.constant 0 : index
    %177 = vector.load %arg1[%c1_139, %c1_140, %c1_141, %c0_142, %c0_143] : memref<2x4x15x15x64xf32, #tpu.memory_space<vmem>>, vector<1x1x14x14x64xf32>
    %178 = vector.shape_cast %177 : vector<1x1x14x14x64xf32> to vector<14x14x64xf32>
    %179 = vector.broadcast %11 : vector<1x1x64xf32> to vector<14x14x64xf32>
    %180 = arith.mulf %178, %179 : vector<14x14x64xf32>
    %181 = arith.addf %176, %180 : vector<14x14x64xf32>
    %c1_144 = arith.constant 1 : index
    %c0_145 = arith.constant 0 : index
    %c1_146 = arith.constant 1 : index
    %c0_147 = arith.constant 0 : index
    %c0_148 = arith.constant 0 : index
    %182 = vector.load %arg1[%c1_144, %c0_145, %c1_146, %c0_147, %c0_148] : memref<2x4x15x15x64xf32, #tpu.memory_space<vmem>>, vector<1x1x14x14x64xf32>
    %183 = vector.shape_cast %182 : vector<1x1x14x14x64xf32> to vector<14x14x64xf32>
    %184 = vector.broadcast %14 : vector<1x1x64xf32> to vector<14x14x64xf32>
    %185 = arith.mulf %183, %184 : vector<14x14x64xf32>
    %186 = arith.addf %181, %185 : vector<14x14x64xf32>
    %c1_149 = arith.constant 1 : index
    %c1_150 = arith.constant 1 : index
    %c1_151 = arith.constant 1 : index
    %c1_152 = arith.constant 1 : index
    %c0_153 = arith.constant 0 : index
    %187 = vector.load %arg1[%c1_149, %c1_150, %c1_151, %c1_152, %c0_153] : memref<2x4x15x15x64xf32, #tpu.memory_space<vmem>>, vector<1x1x14x14x64xf32>
    %188 = vector.shape_cast %187 : vector<1x1x14x14x64xf32> to vector<14x14x64xf32>
    %189 = vector.broadcast %17 : vector<1x1x64xf32> to vector<14x14x64xf32>
    %190 = arith.mulf %188, %189 : vector<14x14x64xf32>
    %191 = arith.addf %186, %190 : vector<14x14x64xf32>
    %c1_154 = arith.constant 1 : index
    %c3_155 = arith.constant 3 : index
    %c1_156 = arith.constant 1 : index
    %c0_157 = arith.constant 0 : index
    %c0_158 = arith.constant 0 : index
    %192 = vector.load %arg1[%c1_154, %c3_155, %c1_156, %c0_157, %c0_158] : memref<2x4x15x15x64xf32, #tpu.memory_space<vmem>>, vector<1x1x14x14x64xf32>
    %193 = vector.shape_cast %192 : vector<1x1x14x14x64xf32> to vector<14x14x64xf32>
    %194 = vector.broadcast %20 : vector<1x1x64xf32> to vector<14x14x64xf32>
    %195 = arith.mulf %193, %194 : vector<14x14x64xf32>
    %196 = arith.addf %191, %195 : vector<14x14x64xf32>
    %c1_159 = arith.constant 1 : index
    %c2_160 = arith.constant 2 : index
    %c1_161 = arith.constant 1 : index
    %c0_162 = arith.constant 0 : index
    %c0_163 = arith.constant 0 : index
    %197 = vector.load %arg1[%c1_159, %c2_160, %c1_161, %c0_162, %c0_163] : memref<2x4x15x15x64xf32, #tpu.memory_space<vmem>>, vector<1x1x14x14x64xf32>
    %198 = vector.shape_cast %197 : vector<1x1x14x14x64xf32> to vector<14x14x64xf32>
    %199 = vector.broadcast %23 : vector<1x1x64xf32> to vector<14x14x64xf32>
    %200 = arith.mulf %198, %199 : vector<14x14x64xf32>
    %201 = arith.addf %196, %200 : vector<14x14x64xf32>
    %c1_164 = arith.constant 1 : index
    %c3_165 = arith.constant 3 : index
    %c1_166 = arith.constant 1 : index
    %c1_167 = arith.constant 1 : index
    %c0_168 = arith.constant 0 : index
    %202 = vector.load %arg1[%c1_164, %c3_165, %c1_166, %c1_167, %c0_168] : memref<2x4x15x15x64xf32, #tpu.memory_space<vmem>>, vector<1x1x14x14x64xf32>
    %203 = vector.shape_cast %202 : vector<1x1x14x14x64xf32> to vector<14x14x64xf32>
    %204 = vector.broadcast %26 : vector<1x1x64xf32> to vector<14x14x64xf32>
    %205 = arith.mulf %203, %204 : vector<14x14x64xf32>
    %206 = arith.addf %201, %205 : vector<14x14x64xf32>
    %207 = vector.broadcast %56 : vector<1x1x64xf32> to vector<14x14x64xf32>
    %208 = arith.addf %206, %207 : vector<14x14x64xf32>
    %cst_169 = arith.constant 0.000000e+00 : f32
    %209 = vector.broadcast %cst_169 : f32 to vector<14x14x64xf32>
    %210 = arith.maximumf %208, %209 : vector<14x14x64xf32>
    %c1_170 = arith.constant 1 : index
    %c8_171 = arith.constant 8 : index
    %c0_172 = arith.constant 0 : index
    %211 = vector.load %arg7[%c1_170, %c8_171, %c0_172] : memref<16x24x64xf32, #tpu.memory_space<vmem>>, vector<14x14x64xf32>
    tpu.vector_store %arg7[%c1_170, %c8_171, %c0_172], %210 {strides = array<i32>} : memref<16x24x64xf32, #tpu.memory_space<vmem>>, vector<14x14x64xf32>,
    %c0_173 = arith.constant 0 : index
    %c7_174 = arith.constant 7 : index
    %c0_175 = arith.constant 0 : index
    %212 = vector.load %arg7[%c0_173, %c7_174, %c0_175] : memref<16x24x64xf32, #tpu.memory_space<vmem>>, vector<14x14x64xf32>
    %213 = vector.broadcast %29 : vector<1x1x64xf32> to vector<14x14x64xf32>
    %214 = arith.mulf %212, %213 : vector<14x14x64xf32>
    %c0_176 = arith.constant 0 : index
    %c8_177 = arith.constant 8 : index
    %c0_178 = arith.constant 0 : index
    %215 = vector.load %arg7[%c0_176, %c8_177, %c0_178] : memref<16x24x64xf32, #tpu.memory_space<vmem>>, vector<14x14x64xf32>
    %216 = vector.broadcast %32 : vector<1x1x64xf32> to vector<14x14x64xf32>
    %217 = arith.mulf %215, %216 : vector<14x14x64xf32>
    %218 = arith.addf %214, %217 : vector<14x14x64xf32>
    %c0_179 = arith.constant 0 : index
    %c9_180 = arith.constant 9 : index
    %c0_181 = arith.constant 0 : index
    %219 = vector.load %arg7[%c0_179, %c9_180, %c0_181] : memref<16x24x64xf32, #tpu.memory_space<vmem>>, vector<14x14x64xf32>
    %220 = vector.broadcast %35 : vector<1x1x64xf32> to vector<14x14x64xf32>
    %221 = arith.mulf %219, %220 : vector<14x14x64xf32>
    %222 = arith.addf %218, %221 : vector<14x14x64xf32>
    %c1_182 = arith.constant 1 : index
    %c7_183 = arith.constant 7 : index
    %c0_184 = arith.constant 0 : index
    %223 = vector.load %arg7[%c1_182, %c7_183, %c0_184] : memref<16x24x64xf32, #tpu.memory_space<vmem>>, vector<14x14x64xf32>
    %224 = vector.broadcast %38 : vector<1x1x64xf32> to vector<14x14x64xf32>
    %225 = arith.mulf %223, %224 : vector<14x14x64xf32>
    %226 = arith.addf %222, %225 : vector<14x14x64xf32>
    %c1_185 = arith.constant 1 : index
    %c8_186 = arith.constant 8 : index
    %c0_187 = arith.constant 0 : index
    %227 = vector.load %arg7[%c1_185, %c8_186, %c0_187] : memref<16x24x64xf32, #tpu.memory_space<vmem>>, vector<14x14x64xf32>
    %228 = vector.broadcast %41 : vector<1x1x64xf32> to vector<14x14x64xf32>
    %229 = arith.mulf %227, %228 : vector<14x14x64xf32>
    %230 = arith.addf %226, %229 : vector<14x14x64xf32>
    %c1_188 = arith.constant 1 : index
    %c9_189 = arith.constant 9 : index
    %c0_190 = arith.constant 0 : index
    %231 = vector.load %arg7[%c1_188, %c9_189, %c0_190] : memref<16x24x64xf32, #tpu.memory_space<vmem>>, vector<14x14x64xf32>
    %232 = vector.broadcast %44 : vector<1x1x64xf32> to vector<14x14x64xf32>
    %233 = arith.mulf %231, %232 : vector<14x14x64xf32>
    %234 = arith.addf %230, %233 : vector<14x14x64xf32>
    %c2_191 = arith.constant 2 : index
    %c7_192 = arith.constant 7 : index
    %c0_193 = arith.constant 0 : index
    %235 = vector.load %arg7[%c2_191, %c7_192, %c0_193] : memref<16x24x64xf32, #tpu.memory_space<vmem>>, vector<14x14x64xf32>
    %236 = vector.broadcast %47 : vector<1x1x64xf32> to vector<14x14x64xf32>
    %237 = arith.mulf %235, %236 : vector<14x14x64xf32>
    %238 = arith.addf %234, %237 : vector<14x14x64xf32>
    %c2_194 = arith.constant 2 : index
    %c8_195 = arith.constant 8 : index
    %c0_196 = arith.constant 0 : index
    %239 = vector.load %arg7[%c2_194, %c8_195, %c0_196] : memref<16x24x64xf32, #tpu.memory_space<vmem>>, vector<14x14x64xf32>
    %240 = vector.broadcast %50 : vector<1x1x64xf32> to vector<14x14x64xf32>
    %241 = arith.mulf %239, %240 : vector<14x14x64xf32>
    %242 = arith.addf %238, %241 : vector<14x14x64xf32>
    %c2_197 = arith.constant 2 : index
    %c9_198 = arith.constant 9 : index
    %c0_199 = arith.constant 0 : index
    %243 = vector.load %arg7[%c2_197, %c9_198, %c0_199] : memref<16x24x64xf32, #tpu.memory_space<vmem>>, vector<14x14x64xf32>
    %244 = vector.broadcast %53 : vector<1x1x64xf32> to vector<14x14x64xf32>
    %245 = arith.mulf %243, %244 : vector<14x14x64xf32>
    %246 = arith.addf %242, %245 : vector<14x14x64xf32>
    %247 = vector.broadcast %59 : vector<1x1x64xf32> to vector<14x14x64xf32>
    %248 = arith.addf %246, %247 : vector<14x14x64xf32>
    %cst_200 = arith.constant 0.000000e+00 : f32
    %249 = vector.broadcast %cst_200 : f32 to vector<14x14x64xf32>
    %250 = arith.maximumf %248, %249 : vector<14x14x64xf32>
    %c1_201 = arith.constant 1 : index
    %c0_202 = arith.constant 0 : index
    %c0_203 = arith.constant 0 : index
    %c0_204 = arith.constant 0 : index
    %251 = vector.load %arg6[%c1_201, %c0_202, %c0_203, %c0_204] : memref<2x14x14x64xf32, #tpu.memory_space<vmem>>, vector<1x14x14x64xf32>
    %252 = vector.shape_cast %251 : vector<1x14x14x64xf32> to vector<14x14x64xf32>
    %253 = vector.shape_cast %250 : vector<14x14x64xf32> to vector<1x14x14x64xf32>
    tpu.vector_store %arg6[%c1_201, %c0_202, %c0_203, %c0_204], %253 {strides = array<i32>} : memref<2x14x14x64xf32, #tpu.memory_space<vmem>>, vector<1x14x14x64xf32>,
    return
  }
  func.func @transform_0(%arg0: i32) -> (i32, i32, i32, i32, i32) {
    %c0_i32 = arith.constant 0 : i32
    %c0_i32_0 = arith.constant 0 : i32
    %c0_i32_1 = arith.constant 0 : i32
    %c0_i32_2 = arith.constant 0 : i32
    %c0_i32_3 = arith.constant 0 : i32
    return %arg0, %c0_i32, %c0_i32_0, %c0_i32_1, %c0_i32_2 : i32, i32, i32, i32, i32
  }
  func.func @transform_1(%arg0: i32) -> (i32, i32) {
    %c0_i32 = arith.constant 0 : i32
    %c0_i32_0 = arith.constant 0 : i32
    %c0_i32_1 = arith.constant 0 : i32
    return %c0_i32, %c0_i32_0 : i32, i32
  }
  func.func @transform_2(%arg0: i32) -> (i32, i32) {
    %c0_i32 = arith.constant 0 : i32
    %c0_i32_0 = arith.constant 0 : i32
    %c0_i32_1 = arith.constant 0 : i32
    return %c0_i32, %c0_i32_0 : i32, i32
  }
  func.func @transform_3(%arg0: i32) -> (i32, i32) {
    %c0_i32 = arith.constant 0 : i32
    %c0_i32_0 = arith.constant 0 : i32
    %c0_i32_1 = arith.constant 0 : i32
    return %c0_i32, %c0_i32_0 : i32, i32
  }
  func.func @transform_4(%arg0: i32) -> (i32, i32) {
    %c0_i32 = arith.constant 0 : i32
    %c0_i32_0 = arith.constant 0 : i32
    %c0_i32_1 = arith.constant 0 : i32
    return %c0_i32, %c0_i32_0 : i32, i32
  }
  func.func @transform_5(%arg0: i32) -> (i32, i32, i32, i32) {
    %c0_i32 = arith.constant 0 : i32
    %c0_i32_0 = arith.constant 0 : i32
    %c0_i32_1 = arith.constant 0 : i32
    %c0_i32_2 = arith.constant 0 : i32
    return %arg0, %c0_i32, %c0_i32_0, %c0_i32_1 : i32, i32, i32, i32
  }
}

</mosaic_0001>

<llo_original>
// kernel: _lambda_.1
$region0: #{_lambda_.1}
  #allocation0 [shape = 'u32[]', space=smem, size = 0x4, offset = 0x4, fixed_abs, tag = 'smem constant byte address 0x4 - core index']
  #allocation1 [shape = 'u32[144,128]{1,0:T(1,128)}', space=vmem, size = 0x12000, scoped, tag = 'internal scratch']
  #allocation2 [shape = 'f32[16,24,64]{2,1,0:T(8,128)}', space=vmem, size = 0x30000, scoped, tag = 'scratch operand']
  %s0 = inlined_call_operand.vmem [shape: f32[2,4,15,15,64], index: 0, kind: input, shape index: {}]
  %s1 = inlined_call_operand.vmem [shape: f32[9,64], index: 1, kind: input, shape index: {}]
  %s2 = inlined_call_operand.vmem [shape: f32[1,64], index: 2, kind: input, shape index: {}]
  %s3 = inlined_call_operand.vmem [shape: f32[9,64], index: 3, kind: input, shape index: {}]
  %s4 = inlined_call_operand.vmem [shape: f32[1,64], index: 4, kind: input, shape index: {}]
  %s5 = inlined_call_operand.vmem [shape: f32[2,14,14,64], index: 5, kind: output, shape index: {}]
  %s6 = sld [smem:[#allocation0]]
  $region30: #{_lambda_.1} parent=0
    _
  %s8 = ssub.s32 1, %s6
  %s9 = scalar_select 0, %s8, %s6
  // Predicated region
  $region2: #{_lambda_.1} parent=0 // pred_check
    _
  $region3: #{_lambda_.1} parent=0 // pred_check_branch
    %11 = sbr.rel (0) target = $region5
  $region4: #{_lambda_.1} parent=0 // pred_region
    _
  $region5: #{_lambda_.1} parent=0 // pred_fallthru
    _
  // Predicated region
  $region6: #{_lambda_.1} parent=0 // pred_check
    _
  $region7: #{_lambda_.1} parent=0 // pred_check_branch
    %13 = sbr.rel (0) target = $region9
  $region8: #{_lambda_.1} parent=0 // pred_region
    _
  $region9: #{_lambda_.1} parent=0 // pred_fallthru
    _
  // Predicated region
  $region10: #{_lambda_.1} parent=0 // pred_check
    _
  $region11: #{_lambda_.1} parent=0 // pred_check_branch
    %15 = sbr.rel (0) target = $region13
  $region12: #{_lambda_.1} parent=0 // pred_region
    _
  $region13: #{_lambda_.1} parent=0 // pred_fallthru
    _
  // Predicated region
  $region14: #{_lambda_.1} parent=0 // pred_check
    _
  $region15: #{_lambda_.1} parent=0 // pred_check_branch
    %17 = sbr.rel (0) target = $region17
  $region16: #{_lambda_.1} parent=0 // pred_region
    _
  $region17: #{_lambda_.1} parent=0 // pred_fallthru
    _
  // Predicated region
  $region18: #{_lambda_.1} parent=0 // pred_check
    _
  $region19: #{_lambda_.1} parent=0 // pred_check_branch
    %19 = sbr.rel (0) target = $region21
  $region20: #{_lambda_.1} parent=0 // pred_region
    _
  $region21: #{_lambda_.1} parent=0 // pred_fallthru
    _
  %v20 = vld [vmem:[%s1] sm:$0x1]
  %v21 = vld [vmem:[%s1 + $0x1] sm:$0x1]
  %v22 = vld [vmem:[%s1 + $0x2] sm:$0x1]
  %v23 = vld [vmem:[%s1 + $0x3] sm:$0x1]
  %v24 = vld [vmem:[%s1 + $0x4] sm:$0x1]
  %v25 = vld [vmem:[%s1 + $0x5] sm:$0x1]
  %v26 = vld [vmem:[%s1 + $0x6] sm:$0x1]
  %v27 = vld [vmem:[%s1 + $0x7] sm:$0x1]
  %v28 = vld [vmem:[%s1 + $0x8] sm:$0x1]
  %v29 = vld [vmem:[%s3] sm:$0x1]
  %v30 = vld [vmem:[%s3 + $0x1] sm:$0x1]
  %v31 = vld [vmem:[%s3 + $0x2] sm:$0x1]
  %v32 = vld [vmem:[%s3 + $0x3] sm:$0x1]
  %v33 = vld [vmem:[%s3 + $0x4] sm:$0x1]
  %v34 = vld [vmem:[%s3 + $0x5] sm:$0x1]
  %v35 = vld [vmem:[%s3 + $0x6] sm:$0x1]
  %v36 = vld [vmem:[%s3 + $0x7] sm:$0x1]
  %v37 = vld [vmem:[%s3 + $0x8] sm:$0x1]
  %v38 = vld [vmem:[%s2] sm:$0x1]
  %v39 = vld [vmem:[%s4] sm:$0x1]
  %vm40 = vcmask 523264
  %41 = vst.msk [vmem:[#allocation2] sm:$0xff] %vm40, 0.0
  %42 = vst.msk [vmem:[#allocation2 + $0x8] sm:$0xff] %vm40, 0.0
  %43 = vst.msk [vmem:[#allocation2 + $0x10] sm:$0xff] %vm40, 0.0
  %s44 = scalar_lea.vmem [#allocation2], 360
  %45 = vst.msk [vmem:[%s44] sm:$0xff] %vm40, 0.0
  %46 = vst.msk [vmem:[%s44 + $0x8] sm:$0xff] %vm40, 0.0
  %47 = vst.msk [vmem:[%s44 + $0x10] sm:$0xff] %vm40, 0.0
  %s48 = scalar_lea.vmem [#allocation2], 24
  %49 = vst.msk [vmem:[%s48] sm:$0xff] %vm40, 0.0
  %50 = vst.msk [vmem:[%s48 + $0x18] sm:$0xff] %vm40, 0.0
  %51 = vst.msk [vmem:[%s48 + $0x30] sm:$0xff] %vm40, 0.0
  %52 = vst.msk [vmem:[%s48 + $0x48] sm:$0xff] %vm40, 0.0
  %53 = vst.msk [vmem:[%s48 + $0x60] sm:$0xff] %vm40, 0.0
  %54 = vst.msk [vmem:[%s48 + $0x78] sm:$0xff] %vm40, 0.0
  %55 = vst.msk [vmem:[%s48 + $0x90] sm:$0xff] %vm40, 0.0
  %56 = vst.msk [vmem:[%s48 + $0xa8] sm:$0xff] %vm40, 0.0
  %57 = vst.msk [vmem:[%s48 + $0xc0] sm:$0xff] %vm40, 0.0
  %58 = vst.msk [vmem:[%s48 + $0xd8] sm:$0xff] %vm40, 0.0
  %59 = vst.msk [vmem:[%s48 + $0xf0] sm:$0xff] %vm40, 0.0
  %60 = vst.msk [vmem:[%s48 + $0x108] sm:$0xff] %vm40, 0.0
  %61 = vst.msk [vmem:[%s48 + $0x120] sm:$0xff] %vm40, 0.0
  %62 = vst.msk [vmem:[%s48 + $0x138] sm:$0xff] %vm40, 0.0
  %63 = vst.msk [vmem:[%s48 + $0x10] sm:$0xff] %vm40, 0.0
  %64 = vst.msk [vmem:[%s48 + $0x28] sm:$0xff] %vm40, 0.0
  %65 = vst.msk [vmem:[%s48 + $0x40] sm:$0xff] %vm40, 0.0
  %66 = vst.msk [vmem:[%s48 + $0x58] sm:$0xff] %vm40, 0.0
  %67 = vst.msk [vmem:[%s48 + $0x70] sm:$0xff] %vm40, 0.0
  %68 = vst.msk [vmem:[%s48 + $0x88] sm:$0xff] %vm40, 0.0
  %69 = vst.msk [vmem:[%s48 + $0xa0] sm:$0xff] %vm40, 0.0
  %70 = vst.msk [vmem:[%s48 + $0xb8] sm:$0xff] %vm40, 0.0
  %71 = vst.msk [vmem:[%s48 + $0xd0] sm:$0xff] %vm40, 0.0
  %72 = vst.msk [vmem:[%s48 + $0xe8] sm:$0xff] %vm40, 0.0
  %73 = vst.msk [vmem:[%s48 + $0x100] sm:$0xff] %vm40, 0.0
  %74 = vst.msk [vmem:[%s48 + $0x118] sm:$0xff] %vm40, 0.0
  %75 = vst.msk [vmem:[%s48 + $0x130] sm:$0xff] %vm40, 0.0
  %76 = vst.msk [vmem:[%s48 + $0x148] sm:$0xff] %vm40, 0.0
  %s77 = scalar_lea.vmem %s0, 720
  %v78 = vld [vmem:[%s77] sm:$0xff]
  %v79 = vld [vmem:[%s77 + $0x8] sm:$0x3f]
  %v80 = vld [vmem:[%s77 + $0x10] sm:$0xff]
  %v81 = vld [vmem:[%s77 + $0x18] sm:$0x3f]
  %v82 = vld [vmem:[%s77 + $0x20] sm:$0xff]
  %v83 = vld [vmem:[%s77 + $0x28] sm:$0x3f]
  %v84 = vld [vmem:[%s77 + $0x30] sm:$0xff]
  %v85 = vld [vmem:[%s77 + $0x38] sm:$0x3f]
  %v86 = vld [vmem:[%s77 + $0x40] sm:$0xff]
  %v87 = vld [vmem:[%s77 + $0x48] sm:$0x3f]
  %v88 = vld [vmem:[%s77 + $0x50] sm:$0xff]
  %v89 = vld [vmem:[%s77 + $0x58] sm:$0x3f]
  %v90 = vld [vmem:[%s77 + $0x60] sm:$0xff]
  %v91 = vld [vmem:[%s77 + $0x68] sm:$0x3f]
  %v92 = vld [vmem:[%s77 + $0x70] sm:$0xff]
  %v93 = vld [vmem:[%s77 + $0x78] sm:$0x3f]
  %v94 = vld [vmem:[%s77 + $0x80] sm:$0xff]
  %v95 = vld [vmem:[%s77 + $0x88] sm:$0x3f]
  %v96 = vld [vmem:[%s77 + $0x90] sm:$0xff]
  %v97 = vld [vmem:[%s77 + $0x98] sm:$0x3f]
  %v98 = vld [vmem:[%s77 + $0xa0] sm:$0xff]
  %v99 = vld [vmem:[%s77 + $0xa8] sm:$0x3f]
  %v100 = vld [vmem:[%s77 + $0xb0] sm:$0xff]
  %v101 = vld [vmem:[%s77 + $0xb8] sm:$0x3f]
  %v102 = vld [vmem:[%s77 + $0xc0] sm:$0xff]
  %v103 = vld [vmem:[%s77 + $0xc8] sm:$0x3f]
  %v104 = vld [vmem:[%s77 + $0xd0] sm:$0xff]
  %v105 = vld [vmem:[%s77 + $0xd8] sm:$0x3f]
  %v106 = vlaneseq
  %v107 = vshrl.u32 %v106, 7
  %v108 = vsub.s32 0, %v107
  %v109 = vrot.slane %v20, %v108
  %v110 = vmul.f32 %v78, %v109
  %v111 = vmul.f32 %v79, %v109
  %v112 = vmul.f32 %v80, %v109
  %v113 = vmul.f32 %v81, %v109
  %v114 = vmul.f32 %v82, %v109
  %v115 = vmul.f32 %v83, %v109
  %v116 = vmul.f32 %v84, %v109
  %v117 = vmul.f32 %v85, %v109
  %v118 = vmul.f32 %v86, %v109
  %v119 = vmul.f32 %v87, %v109
  %v120 = vmul.f32 %v88, %v109
  %v121 = vmul.f32 %v89, %v109
  %v122 = vmul.f32 %v90, %v109
  %v123 = vmul.f32 %v91, %v109
  %v124 = vmul.f32 %v92, %v109
  %v125 = vmul.f32 %v93, %v109
  %v126 = vmul.f32 %v94, %v109
  %v127 = vmul.f32 %v95, %v109
  %v128 = vmul.f32 %v96, %v109
  %v129 = vmul.f32 %v97, %v109
  %v130 = vmul.f32 %v98, %v109
  %v131 = vmul.f32 %v99, %v109
  %v132 = vmul.f32 %v100, %v109
  %v133 = vmul.f32 %v101, %v109
  %v134 = vmul.f32 %v102, %v109
  %v135 = vmul.f32 %v103, %v109
  %v136 = vmul.f32 %v104, %v109
  %v137 = vmul.f32 %v105, %v109
  %s138 = scalar_lea.vmem %s0, 480
  %v139 = vld [vmem:[%s138] sm:$0xff]
  %v140 = vld [vmem:[%s138 + $0x8] sm:$0x3f]
  %v141 = vld [vmem:[%s138 + $0x10] sm:$0xff]
  %v142 = vld [vmem:[%s138 + $0x18] sm:$0x3f]
  %v143 = vld [vmem:[%s138 + $0x20] sm:$0xff]
  %v144 = vld [vmem:[%s138 + $0x28] sm:$0x3f]
  %v145 = vld [vmem:[%s138 + $0x30] sm:$0xff]
  %v146 = vld [vmem:[%s138 + $0x38] sm:$0x3f]
  %v147 = vld [vmem:[%s138 + $0x40] sm:$0xff]
  %v148 = vld [vmem:[%s138 + $0x48] sm:$0x3f]
  %v149 = vld [vmem:[%s138 + $0x50] sm:$0xff]
  %v150 = vld [vmem:[%s138 + $0x58] sm:$0x3f]
  %v151 = vld [vmem:[%s138 + $0x60] sm:$0xff]
  %v152 = vld [vmem:[%s138 + $0x68] sm:$0x3f]
  %v153 = vld [vmem:[%s138 + $0x70] sm:$0xff]
  %v154 = vld [vmem:[%s138 + $0x78] sm:$0x3f]
  %v155 = vld [vmem:[%s138 + $0x80] sm:$0xff]
  %v156 = vld [vmem:[%s138 + $0x88] sm:$0x3f]
  %v157 = vld [vmem:[%s138 + $0x90] sm:$0xff]
  %v158 = vld [vmem:[%s138 + $0x98] sm:$0x3f]
  %v159 = vld [vmem:[%s138 + $0xa0] sm:$0xff]
  %v160 = vld [vmem:[%s138 + $0xa8] sm:$0x3f]
  %v161 = vld [vmem:[%s138 + $0xb0] sm:$0xff]
  %v162 = vld [vmem:[%s138 + $0xb8] sm:$0x3f]
  %v163 = vld [vmem:[%s138 + $0xc0] sm:$0xff]
  %v164 = vld [vmem:[%s138 + $0xc8] sm:$0x3f]
  %v165 = vld [vmem:[%s138 + $0xd0] sm:$0xff]
  %v166 = vld [vmem:[%s138 + $0xd8] sm:$0x3f]
  %v167 = vlaneseq
  %v168 = vshrl.u32 %v167, 7
  %v169 = vsub.s32 0, %v168
  %v170 = vrot.slane %v21, %v169
  %v171 = vmul.f32 %v139, %v170
  %v172 = vmul.f32 %v140, %v170
  %v173 = vmul.f32 %v141, %v170
  %v174 = vmul.f32 %v142, %v170
  %v175 = vmul.f32 %v143, %v170
  %v176 = vmul.f32 %v144, %v170
  %v177 = vmul.f32 %v145, %v170
  %v178 = vmul.f32 %v146, %v170
  %v179 = vmul.f32 %v147, %v170
  %v180 = vmul.f32 %v148, %v170
  %v181 = vmul.f32 %v149, %v170
  %v182 = vmul.f32 %v150, %v170
  %v183 = vmul.f32 %v151, %v170
  %v184 = vmul.f32 %v152, %v170
  %v185 = vmul.f32 %v153, %v170
  %v186 = vmul.f32 %v154, %v170
  %v187 = vmul.f32 %v155, %v170
  %v188 = vmul.f32 %v156, %v170
  %v189 = vmul.f32 %v157, %v170
  %v190 = vmul.f32 %v158, %v170
  %v191 = vmul.f32 %v159, %v170
  %v192 = vmul.f32 %v160, %v170
  %v193 = vmul.f32 %v161, %v170
  %v194 = vmul.f32 %v162, %v170
  %v195 = vmul.f32 %v163, %v170
  %v196 = vmul.f32 %v164, %v170
  %v197 = vmul.f32 %v165, %v170
  %v198 = vmul.f32 %v166, %v170
  %v199 = vadd.f32 %v110, %v171
  %v200 = vadd.f32 %v111, %v172
  %v201 = vadd.f32 %v112, %v173
  %v202 = vadd.f32 %v113, %v174
  %v203 = vadd.f32 %v114, %v175
  %v204 = vadd.f32 %v115, %v176
  %v205 = vadd.f32 %v116, %v177
  %v206 = vadd.f32 %v117, %v178
  %v207 = vadd.f32 %v118, %v179
  %v208 = vadd.f32 %v119, %v180
  %v209 = vadd.f32 %v120, %v181
  %v210 = vadd.f32 %v121, %v182
  %v211 = vadd.f32 %v122, %v183
  %v212 = vadd.f32 %v123, %v184
  %v213 = vadd.f32 %v124, %v185
  %v214 = vadd.f32 %v125, %v186
  %v215 = vadd.f32 %v126, %v187
  %v216 = vadd.f32 %v127, %v188
  %v217 = vadd.f32 %v128, %v189
  %v218 = vadd.f32 %v129, %v190
  %v219 = vadd.f32 %v130, %v191
  %v220 = vadd.f32 %v131, %v192
  %v221 = vadd.f32 %v132, %v193
  %v222 = vadd.f32 %v133, %v194
  %v223 = vadd.f32 %v134, %v195
  %v224 = vadd.f32 %v135, %v196
  %v225 = vadd.f32 %v136, %v197
  %v226 = vadd.f32 %v137, %v198
  %v227 = vld [vmem:[%s77 + $0x1] sm:$0xff]
  %v228 = vld [vmem:[%s77 + $0x9] sm:$0x3f]
  %v229 = vld [vmem:[%s77 + $0x11] sm:$0xff]
  %v230 = vld [vmem:[%s77 + $0x19] sm:$0x3f]
  %v231 = vld [vmem:[%s77 + $0x21] sm:$0xff]
  %v232 = vld [vmem:[%s77 + $0x29] sm:$0x3f]
  %v233 = vld [vmem:[%s77 + $0x31] sm:$0xff]
  %v234 = vld [vmem:[%s77 + $0x39] sm:$0x3f]
  %v235 = vld [vmem:[%s77 + $0x41] sm:$0xff]
  %v236 = vld [vmem:[%s77 + $0x49] sm:$0x3f]
  %v237 = vld [vmem:[%s77 + $0x51] sm:$0xff]
  %v238 = vld [vmem:[%s77 + $0x59] sm:$0x3f]
  %v239 = vld [vmem:[%s77 + $0x61] sm:$0xff]
  %v240 = vld [vmem:[%s77 + $0x69] sm:$0x3f]
  %v241 = vld [vmem:[%s77 + $0x71] sm:$0xff]
  %v242 = vld [vmem:[%s77 + $0x79] sm:$0x3f]
  %v243 = vld [vmem:[%s77 + $0x81] sm:$0xff]
  %v244 = vld [vmem:[%s77 + $0x89] sm:$0x3f]
  %v245 = vld [vmem:[%s77 + $0x91] sm:$0xff]
  %v246 = vld [vmem:[%s77 + $0x99] sm:$0x3f]
  %v247 = vld [vmem:[%s77 + $0xa1] sm:$0xff]
  %v248 = vld [vmem:[%s77 + $0xa9] sm:$0x3f]
  %v249 = vld [vmem:[%s77 + $0xb1] sm:$0xff]
  %v250 = vld [vmem:[%s77 + $0xb9] sm:$0x3f]
  %v251 = vld [vmem:[%s77 + $0xc1] sm:$0xff]
  %v252 = vld [vmem:[%s77 + $0xc9] sm:$0x3f]
  %v253 = vld [vmem:[%s77 + $0xd1] sm:$0xff]
  %v254 = vld [vmem:[%s77 + $0xd9] sm:$0x3f]
  %v255 = vlaneseq
  %v256 = vshrl.u32 %v255, 7
  %v257 = vsub.s32 0, %v256
  %v258 = vrot.slane %v22, %v257
  %v259 = vmul.f32 %v227, %v258
  %v260 = vmul.f32 %v228, %v258
  %v261 = vmul.f32 %v229, %v258
  %v262 = vmul.f32 %v230, %v258
  %v263 = vmul.f32 %v231, %v258
  %v264 = vmul.f32 %v232, %v258
  %v265 = vmul.f32 %v233, %v258
  %v266 = vmul.f32 %v234, %v258
  %v267 = vmul.f32 %v235, %v258
  %v268 = vmul.f32 %v236, %v258
  %v269 = vmul.f32 %v237, %v258
  %v270 = vmul.f32 %v238, %v258
  %v271 = vmul.f32 %v239, %v258
  %v272 = vmul.f32 %v240, %v258
  %v273 = vmul.f32 %v241, %v258
  %v274 = vmul.f32 %v242, %v258
  %v275 = vmul.f32 %v243, %v258
  %v276 = vmul.f32 %v244, %v258
  %v277 = vmul.f32 %v245, %v258
  %v278 = vmul.f32 %v246, %v258
  %v279 = vmul.f32 %v247, %v258
  %v280 = vmul.f32 %v248, %v258
  %v281 = vmul.f32 %v249, %v258
  %v282 = vmul.f32 %v250, %v258
  %v283 = vmul.f32 %v251, %v258
  %v284 = vmul.f32 %v252, %v258
  %v285 = vmul.f32 %v253, %v258
  %v286 = vmul.f32 %v254, %v258
  %v287 = vadd.f32 %v199, %v259
  %v288 = vadd.f32 %v200, %v260
  %v289 = vadd.f32 %v201, %v261
  %v290 = vadd.f32 %v202, %v262
  %v291 = vadd.f32 %v203, %v263
  %v292 = vadd.f32 %v204, %v264
  %v293 = vadd.f32 %v205, %v265
  %v294 = vadd.f32 %v206, %v266
  %v295 = vadd.f32 %v207, %v267
  %v296 = vadd.f32 %v208, %v268
  %v297 = vadd.f32 %v209, %v269
  %v298 = vadd.f32 %v210, %v270
  %v299 = vadd.f32 %v211, %v271
  %v300 = vadd.f32 %v212, %v272
  %v301 = vadd.f32 %v213, %v273
  %v302 = vadd.f32 %v214, %v274
  %v303 = vadd.f32 %v215, %v275
  %v304 = vadd.f32 %v216, %v276
  %v305 = vadd.f32 %v217, %v277
  %v306 = vadd.f32 %v218, %v278
  %v307 = vadd.f32 %v219, %v279
  %v308 = vadd.f32 %v220, %v280
  %v309 = vadd.f32 %v221, %v281
  %v310 = vadd.f32 %v222, %v282
  %v311 = vadd.f32 %v223, %v283
  %v312 = vadd.f32 %v224, %v284
  %v313 = vadd.f32 %v225, %v285
  %v314 = vadd.f32 %v226, %v286
  %s315 = scalar_lea.vmem %s0, 256
  %v316 = vld [vmem:[%s315] sm:$0xff]
  %v317 = vld [vmem:[%s315 + $0x8] sm:$0x3f]
  %v318 = vld [vmem:[%s315 + $0x10] sm:$0xff]
  %v319 = vld [vmem:[%s315 + $0x18] sm:$0x3f]
  %v320 = vld [vmem:[%s315 + $0x20] sm:$0xff]
  %v321 = vld [vmem:[%s315 + $0x28] sm:$0x3f]
  %v322 = vld [vmem:[%s315 + $0x30] sm:$0xff]
  %v323 = vld [vmem:[%s315 + $0x38] sm:$0x3f]
  %v324 = vld [vmem:[%s315 + $0x40] sm:$0xff]
  %v325 = vld [vmem:[%s315 + $0x48] sm:$0x3f]
  %v326 = vld [vmem:[%s315 + $0x50] sm:$0xff]
  %v327 = vld [vmem:[%s315 + $0x58] sm:$0x3f]
  %v328 = vld [vmem:[%s315 + $0x60] sm:$0xff]
  %v329 = vld [vmem:[%s315 + $0x68] sm:$0x3f]
  %v330 = vld [vmem:[%s315 + $0x70] sm:$0xff]
  %v331 = vld [vmem:[%s315 + $0x78] sm:$0x3f]
  %v332 = vld [vmem:[%s315 + $0x80] sm:$0xff]
  %v333 = vld [vmem:[%s315 + $0x88] sm:$0x3f]
  %v334 = vld [vmem:[%s315 + $0x90] sm:$0xff]
  %v335 = vld [vmem:[%s315 + $0x98] sm:$0x3f]
  %v336 = vld [vmem:[%s315 + $0xa0] sm:$0xff]
  %v337 = vld [vmem:[%s315 + $0xa8] sm:$0x3f]
  %v338 = vld [vmem:[%s315 + $0xb0] sm:$0xff]
  %v339 = vld [vmem:[%s315 + $0xb8] sm:$0x3f]
  %v340 = vld [vmem:[%s315 + $0xc0] sm:$0xff]
  %v341 = vld [vmem:[%s315 + $0xc8] sm:$0x3f]
  %v342 = vld [vmem:[%s315 + $0xd0] sm:$0xff]
  %v343 = vld [vmem:[%s315 + $0xd8] sm:$0x3f]
  %v344 = vlaneseq
  %v345 = vshrl.u32 %v344, 7
  %v346 = vsub.s32 0, %v345
  %v347 = vrot.slane %v23, %v346
  %v348 = vmul.f32 %v316, %v347
  %v349 = vmul.f32 %v317, %v347
  %v350 = vmul.f32 %v318, %v347
  %v351 = vmul.f32 %v319, %v347
  %v352 = vmul.f32 %v320, %v347
  %v353 = vmul.f32 %v321, %v347
  %v354 = vmul.f32 %v322, %v347
  %v355 = vmul.f32 %v323, %v347
  %v356 = vmul.f32 %v324, %v347
  %v357 = vmul.f32 %v325, %v347
  %v358 = vmul.f32 %v326, %v347
  %v359 = vmul.f32 %v327, %v347
  %v360 = vmul.f32 %v328, %v347
  %v361 = vmul.f32 %v329, %v347
  %v362 = vmul.f32 %v330, %v347
  %v363 = vmul.f32 %v331, %v347
  %v364 = vmul.f32 %v332, %v347
  %v365 = vmul.f32 %v333, %v347
  %v366 = vmul.f32 %v334, %v347
  %v367 = vmul.f32 %v335, %v347
  %v368 = vmul.f32 %v336, %v347
  %v369 = vmul.f32 %v337, %v347
  %v370 = vmul.f32 %v338, %v347
  %v371 = vmul.f32 %v339, %v347
  %v372 = vmul.f32 %v340, %v347
  %v373 = vmul.f32 %v341, %v347
  %v374 = vmul.f32 %v342, %v347
  %v375 = vmul.f32 %v343, %v347
  %v376 = vadd.f32 %v287, %v348
  %v377 = vadd.f32 %v288, %v349
  %v378 = vadd.f32 %v289, %v350
  %v379 = vadd.f32 %v290, %v351
  %v380 = vadd.f32 %v291, %v352
  %v381 = vadd.f32 %v292, %v353
  %v382 = vadd.f32 %v293, %v354
  %v383 = vadd.f32 %v294, %v355
  %v384 = vadd.f32 %v295, %v356
  %v385 = vadd.f32 %v296, %v357
  %v386 = vadd.f32 %v297, %v358
  %v387 = vadd.f32 %v298, %v359
  %v388 = vadd.f32 %v299, %v360
  %v389 = vadd.f32 %v300, %v361
  %v390 = vadd.f32 %v301, %v362
  %v391 = vadd.f32 %v302, %v363
  %v392 = vadd.f32 %v303, %v364
  %v393 = vadd.f32 %v304, %v365
  %v394 = vadd.f32 %v305, %v366
  %v395 = vadd.f32 %v306, %v367
  %v396 = vadd.f32 %v307, %v368
  %v397 = vadd.f32 %v308, %v369
  %v398 = vadd.f32 %v309, %v370
  %v399 = vadd.f32 %v310, %v371
  %v400 = vadd.f32 %v311, %v372
  %v401 = vadd.f32 %v312, %v373
  %v402 = vadd.f32 %v313, %v374
  %v403 = vadd.f32 %v314, %v375
  %s404 = scalar_lea.vmem %s0, 16
  %v405 = vld [vmem:[%s404] sm:$0xff]
  %v406 = vld [vmem:[%s404 + $0x8] sm:$0x3f]
  %v407 = vld [vmem:[%s404 + $0x10] sm:$0xff]
  %v408 = vld [vmem:[%s404 + $0x18] sm:$0x3f]
  %v409 = vld [vmem:[%s404 + $0x20] sm:$0xff]
  %v410 = vld [vmem:[%s404 + $0x28] sm:$0x3f]
  %v411 = vld [vmem:[%s404 + $0x30] sm:$0xff]
  %v412 = vld [vmem:[%s404 + $0x38] sm:$0x3f]
  %v413 = vld [vmem:[%s404 + $0x40] sm:$0xff]
  %v414 = vld [vmem:[%s404 + $0x48] sm:$0x3f]
  %v415 = vld [vmem:[%s404 + $0x50] sm:$0xff]
  %v416 = vld [vmem:[%s404 + $0x58] sm:$0x3f]
  %v417 = vld [vmem:[%s404 + $0x60] sm:$0xff]
  %v418 = vld [vmem:[%s404 + $0x68] sm:$0x3f]
  %v419 = vld [vmem:[%s404 + $0x70] sm:$0xff]
  %v420 = vld [vmem:[%s404 + $0x78] sm:$0x3f]
  %v421 = vld [vmem:[%s404 + $0x80] sm:$0xff]
  %v422 = vld [vmem:[%s404 + $0x88] sm:$0x3f]
  %v423 = vld [vmem:[%s404 + $0x90] sm:$0xff]
  %v424 = vld [vmem:[%s404 + $0x98] sm:$0x3f]
  %v425 = vld [vmem:[%s404 + $0xa0] sm:$0xff]
  %v426 = vld [vmem:[%s404 + $0xa8] sm:$0x3f]
  %v427 = vld [vmem:[%s404 + $0xb0] sm:$0xff]
  %v428 = vld [vmem:[%s404 + $0xb8] sm:$0x3f]
  %v429 = vld [vmem:[%s404 + $0xc0] sm:$0xff]
  %v430 = vld [vmem:[%s404 + $0xc8] sm:$0x3f]
  %v431 = vld [vmem:[%s404 + $0xd0] sm:$0xff]
  %v432 = vld [vmem:[%s404 + $0xd8] sm:$0x3f]
  %v433 = vlaneseq
  %v434 = vshrl.u32 %v433, 7
  %v435 = vsub.s32 0, %v434
  %v436 = vrot.slane %v24, %v435
  %v437 = vmul.f32 %v405, %v436
  %v438 = vmul.f32 %v406, %v436
  %v439 = vmul.f32 %v407, %v436
  %v440 = vmul.f32 %v408, %v436
  %v441 = vmul.f32 %v409, %v436
  %v442 = vmul.f32 %v410, %v436
  %v443 = vmul.f32 %v411, %v436
  %v444 = vmul.f32 %v412, %v436
  %v445 = vmul.f32 %v413, %v436
  %v446 = vmul.f32 %v414, %v436
  %v447 = vmul.f32 %v415, %v436
  %v448 = vmul.f32 %v416, %v436
  %v449 = vmul.f32 %v417, %v436
  %v450 = vmul.f32 %v418, %v436
  %v451 = vmul.f32 %v419, %v436
  %v452 = vmul.f32 %v420, %v436
  %v453 = vmul.f32 %v421, %v436
  %v454 = vmul.f32 %v422, %v436
  %v455 = vmul.f32 %v423, %v436
  %v456 = vmul.f32 %v424, %v436
  %v457 = vmul.f32 %v425, %v436
  %v458 = vmul.f32 %v426, %v436
  %v459 = vmul.f32 %v427, %v436
  %v460 = vmul.f32 %v428, %v436
  %v461 = vmul.f32 %v429, %v436
  %v462 = vmul.f32 %v430, %v436
  %v463 = vmul.f32 %v431, %v436
  %v464 = vmul.f32 %v432, %v436
  %v465 = vadd.f32 %v376, %v437
  %v466 = vadd.f32 %v377, %v438
  %v467 = vadd.f32 %v378, %v439
  %v468 = vadd.f32 %v379, %v440
  %v469 = vadd.f32 %v380, %v441
  %v470 = vadd.f32 %v381, %v442
  %v471 = vadd.f32 %v382, %v443
  %v472 = vadd.f32 %v383, %v444
  %v473 = vadd.f32 %v384, %v445
  %v474 = vadd.f32 %v385, %v446
  %v475 = vadd.f32 %v386, %v447
  %v476 = vadd.f32 %v387, %v448
  %v477 = vadd.f32 %v388, %v449
  %v478 = vadd.f32 %v389, %v450
  %v479 = vadd.f32 %v390, %v451
  %v480 = vadd.f32 %v391, %v452
  %v481 = vadd.f32 %v392, %v453
  %v482 = vadd.f32 %v393, %v454
  %v483 = vadd.f32 %v394, %v455
  %v484 = vadd.f32 %v395, %v456
  %v485 = vadd.f32 %v396, %v457
  %v486 = vadd.f32 %v397, %v458
  %v487 = vadd.f32 %v398, %v459
  %v488 = vadd.f32 %v399, %v460
  %v489 = vadd.f32 %v400, %v461
  %v490 = vadd.f32 %v401, %v462
  %v491 = vadd.f32 %v402, %v463
  %v492 = vadd.f32 %v403, %v464
  %v493 = vld [vmem:[%s315 + $0x1] sm:$0xff]
  %v494 = vld [vmem:[%s315 + $0x9] sm:$0x3f]
  %v495 = vld [vmem:[%s315 + $0x11] sm:$0xff]
  %v496 = vld [vmem:[%s315 + $0x19] sm:$0x3f]
  %v497 = vld [vmem:[%s315 + $0x21] sm:$0xff]
  %v498 = vld [vmem:[%s315 + $0x29] sm:$0x3f]
  %v499 = vld [vmem:[%s315 + $0x31] sm:$0xff]
  %v500 = vld [vmem:[%s315 + $0x39] sm:$0x3f]
  %v501 = vld [vmem:[%s315 + $0x41] sm:$0xff]
  %v502 = vld [vmem:[%s315 + $0x49] sm:$0x3f]
  %v503 = vld [vmem:[%s315 + $0x51] sm:$0xff]
  %v504 = vld [vmem:[%s315 + $0x59] sm:$0x3f]
  %v505 = vld [vmem:[%s315 + $0x61] sm:$0xff]
  %v506 = vld [vmem:[%s315 + $0x69] sm:$0x3f]
  %v507 = vld [vmem:[%s315 + $0x71] sm:$0xff]
  %v508 = vld [vmem:[%s315 + $0x79] sm:$0x3f]
  %v509 = vld [vmem:[%s315 + $0x81] sm:$0xff]
  %v510 = vld [vmem:[%s315 + $0x89] sm:$0x3f]
  %v511 = vld [vmem:[%s315 + $0x91] sm:$0xff]
  %v512 = vld [vmem:[%s315 + $0x99] sm:$0x3f]
  %v513 = vld [vmem:[%s315 + $0xa1] sm:$0xff]
  %v514 = vld [vmem:[%s315 + $0xa9] sm:$0x3f]
  %v515 = vld [vmem:[%s315 + $0xb1] sm:$0xff]
  %v516 = vld [vmem:[%s315 + $0xb9] sm:$0x3f]
  %v517 = vld [vmem:[%s315 + $0xc1] sm:$0xff]
  %v518 = vld [vmem:[%s315 + $0xc9] sm:$0x3f]
  %v519 = vld [vmem:[%s315 + $0xd1] sm:$0xff]
  %v520 = vld [vmem:[%s315 + $0xd9] sm:$0x3f]
  %v521 = vlaneseq
  %v522 = vshrl.u32 %v521, 7
  %v523 = vsub.s32 0, %v522
  %v524 = vrot.slane %v25, %v523
  %v525 = vmul.f32 %v493, %v524
  %v526 = vmul.f32 %v494, %v524
  %v527 = vmul.f32 %v495, %v524
  %v528 = vmul.f32 %v496, %v524
  %v529 = vmul.f32 %v497, %v524
  %v530 = vmul.f32 %v498, %v524
  %v531 = vmul.f32 %v499, %v524
  %v532 = vmul.f32 %v500, %v524
  %v533 = vmul.f32 %v501, %v524
  %v534 = vmul.f32 %v502, %v524
  %v535 = vmul.f32 %v503, %v524
  %v536 = vmul.f32 %v504, %v524
  %v537 = vmul.f32 %v505, %v524
  %v538 = vmul.f32 %v506, %v524
  %v539 = vmul.f32 %v507, %v524
  %v540 = vmul.f32 %v508, %v524
  %v541 = vmul.f32 %v509, %v524
  %v542 = vmul.f32 %v510, %v524
  %v543 = vmul.f32 %v511, %v524
  %v544 = vmul.f32 %v512, %v524
  %v545 = vmul.f32 %v513, %v524
  %v546 = vmul.f32 %v514, %v524
  %v547 = vmul.f32 %v515, %v524
  %v548 = vmul.f32 %v516, %v524
  %v549 = vmul.f32 %v517, %v524
  %v550 = vmul.f32 %v518, %v524
  %v551 = vmul.f32 %v519, %v524
  %v552 = vmul.f32 %v520, %v524
  %v553 = vadd.f32 %v465, %v525
  %v554 = vadd.f32 %v466, %v526
  %v555 = vadd.f32 %v467, %v527
  %v556 = vadd.f32 %v468, %v528
  %v557 = vadd.f32 %v469, %v529
  %v558 = vadd.f32 %v470, %v530
  %v559 = vadd.f32 %v471, %v531
  %v560 = vadd.f32 %v472, %v532
  %v561 = vadd.f32 %v473, %v533
  %v562 = vadd.f32 %v474, %v534
  %v563 = vadd.f32 %v475, %v535
  %v564 = vadd.f32 %v476, %v536
  %v565 = vadd.f32 %v477, %v537
  %v566 = vadd.f32 %v478, %v538
  %v567 = vadd.f32 %v479, %v539
  %v568 = vadd.f32 %v480, %v540
  %v569 = vadd.f32 %v481, %v541
  %v570 = vadd.f32 %v482, %v542
  %v571 = vadd.f32 %v483, %v543
  %v572 = vadd.f32 %v484, %v544
  %v573 = vadd.f32 %v485, %v545
  %v574 = vadd.f32 %v486, %v546
  %v575 = vadd.f32 %v487, %v547
  %v576 = vadd.f32 %v488, %v548
  %v577 = vadd.f32 %v489, %v549
  %v578 = vadd.f32 %v490, %v550
  %v579 = vadd.f32 %v491, %v551
  %v580 = vadd.f32 %v492, %v552
  %s581 = scalar_lea.vmem %s0, 736
  %v582 = vld [vmem:[%s581] sm:$0xff]
  %v583 = vld [vmem:[%s581 + $0x8] sm:$0x3f]
  %v584 = vld [vmem:[%s581 + $0x10] sm:$0xff]
  %v585 = vld [vmem:[%s581 + $0x18] sm:$0x3f]
  %v586 = vld [vmem:[%s581 + $0x20] sm:$0xff]
  %v587 = vld [vmem:[%s581 + $0x28] sm:$0x3f]
  %v588 = vld [vmem:[%s581 + $0x30] sm:$0xff]
  %v589 = vld [vmem:[%s581 + $0x38] sm:$0x3f]
  %v590 = vld [vmem:[%s581 + $0x40] sm:$0xff]
  %v591 = vld [vmem:[%s581 + $0x48] sm:$0x3f]
  %v592 = vld [vmem:[%s581 + $0x50] sm:$0xff]
  %v593 = vld [vmem:[%s581 + $0x58] sm:$0x3f]
  %v594 = vld [vmem:[%s581 + $0x60] sm:$0xff]
  %v595 = vld [vmem:[%s581 + $0x68] sm:$0x3f]
  %v596 = vld [vmem:[%s581 + $0x70] sm:$0xff]
  %v597 = vld [vmem:[%s581 + $0x78] sm:$0x3f]
  %v598 = vld [vmem:[%s581 + $0x80] sm:$0xff]
  %v599 = vld [vmem:[%s581 + $0x88] sm:$0x3f]
  %v600 = vld [vmem:[%s581 + $0x90] sm:$0xff]
  %v601 = vld [vmem:[%s581 + $0x98] sm:$0x3f]
  %v602 = vld [vmem:[%s581 + $0xa0] sm:$0xff]
  %v603 = vld [vmem:[%s581 + $0xa8] sm:$0x3f]
  %v604 = vld [vmem:[%s581 + $0xb0] sm:$0xff]
  %v605 = vld [vmem:[%s581 + $0xb8] sm:$0x3f]
  %v606 = vld [vmem:[%s581 + $0xc0] sm:$0xff]
  %v607 = vld [vmem:[%s581 + $0xc8] sm:$0x3f]
  %v608 = vld [vmem:[%s581 + $0xd0] sm:$0xff]
  %v609 = vld [vmem:[%s581 + $0xd8] sm:$0x3f]
  %v610 = vlaneseq
  %v611 = vshrl.u32 %v610, 7
  %v612 = vsub.s32 0, %v611
  %v613 = vrot.slane %v26, %v612
  %v614 = vmul.f32 %v582, %v613
  %v615 = vmul.f32 %v583, %v613
  %v616 = vmul.f32 %v584, %v613
  %v617 = vmul.f32 %v585, %v613
  %v618 = vmul.f32 %v586, %v613
  %v619 = vmul.f32 %v587, %v613
  %v620 = vmul.f32 %v588, %v613
  %v621 = vmul.f32 %v589, %v613
  %v622 = vmul.f32 %v590, %v613
  %v623 = vmul.f32 %v591, %v613
  %v624 = vmul.f32 %v592, %v613
  %v625 = vmul.f32 %v593, %v613
  %v626 = vmul.f32 %v594, %v613
  %v627 = vmul.f32 %v595, %v613
  %v628 = vmul.f32 %v596, %v613
  %v629 = vmul.f32 %v597, %v613
  %v630 = vmul.f32 %v598, %v613
  %v631 = vmul.f32 %v599, %v613
  %v632 = vmul.f32 %v600, %v613
  %v633 = vmul.f32 %v601, %v613
  %v634 = vmul.f32 %v602, %v613
  %v635 = vmul.f32 %v603, %v613
  %v636 = vmul.f32 %v604, %v613
  %v637 = vmul.f32 %v605, %v613
  %v638 = vmul.f32 %v606, %v613
  %v639 = vmul.f32 %v607, %v613
  %v640 = vmul.f32 %v608, %v613
  %v641 = vmul.f32 %v609, %v613
  %v642 = vadd.f32 %v553, %v614
  %v643 = vadd.f32 %v554, %v615
  %v644 = vadd.f32 %v555, %v616
  %v645 = vadd.f32 %v556, %v617
  %v646 = vadd.f32 %v557, %v618
  %v647 = vadd.f32 %v558, %v619
  %v648 = vadd.f32 %v559, %v620
  %v649 = vadd.f32 %v560, %v621
  %v650 = vadd.f32 %v561, %v622
  %v651 = vadd.f32 %v562, %v623
  %v652 = vadd.f32 %v563, %v624
  %v653 = vadd.f32 %v564, %v625
  %v654 = vadd.f32 %v565, %v626
  %v655 = vadd.f32 %v566, %v627
  %v656 = vadd.f32 %v567, %v628
  %v657 = vadd.f32 %v568, %v629
  %v658 = vadd.f32 %v569, %v630
  %v659 = vadd.f32 %v570, %v631
  %v660 = vadd.f32 %v571, %v632
  %v661 = vadd.f32 %v572, %v633
  %v662 = vadd.f32 %v573, %v634
  %v663 = vadd.f32 %v574, %v635
  %v664 = vadd.f32 %v575, %v636
  %v665 = vadd.f32 %v576, %v637
  %v666 = vadd.f32 %v577, %v638
  %v667 = vadd.f32 %v578, %v639
  %v668 = vadd.f32 %v579, %v640
  %v669 = vadd.f32 %v580, %v641
  %s670 = scalar_lea.vmem %s0, 496
  %v671 = vld [vmem:[%s670] sm:$0xff]
  %v672 = vld [vmem:[%s670 + $0x8] sm:$0x3f]
  %v673 = vld [vmem:[%s670 + $0x10] sm:$0xff]
  %v674 = vld [vmem:[%s670 + $0x18] sm:$0x3f]
  %v675 = vld [vmem:[%s670 + $0x20] sm:$0xff]
  %v676 = vld [vmem:[%s670 + $0x28] sm:$0x3f]
  %v677 = vld [vmem:[%s670 + $0x30] sm:$0xff]
  %v678 = vld [vmem:[%s670 + $0x38] sm:$0x3f]
  %v679 = vld [vmem:[%s670 + $0x40] sm:$0xff]
  %v680 = vld [vmem:[%s670 + $0x48] sm:$0x3f]
  %v681 = vld [vmem:[%s670 + $0x50] sm:$0xff]
  %v682 = vld [vmem:[%s670 + $0x58] sm:$0x3f]
  %v683 = vld [vmem:[%s670 + $0x60] sm:$0xff]
  %v684 = vld [vmem:[%s670 + $0x68] sm:$0x3f]
  %v685 = vld [vmem:[%s670 + $0x70] sm:$0xff]
  %v686 = vld [vmem:[%s670 + $0x78] sm:$0x3f]
  %v687 = vld [vmem:[%s670 + $0x80] sm:$0xff]
  %v688 = vld [vmem:[%s670 + $0x88] sm:$0x3f]
  %v689 = vld [vmem:[%s670 + $0x90] sm:$0xff]
  %v690 = vld [vmem:[%s670 + $0x98] sm:$0x3f]
  %v691 = vld [vmem:[%s670 + $0xa0] sm:$0xff]
  %v692 = vld [vmem:[%s670 + $0xa8] sm:$0x3f]
  %v693 = vld [vmem:[%s670 + $0xb0] sm:$0xff]
  %v694 = vld [vmem:[%s670 + $0xb8] sm:$0x3f]
  %v695 = vld [vmem:[%s670 + $0xc0] sm:$0xff]
  %v696 = vld [vmem:[%s670 + $0xc8] sm:$0x3f]
  %v697 = vld [vmem:[%s670 + $0xd0] sm:$0xff]
  %v698 = vld [vmem:[%s670 + $0xd8] sm:$0x3f]
  %v699 = vlaneseq
  %v700 = vshrl.u32 %v699, 7
  %v701 = vsub.s32 0, %v700
  %v702 = vrot.slane %v27, %v701
  %v703 = vmul.f32 %v671, %v702
  %v704 = vmul.f32 %v672, %v702
  %v705 = vmul.f32 %v673, %v702
  %v706 = vmul.f32 %v674, %v702
  %v707 = vmul.f32 %v675, %v702
  %v708 = vmul.f32 %v676, %v702
  %v709 = vmul.f32 %v677, %v702
  %v710 = vmul.f32 %v678, %v702
  %v711 = vmul.f32 %v679, %v702
  %v712 = vmul.f32 %v680, %v702
  %v713 = vmul.f32 %v681, %v702
  %v714 = vmul.f32 %v682, %v702
  %v715 = vmul.f32 %v683, %v702
  %v716 = vmul.f32 %v684, %v702
  %v717 = vmul.f32 %v685, %v702
  %v718 = vmul.f32 %v686, %v702
  %v719 = vmul.f32 %v687, %v702
  %v720 = vmul.f32 %v688, %v702
  %v721 = vmul.f32 %v689, %v702
  %v722 = vmul.f32 %v690, %v702
  %v723 = vmul.f32 %v691, %v702
  %v724 = vmul.f32 %v692, %v702
  %v725 = vmul.f32 %v693, %v702
  %v726 = vmul.f32 %v694, %v702
  %v727 = vmul.f32 %v695, %v702
  %v728 = vmul.f32 %v696, %v702
  %v729 = vmul.f32 %v697, %v702
  %v730 = vmul.f32 %v698, %v702
  %v731 = vadd.f32 %v642, %v703
  %v732 = vadd.f32 %v643, %v704
  %v733 = vadd.f32 %v644, %v705
  %v734 = vadd.f32 %v645, %v706
  %v735 = vadd.f32 %v646, %v707
  %v736 = vadd.f32 %v647, %v708
  %v737 = vadd.f32 %v648, %v709
  %v738 = vadd.f32 %v649, %v710
  %v739 = vadd.f32 %v650, %v711
  %v740 = vadd.f32 %v651, %v712
  %v741 = vadd.f32 %v652, %v713
  %v742 = vadd.f32 %v653, %v714
  %v743 = vadd.f32 %v654, %v715
  %v744 = vadd.f32 %v655, %v716
  %v745 = vadd.f32 %v656, %v717
  %v746 = vadd.f32 %v657, %v718
  %v747 = vadd.f32 %v658, %v719
  %v748 = vadd.f32 %v659, %v720
  %v749 = vadd.f32 %v660, %v721
  %v750 = vadd.f32 %v661, %v722
  %v751 = vadd.f32 %v662, %v723
  %v752 = vadd.f32 %v663, %v724
  %v753 = vadd.f32 %v664, %v725
  %v754 = vadd.f32 %v665, %v726
  %v755 = vadd.f32 %v666, %v727
  %v756 = vadd.f32 %v667, %v728
  %v757 = vadd.f32 %v668, %v729
  %v758 = vadd.f32 %v669, %v730
  %v759 = vld [vmem:[%s581 + $0x1] sm:$0xff]
  %v760 = vld [vmem:[%s581 + $0x9] sm:$0x3f]
  %v761 = vld [vmem:[%s581 + $0x11] sm:$0xff]
  %v762 = vld [vmem:[%s581 + $0x19] sm:$0x3f]
  %v763 = vld [vmem:[%s581 + $0x21] sm:$0xff]
  %v764 = vld [vmem:[%s581 + $0x29] sm:$0x3f]
  %v765 = vld [vmem:[%s581 + $0x31] sm:$0xff]
  %v766 = vld [vmem:[%s581 + $0x39] sm:$0x3f]
  %v767 = vld [vmem:[%s581 + $0x41] sm:$0xff]
  %v768 = vld [vmem:[%s581 + $0x49] sm:$0x3f]
  %v769 = vld [vmem:[%s581 + $0x51] sm:$0xff]
  %v770 = vld [vmem:[%s581 + $0x59] sm:$0x3f]
  %v771 = vld [vmem:[%s581 + $0x61] sm:$0xff]
  %v772 = vld [vmem:[%s581 + $0x69] sm:$0x3f]
  %v773 = vld [vmem:[%s581 + $0x71] sm:$0xff]
  %v774 = vld [vmem:[%s581 + $0x79] sm:$0x3f]
  %v775 = vld [vmem:[%s581 + $0x81] sm:$0xff]
  %v776 = vld [vmem:[%s581 + $0x89] sm:$0x3f]
  %v777 = vld [vmem:[%s581 + $0x91] sm:$0xff]
  %v778 = vld [vmem:[%s581 + $0x99] sm:$0x3f]
  %v779 = vld [vmem:[%s581 + $0xa1] sm:$0xff]
  %v780 = vld [vmem:[%s581 + $0xa9] sm:$0x3f]
  %v781 = vld [vmem:[%s581 + $0xb1] sm:$0xff]
  %v782 = vld [vmem:[%s581 + $0xb9] sm:$0x3f]
  %v783 = vld [vmem:[%s581 + $0xc1] sm:$0xff]
  %v784 = vld [vmem:[%s581 + $0xc9] sm:$0x3f]
  %v785 = vld [vmem:[%s581 + $0xd1] sm:$0xff]
  %v786 = vld [vmem:[%s581 + $0xd9] sm:$0x3f]
  %v787 = vlaneseq
  %v788 = vshrl.u32 %v787, 7
  %v789 = vsub.s32 0, %v788
  %v790 = vrot.slane %v28, %v789
  %v791 = vmul.f32 %v759, %v790
  %v792 = vmul.f32 %v760, %v790
  %v793 = vmul.f32 %v761, %v790
  %v794 = vmul.f32 %v762, %v790
  %v795 = vmul.f32 %v763, %v790
  %v796 = vmul.f32 %v764, %v790
  %v797 = vmul.f32 %v765, %v790
  %v798 = vmul.f32 %v766, %v790
  %v799 = vmul.f32 %v767, %v790
  %v800 = vmul.f32 %v768, %v790
  %v801 = vmul.f32 %v769, %v790
  %v802 = vmul.f32 %v770, %v790
  %v803 = vmul.f32 %v771, %v790
  %v804 = vmul.f32 %v772, %v790
  %v805 = vmul.f32 %v773, %v790
  %v806 = vmul.f32 %v774, %v790
  %v807 = vmul.f32 %v775, %v790
  %v808 = vmul.f32 %v776, %v790
  %v809 = vmul.f32 %v777, %v790
  %v810 = vmul.f32 %v778, %v790
  %v811 = vmul.f32 %v779, %v790
  %v812 = vmul.f32 %v780, %v790
  %v813 = vmul.f32 %v781, %v790
  %v814 = vmul.f32 %v782, %v790
  %v815 = vmul.f32 %v783, %v790
  %v816 = vmul.f32 %v784, %v790
  %v817 = vmul.f32 %v785, %v790
  %v818 = vmul.f32 %v786, %v790
  %v819 = vadd.f32 %v731, %v791
  %v820 = vadd.f32 %v732, %v792
  %v821 = vadd.f32 %v733, %v793
  %v822 = vadd.f32 %v734, %v794
  %v823 = vadd.f32 %v735, %v795
  %v824 = vadd.f32 %v736, %v796
  %v825 = vadd.f32 %v737, %v797
  %v826 = vadd.f32 %v738, %v798
  %v827 = vadd.f32 %v739, %v799
  %v828 = vadd.f32 %v740, %v800
  %v829 = vadd.f32 %v741, %v801
  %v830 = vadd.f32 %v742, %v802
  %v831 = vadd.f32 %v743, %v803
  %v832 = vadd.f32 %v744, %v804
  %v833 = vadd.f32 %v745, %v805
  %v834 = vadd.f32 %v746, %v806
  %v835 = vadd.f32 %v747, %v807
  %v836 = vadd.f32 %v748, %v808
  %v837 = vadd.f32 %v749, %v809
  %v838 = vadd.f32 %v750, %v810
  %v839 = vadd.f32 %v751, %v811
  %v840 = vadd.f32 %v752, %v812
  %v841 = vadd.f32 %v753, %v813
  %v842 = vadd.f32 %v754, %v814
  %v843 = vadd.f32 %v755, %v815
  %v844 = vadd.f32 %v756, %v816
  %v845 = vadd.f32 %v757, %v817
  %v846 = vadd.f32 %v758, %v818
  %v848 = vlaneseq
  %v849 = vshrl.u32 %v848, 7
  %v850 = vsub.s32 0, %v849
  %v851 = vrot.slane %v38, %v850
  %v853 = vadd.f32 %v819, %v851
  %v854 = vadd.f32 %v820, %v851
  %v855 = vadd.f32 %v821, %v851
  %v856 = vadd.f32 %v822, %v851
  %v857 = vadd.f32 %v823, %v851
  %v858 = vadd.f32 %v824, %v851
  %v859 = vadd.f32 %v825, %v851
  %v860 = vadd.f32 %v826, %v851
  %v861 = vadd.f32 %v827, %v851
  %v862 = vadd.f32 %v828, %v851
  %v863 = vadd.f32 %v829, %v851
  %v864 = vadd.f32 %v830, %v851
  %v865 = vadd.f32 %v831, %v851
  %v866 = vadd.f32 %v832, %v851
  %v867 = vadd.f32 %v833, %v851
  %v868 = vadd.f32 %v834, %v851
  %v869 = vadd.f32 %v835, %v851
  %v870 = vadd.f32 %v836, %v851
  %v871 = vadd.f32 %v837, %v851
  %v872 = vadd.f32 %v838, %v851
  %v873 = vadd.f32 %v839, %v851
  %v874 = vadd.f32 %v840, %v851
  %v875 = vadd.f32 %v841, %v851
  %v876 = vadd.f32 %v842, %v851
  %v877 = vadd.f32 %v843, %v851
  %v878 = vadd.f32 %v844, %v851
  %v879 = vadd.f32 %v845, %v851
  %v880 = vadd.f32 %v846, %v851
  %v881 = vmax.f32 %v853, 0.0
  %v882 = vmax.f32 %v854, 0.0
  %v883 = vmax.f32 %v855, 0.0
  %v884 = vmax.f32 %v856, 0.0
  %v885 = vmax.f32 %v857, 0.0
  %v886 = vmax.f32 %v858, 0.0
  %v887 = vmax.f32 %v859, 0.0
  %v888 = vmax.f32 %v860, 0.0
  %v889 = vmax.f32 %v861, 0.0
  %v890 = vmax.f32 %v862, 0.0
  %v891 = vmax.f32 %v863, 0.0
  %v892 = vmax.f32 %v864, 0.0
  %v893 = vmax.f32 %v865, 0.0
  %v894 = vmax.f32 %v866, 0.0
  %v895 = vmax.f32 %v867, 0.0
  %v896 = vmax.f32 %v868, 0.0
  %v897 = vmax.f32 %v869, 0.0
  %v898 = vmax.f32 %v870, 0.0
  %v899 = vmax.f32 %v871, 0.0
  %v900 = vmax.f32 %v872, 0.0
  %v901 = vmax.f32 %v873, 0.0
  %v902 = vmax.f32 %v874, 0.0
  %v903 = vmax.f32 %v875, 0.0
  %v904 = vmax.f32 %v876, 0.0
  %v905 = vmax.f32 %v877, 0.0
  %v906 = vmax.f32 %v878, 0.0
  %v907 = vmax.f32 %v879, 0.0
  %v908 = vmax.f32 %v880, 0.0
  %909 = vst.msk [vmem:[%s48 + $0x8] sm:$0xff] %vm40, %v881
  %vm910 = vcmask 521216
  %911 = vst.msk [vmem:[%s48 + $0x10] sm:$0x3f] %vm910, %v882
  %912 = vst.msk [vmem:[%s48 + $0x20] sm:$0xff] %vm40, %v883
  %913 = vst.msk [vmem:[%s48 + $0x28] sm:$0x3f] %vm910, %v884
  %914 = vst.msk [vmem:[%s48 + $0x38] sm:$0xff] %vm40, %v885
  %915 = vst.msk [vmem:[%s48 + $0x40] sm:$0x3f] %vm910, %v886
  %916 = vst.msk [vmem:[%s48 + $0x50] sm:$0xff] %vm40, %v887
  %917 = vst.msk [vmem:[%s48 + $0x58] sm:$0x3f] %vm910, %v888
  %918 = vst.msk [vmem:[%s48 + $0x68] sm:$0xff] %vm40, %v889
  %919 = vst.msk [vmem:[%s48 + $0x70] sm:$0x3f] %vm910, %v890
  %920 = vst.msk [vmem:[%s48 + $0x80] sm:$0xff] %vm40, %v891
  %921 = vst.msk [vmem:[%s48 + $0x88] sm:$0x3f] %vm910, %v892
  %922 = vst.msk [vmem:[%s48 + $0x98] sm:$0xff] %vm40, %v893
  %923 = vst.msk [vmem:[%s48 + $0xa0] sm:$0x3f] %vm910, %v894
  %924 = vst.msk [vmem:[%s48 + $0xb0] sm:$0xff] %vm40, %v895
  %925 = vst.msk [vmem:[%s48 + $0xb8] sm:$0x3f] %vm910, %v896
  %926 = vst.msk [vmem:[%s48 + $0xc8] sm:$0xff] %vm40, %v897
  %927 = vst.msk [vmem:[%s48 + $0xd0] sm:$0x3f] %vm910, %v898
  %928 = vst.msk [vmem:[%s48 + $0xe0] sm:$0xff] %vm40, %v899
  %929 = vst.msk [vmem:[%s48 + $0xe8] sm:$0x3f] %vm910, %v900
  %930 = vst.msk [vmem:[%s48 + $0xf8] sm:$0xff] %vm40, %v901
  %931 = vst.msk [vmem:[%s48 + $0x100] sm:$0x3f] %vm910, %v902
  %932 = vst.msk [vmem:[%s48 + $0x110] sm:$0xff] %vm40, %v903
  %933 = vst.msk [vmem:[%s48 + $0x118] sm:$0x3f] %vm910, %v904
  %934 = vst.msk [vmem:[%s48 + $0x128] sm:$0xff] %vm40, %v905
  %935 = vst.msk [vmem:[%s48 + $0x130] sm:$0x3f] %vm910, %v906
  %936 = vst.msk [vmem:[%s48 + $0x140] sm:$0xff] %vm40, %v907
  %937 = vst.msk [vmem:[%s48 + $0x148] sm:$0x3f] %vm910, %v908
  %v938 = vld [vmem:[#allocation2 + $0x7] sm:$0xff]
  %v939 = vld [vmem:[#allocation2 + $0xf] sm:$0x3f]
  %v940 = vld [vmem:[#allocation2 + $0x1f] sm:$0xff]
  %v941 = vld [vmem:[#allocation2 + $0x27] sm:$0x3f]
  %v942 = vld [vmem:[#allocation2 + $0x37] sm:$0xff]
  %v943 = vld [vmem:[#allocation2 + $0x3f] sm:$0x3f]
  %v944 = vld [vmem:[#allocation2 + $0x4f] sm:$0xff]
  %v945 = vld [vmem:[#allocation2 + $0x57] sm:$0x3f]
  %v946 = vld [vmem:[#allocation2 + $0x67] sm:$0xff]
  %v947 = vld [vmem:[#allocation2 + $0x6f] sm:$0x3f]
  %v948 = vld [vmem:[#allocation2 + $0x7f] sm:$0xff]
  %v949 = vld [vmem:[#allocation2 + $0x87] sm:$0x3f]
  %v950 = vld [vmem:[#allocation2 + $0x97] sm:$0xff]
  %v951 = vld [vmem:[#allocation2 + $0x9f] sm:$0x3f]
  %v952 = vld [vmem:[#allocation2 + $0xaf] sm:$0xff]
  %v953 = vld [vmem:[#allocation2 + $0xb7] sm:$0x3f]
  %v954 = vld [vmem:[#allocation2 + $0xc7] sm:$0xff]
  %v955 = vld [vmem:[#allocation2 + $0xcf] sm:$0x3f]
  %v956 = vld [vmem:[#allocation2 + $0xdf] sm:$0xff]
  %v957 = vld [vmem:[#allocation2 + $0xe7] sm:$0x3f]
  %v958 = vld [vmem:[#allocation2 + $0xf7] sm:$0xff]
  %v959 = vld [vmem:[#allocation2 + $0xff] sm:$0x3f]
  %v960 = vld [vmem:[#allocation2 + $0x10f] sm:$0xff]
  %v961 = vld [vmem:[#allocation2 + $0x117] sm:$0x3f]
  %v962 = vld [vmem:[#allocation2 + $0x127] sm:$0xff]
  %v963 = vld [vmem:[#allocation2 + $0x12f] sm:$0x3f]
  %v964 = vld [vmem:[#allocation2 + $0x13f] sm:$0xff]
  %v965 = vld [vmem:[#allocation2 + $0x147] sm:$0x3f]
  %v966 = vlaneseq
  %v967 = vshrl.u32 %v966, 7
  %v968 = vsub.s32 0, %v967
  %v969 = vrot.slane %v29, %v968
  %v970 = vmul.f32 %v938, %v969
  %v971 = vmul.f32 %v939, %v969
  %v972 = vmul.f32 %v940, %v969
  %v973 = vmul.f32 %v941, %v969
  %v974 = vmul.f32 %v942, %v969
  %v975 = vmul.f32 %v943, %v969
  %v976 = vmul.f32 %v944, %v969
  %v977 = vmul.f32 %v945, %v969
  %v978 = vmul.f32 %v946, %v969
  %v979 = vmul.f32 %v947, %v969
  %v980 = vmul.f32 %v948, %v969
  %v981 = vmul.f32 %v949, %v969
  %v982 = vmul.f32 %v950, %v969
  %v983 = vmul.f32 %v951, %v969
  %v984 = vmul.f32 %v952, %v969
  %v985 = vmul.f32 %v953, %v969
  %v986 = vmul.f32 %v954, %v969
  %v987 = vmul.f32 %v955, %v969
  %v988 = vmul.f32 %v956, %v969
  %v989 = vmul.f32 %v957, %v969
  %v990 = vmul.f32 %v958, %v969
  %v991 = vmul.f32 %v959, %v969
  %v992 = vmul.f32 %v960, %v969
  %v993 = vmul.f32 %v961, %v969
  %v994 = vmul.f32 %v962, %v969
  %v995 = vmul.f32 %v963, %v969
  %v996 = vmul.f32 %v964, %v969
  %v997 = vmul.f32 %v965, %v969
  %v998 = vld [vmem:[#allocation2 + $0x8] sm:$0xff]
  %v999 = vld [vmem:[#allocation2 + $0x10] sm:$0x3f]
  %v1000 = vld [vmem:[#allocation2 + $0x20] sm:$0xff]
  %v1001 = vld [vmem:[#allocation2 + $0x28] sm:$0x3f]
  %v1002 = vld [vmem:[#allocation2 + $0x38] sm:$0xff]
  %v1003 = vld [vmem:[#allocation2 + $0x40] sm:$0x3f]
  %v1004 = vld [vmem:[#allocation2 + $0x50] sm:$0xff]
  %v1005 = vld [vmem:[#allocation2 + $0x58] sm:$0x3f]
  %v1006 = vld [vmem:[#allocation2 + $0x68] sm:$0xff]
  %v1007 = vld [vmem:[#allocation2 + $0x70] sm:$0x3f]
  %v1008 = vld [vmem:[#allocation2 + $0x80] sm:$0xff]
  %v1009 = vld [vmem:[#allocation2 + $0x88] sm:$0x3f]
  %v1010 = vld [vmem:[#allocation2 + $0x98] sm:$0xff]
  %v1011 = vld [vmem:[#allocation2 + $0xa0] sm:$0x3f]
  %v1012 = vld [vmem:[#allocation2 + $0xb0] sm:$0xff]
  %v1013 = vld [vmem:[#allocation2 + $0xb8] sm:$0x3f]
  %v1014 = vld [vmem:[#allocation2 + $0xc8] sm:$0xff]
  %v1015 = vld [vmem:[#allocation2 + $0xd0] sm:$0x3f]
  %v1016 = vld [vmem:[#allocation2 + $0xe0] sm:$0xff]
  %v1017 = vld [vmem:[#allocation2 + $0xe8] sm:$0x3f]
  %v1018 = vld [vmem:[#allocation2 + $0xf8] sm:$0xff]
  %v1019 = vld [vmem:[#allocation2 + $0x100] sm:$0x3f]
  %v1020 = vld [vmem:[#allocation2 + $0x110] sm:$0xff]
  %v1021 = vld [vmem:[#allocation2 + $0x118] sm:$0x3f]
  %v1022 = vld [vmem:[#allocation2 + $0x128] sm:$0xff]
  %v1023 = vld [vmem:[#allocation2 + $0x130] sm:$0x3f]
  %v1024 = vld [vmem:[#allocation2 + $0x140] sm:$0xff]
  %v1025 = vld [vmem:[#allocation2 + $0x148] sm:$0x3f]
  %v1026 = vlaneseq
  %v1027 = vshrl.u32 %v1026, 7
  %v1028 = vsub.s32 0, %v1027
  %v1029 = vrot.slane %v30, %v1028
  %v1030 = vmul.f32 %v998, %v1029
  %v1031 = vmul.f32 %v999, %v1029
  %v1032 = vmul.f32 %v1000, %v1029
  %v1033 = vmul.f32 %v1001, %v1029
  %v1034 = vmul.f32 %v1002, %v1029
  %v1035 = vmul.f32 %v1003, %v1029
  %v1036 = vmul.f32 %v1004, %v1029
  %v1037 = vmul.f32 %v1005, %v1029
  %v1038 = vmul.f32 %v1006, %v1029
  %v1039 = vmul.f32 %v1007, %v1029
  %v1040 = vmul.f32 %v1008, %v1029
  %v1041 = vmul.f32 %v1009, %v1029
  %v1042 = vmul.f32 %v1010, %v1029
  %v1043 = vmul.f32 %v1011, %v1029
  %v1044 = vmul.f32 %v1012, %v1029
  %v1045 = vmul.f32 %v1013, %v1029
  %v1046 = vmul.f32 %v1014, %v1029
  %v1047 = vmul.f32 %v1015, %v1029
  %v1048 = vmul.f32 %v1016, %v1029
  %v1049 = vmul.f32 %v1017, %v1029
  %v1050 = vmul.f32 %v1018, %v1029
  %v1051 = vmul.f32 %v1019, %v1029
  %v1052 = vmul.f32 %v1020, %v1029
  %v1053 = vmul.f32 %v1021, %v1029
  %v1054 = vmul.f32 %v1022, %v1029
  %v1055 = vmul.f32 %v1023, %v1029
  %v1056 = vmul.f32 %v1024, %v1029
  %v1057 = vmul.f32 %v1025, %v1029
  %v1058 = vadd.f32 %v970, %v1030
  %v1059 = vadd.f32 %v971, %v1031
  %v1060 = vadd.f32 %v972, %v1032
  %v1061 = vadd.f32 %v973, %v1033
  %v1062 = vadd.f32 %v974, %v1034
  %v1063 = vadd.f32 %v975, %v1035
  %v1064 = vadd.f32 %v976, %v1036
  %v1065 = vadd.f32 %v977, %v1037
  %v1066 = vadd.f32 %v978, %v1038
  %v1067 = vadd.f32 %v979, %v1039
  %v1068 = vadd.f32 %v980, %v1040
  %v1069 = vadd.f32 %v981, %v1041
  %v1070 = vadd.f32 %v982, %v1042
  %v1071 = vadd.f32 %v983, %v1043
  %v1072 = vadd.f32 %v984, %v1044
  %v1073 = vadd.f32 %v985, %v1045
  %v1074 = vadd.f32 %v986, %v1046
  %v1075 = vadd.f32 %v987, %v1047
  %v1076 = vadd.f32 %v988, %v1048
  %v1077 = vadd.f32 %v989, %v1049
  %v1078 = vadd.f32 %v990, %v1050
  %v1079 = vadd.f32 %v991, %v1051
  %v1080 = vadd.f32 %v992, %v1052
  %v1081 = vadd.f32 %v993, %v1053
  %v1082 = vadd.f32 %v994, %v1054
  %v1083 = vadd.f32 %v995, %v1055
  %v1084 = vadd.f32 %v996, %v1056
  %v1085 = vadd.f32 %v997, %v1057
  %v1086 = vld [vmem:[#allocation2 + $0x9] sm:$0xff]
  %v1087 = vld [vmem:[#allocation2 + $0x11] sm:$0x3f]
  %v1088 = vld [vmem:[#allocation2 + $0x21] sm:$0xff]
  %v1089 = vld [vmem:[#allocation2 + $0x29] sm:$0x3f]
  %v1090 = vld [vmem:[#allocation2 + $0x39] sm:$0xff]
  %v1091 = vld [vmem:[#allocation2 + $0x41] sm:$0x3f]
  %v1092 = vld [vmem:[#allocation2 + $0x51] sm:$0xff]
  %v1093 = vld [vmem:[#allocation2 + $0x59] sm:$0x3f]
  %v1094 = vld [vmem:[#allocation2 + $0x69] sm:$0xff]
  %v1095 = vld [vmem:[#allocation2 + $0x71] sm:$0x3f]
  %v1096 = vld [vmem:[#allocation2 + $0x81] sm:$0xff]
  %v1097 = vld [vmem:[#allocation2 + $0x89] sm:$0x3f]
  %v1098 = vld [vmem:[#allocation2 + $0x99] sm:$0xff]
  %v1099 = vld [vmem:[#allocation2 + $0xa1] sm:$0x3f]
  %v1100 = vld [vmem:[#allocation2 + $0xb1] sm:$0xff]
  %v1101 = vld [vmem:[#allocation2 + $0xb9] sm:$0x3f]
  %v1102 = vld [vmem:[#allocation2 + $0xc9] sm:$0xff]
  %v1103 = vld [vmem:[#allocation2 + $0xd1] sm:$0x3f]
  %v1104 = vld [vmem:[#allocation2 + $0xe1] sm:$0xff]
  %v1105 = vld [vmem:[#allocation2 + $0xe9] sm:$0x3f]
  %v1106 = vld [vmem:[#allocation2 + $0xf9] sm:$0xff]
  %v1107 = vld [vmem:[#allocation2 + $0x101] sm:$0x3f]
  %v1108 = vld [vmem:[#allocation2 + $0x111] sm:$0xff]
  %v1109 = vld [vmem:[#allocation2 + $0x119] sm:$0x3f]
  %v1110 = vld [vmem:[#allocation2 + $0x129] sm:$0xff]
  %v1111 = vld [vmem:[#allocation2 + $0x131] sm:$0x3f]
  %v1112 = vld [vmem:[#allocation2 + $0x141] sm:$0xff]
  %v1113 = vld [vmem:[#allocation2 + $0x149] sm:$0x3f]
  %v1114 = vlaneseq
  %v1115 = vshrl.u32 %v1114, 7
  %v1116 = vsub.s32 0, %v1115
  %v1117 = vrot.slane %v31, %v1116
  %v1118 = vmul.f32 %v1086, %v1117
  %v1119 = vmul.f32 %v1087, %v1117
  %v1120 = vmul.f32 %v1088, %v1117
  %v1121 = vmul.f32 %v1089, %v1117
  %v1122 = vmul.f32 %v1090, %v1117
  %v1123 = vmul.f32 %v1091, %v1117
  %v1124 = vmul.f32 %v1092, %v1117
  %v1125 = vmul.f32 %v1093, %v1117
  %v1126 = vmul.f32 %v1094, %v1117
  %v1127 = vmul.f32 %v1095, %v1117
  %v1128 = vmul.f32 %v1096, %v1117
  %v1129 = vmul.f32 %v1097, %v1117
  %v1130 = vmul.f32 %v1098, %v1117
  %v1131 = vmul.f32 %v1099, %v1117
  %v1132 = vmul.f32 %v1100, %v1117
  %v1133 = vmul.f32 %v1101, %v1117
  %v1134 = vmul.f32 %v1102, %v1117
  %v1135 = vmul.f32 %v1103, %v1117
  %v1136 = vmul.f32 %v1104, %v1117
  %v1137 = vmul.f32 %v1105, %v1117
  %v1138 = vmul.f32 %v1106, %v1117
  %v1139 = vmul.f32 %v1107, %v1117
  %v1140 = vmul.f32 %v1108, %v1117
  %v1141 = vmul.f32 %v1109, %v1117
  %v1142 = vmul.f32 %v1110, %v1117
  %v1143 = vmul.f32 %v1111, %v1117
  %v1144 = vmul.f32 %v1112, %v1117
  %v1145 = vmul.f32 %v1113, %v1117
  %v1146 = vadd.f32 %v1058, %v1118
  %v1147 = vadd.f32 %v1059, %v1119
  %v1148 = vadd.f32 %v1060, %v1120
  %v1149 = vadd.f32 %v1061, %v1121
  %v1150 = vadd.f32 %v1062, %v1122
  %v1151 = vadd.f32 %v1063, %v1123
  %v1152 = vadd.f32 %v1064, %v1124
  %v1153 = vadd.f32 %v1065, %v1125
  %v1154 = vadd.f32 %v1066, %v1126
  %v1155 = vadd.f32 %v1067, %v1127
  %v1156 = vadd.f32 %v1068, %v1128
  %v1157 = vadd.f32 %v1069, %v1129
  %v1158 = vadd.f32 %v1070, %v1130
  %v1159 = vadd.f32 %v1071, %v1131
  %v1160 = vadd.f32 %v1072, %v1132
  %v1161 = vadd.f32 %v1073, %v1133
  %v1162 = vadd.f32 %v1074, %v1134
  %v1163 = vadd.f32 %v1075, %v1135
  %v1164 = vadd.f32 %v1076, %v1136
  %v1165 = vadd.f32 %v1077, %v1137
  %v1166 = vadd.f32 %v1078, %v1138
  %v1167 = vadd.f32 %v1079, %v1139
  %v1168 = vadd.f32 %v1080, %v1140
  %v1169 = vadd.f32 %v1081, %v1141
  %v1170 = vadd.f32 %v1082, %v1142
  %v1171 = vadd.f32 %v1083, %v1143
  %v1172 = vadd.f32 %v1084, %v1144
  %v1173 = vadd.f32 %v1085, %v1145
  %v1174 = vld [vmem:[%s48 + $0x7] sm:$0xff]
  %v1175 = vld [vmem:[%s48 + $0xf] sm:$0x3f]
  %v1176 = vld [vmem:[%s48 + $0x1f] sm:$0xff]
  %v1177 = vld [vmem:[%s48 + $0x27] sm:$0x3f]
  %v1178 = vld [vmem:[%s48 + $0x37] sm:$0xff]
  %v1179 = vld [vmem:[%s48 + $0x3f] sm:$0x3f]
  %v1180 = vld [vmem:[%s48 + $0x4f] sm:$0xff]
  %v1181 = vld [vmem:[%s48 + $0x57] sm:$0x3f]
  %v1182 = vld [vmem:[%s48 + $0x67] sm:$0xff]
  %v1183 = vld [vmem:[%s48 + $0x6f] sm:$0x3f]
  %v1184 = vld [vmem:[%s48 + $0x7f] sm:$0xff]
  %v1185 = vld [vmem:[%s48 + $0x87] sm:$0x3f]
  %v1186 = vld [vmem:[%s48 + $0x97] sm:$0xff]
  %v1187 = vld [vmem:[%s48 + $0x9f] sm:$0x3f]
  %v1188 = vld [vmem:[%s48 + $0xaf] sm:$0xff]
  %v1189 = vld [vmem:[%s48 + $0xb7] sm:$0x3f]
  %v1190 = vld [vmem:[%s48 + $0xc7] sm:$0xff]
  %v1191 = vld [vmem:[%s48 + $0xcf] sm:$0x3f]
  %v1192 = vld [vmem:[%s48 + $0xdf] sm:$0xff]
  %v1193 = vld [vmem:[%s48 + $0xe7] sm:$0x3f]
  %v1194 = vld [vmem:[%s48 + $0xf7] sm:$0xff]
  %v1195 = vld [vmem:[%s48 + $0xff] sm:$0x3f]
  %v1196 = vld [vmem:[%s48 + $0x10f] sm:$0xff]
  %v1197 = vld [vmem:[%s48 + $0x117] sm:$0x3f]
  %v1198 = vld [vmem:[%s48 + $0x127] sm:$0xff]
  %v1199 = vld [vmem:[%s48 + $0x12f] sm:$0x3f]
  %v1200 = vld [vmem:[%s48 + $0x13f] sm:$0xff]
  %v1201 = vld [vmem:[%s48 + $0x147] sm:$0x3f]
  %v1202 = vlaneseq
  %v1203 = vshrl.u32 %v1202, 7
  %v1204 = vsub.s32 0, %v1203
  %v1205 = vrot.slane %v32, %v1204
  %v1206 = vmul.f32 %v1174, %v1205
  %v1207 = vmul.f32 %v1175, %v1205
  %v1208 = vmul.f32 %v1176, %v1205
  %v1209 = vmul.f32 %v1177, %v1205
  %v1210 = vmul.f32 %v1178, %v1205
  %v1211 = vmul.f32 %v1179, %v1205
  %v1212 = vmul.f32 %v1180, %v1205
  %v1213 = vmul.f32 %v1181, %v1205
  %v1214 = vmul.f32 %v1182, %v1205
  %v1215 = vmul.f32 %v1183, %v1205
  %v1216 = vmul.f32 %v1184, %v1205
  %v1217 = vmul.f32 %v1185, %v1205
  %v1218 = vmul.f32 %v1186, %v1205
  %v1219 = vmul.f32 %v1187, %v1205
  %v1220 = vmul.f32 %v1188, %v1205
  %v1221 = vmul.f32 %v1189, %v1205
  %v1222 = vmul.f32 %v1190, %v1205
  %v1223 = vmul.f32 %v1191, %v1205
  %v1224 = vmul.f32 %v1192, %v1205
  %v1225 = vmul.f32 %v1193, %v1205
  %v1226 = vmul.f32 %v1194, %v1205
  %v1227 = vmul.f32 %v1195, %v1205
  %v1228 = vmul.f32 %v1196, %v1205
  %v1229 = vmul.f32 %v1197, %v1205
  %v1230 = vmul.f32 %v1198, %v1205
  %v1231 = vmul.f32 %v1199, %v1205
  %v1232 = vmul.f32 %v1200, %v1205
  %v1233 = vmul.f32 %v1201, %v1205
  %v1234 = vadd.f32 %v1146, %v1206
  %v1235 = vadd.f32 %v1147, %v1207
  %v1236 = vadd.f32 %v1148, %v1208
  %v1237 = vadd.f32 %v1149, %v1209
  %v1238 = vadd.f32 %v1150, %v1210
  %v1239 = vadd.f32 %v1151, %v1211
  %v1240 = vadd.f32 %v1152, %v1212
  %v1241 = vadd.f32 %v1153, %v1213
  %v1242 = vadd.f32 %v1154, %v1214
  %v1243 = vadd.f32 %v1155, %v1215
  %v1244 = vadd.f32 %v1156, %v1216
  %v1245 = vadd.f32 %v1157, %v1217
  %v1246 = vadd.f32 %v1158, %v1218
  %v1247 = vadd.f32 %v1159, %v1219
  %v1248 = vadd.f32 %v1160, %v1220
  %v1249 = vadd.f32 %v1161, %v1221
  %v1250 = vadd.f32 %v1162, %v1222
  %v1251 = vadd.f32 %v1163, %v1223
  %v1252 = vadd.f32 %v1164, %v1224
  %v1253 = vadd.f32 %v1165, %v1225
  %v1254 = vadd.f32 %v1166, %v1226
  %v1255 = vadd.f32 %v1167, %v1227
  %v1256 = vadd.f32 %v1168, %v1228
  %v1257 = vadd.f32 %v1169, %v1229
  %v1258 = vadd.f32 %v1170, %v1230
  %v1259 = vadd.f32 %v1171, %v1231
  %v1260 = vadd.f32 %v1172, %v1232
  %v1261 = vadd.f32 %v1173, %v1233
  %v1262 = vld [vmem:[%s48 + $0x8] sm:$0xff]
  %v1263 = vld [vmem:[%s48 + $0x10] sm:$0x3f]
  %v1264 = vld [vmem:[%s48 + $0x20] sm:$0xff]
  %v1265 = vld [vmem:[%s48 + $0x28] sm:$0x3f]
  %v1266 = vld [vmem:[%s48 + $0x38] sm:$0xff]
  %v1267 = vld [vmem:[%s48 + $0x40] sm:$0x3f]
  %v1268 = vld [vmem:[%s48 + $0x50] sm:$0xff]
  %v1269 = vld [vmem:[%s48 + $0x58] sm:$0x3f]
  %v1270 = vld [vmem:[%s48 + $0x68] sm:$0xff]
  %v1271 = vld [vmem:[%s48 + $0x70] sm:$0x3f]
  %v1272 = vld [vmem:[%s48 + $0x80] sm:$0xff]
  %v1273 = vld [vmem:[%s48 + $0x88] sm:$0x3f]
  %v1274 = vld [vmem:[%s48 + $0x98] sm:$0xff]
  %v1275 = vld [vmem:[%s48 + $0xa0] sm:$0x3f]
  %v1276 = vld [vmem:[%s48 + $0xb0] sm:$0xff]
  %v1277 = vld [vmem:[%s48 + $0xb8] sm:$0x3f]
  %v1278 = vld [vmem:[%s48 + $0xc8] sm:$0xff]
  %v1279 = vld [vmem:[%s48 + $0xd0] sm:$0x3f]
  %v1280 = vld [vmem:[%s48 + $0xe0] sm:$0xff]
  %v1281 = vld [vmem:[%s48 + $0xe8] sm:$0x3f]
  %v1282 = vld [vmem:[%s48 + $0xf8] sm:$0xff]
  %v1283 = vld [vmem:[%s48 + $0x100] sm:$0x3f]
  %v1284 = vld [vmem:[%s48 + $0x110] sm:$0xff]
  %v1285 = vld [vmem:[%s48 + $0x118] sm:$0x3f]
  %v1286 = vld [vmem:[%s48 + $0x128] sm:$0xff]
  %v1287 = vld [vmem:[%s48 + $0x130] sm:$0x3f]
  %v1288 = vld [vmem:[%s48 + $0x140] sm:$0xff]
  %v1289 = vld [vmem:[%s48 + $0x148] sm:$0x3f]
  %v1290 = vlaneseq
  %v1291 = vshrl.u32 %v1290, 7
  %v1292 = vsub.s32 0, %v1291
  %v1293 = vrot.slane %v33, %v1292
  %v1294 = vmul.f32 %v1262, %v1293
  %v1295 = vmul.f32 %v1263, %v1293
  %v1296 = vmul.f32 %v1264, %v1293
  %v1297 = vmul.f32 %v1265, %v1293
  %v1298 = vmul.f32 %v1266, %v1293
  %v1299 = vmul.f32 %v1267, %v1293
  %v1300 = vmul.f32 %v1268, %v1293
  %v1301 = vmul.f32 %v1269, %v1293
  %v1302 = vmul.f32 %v1270, %v1293
  %v1303 = vmul.f32 %v1271, %v1293
  %v1304 = vmul.f32 %v1272, %v1293
  %v1305 = vmul.f32 %v1273, %v1293
  %v1306 = vmul.f32 %v1274, %v1293
  %v1307 = vmul.f32 %v1275, %v1293
  %v1308 = vmul.f32 %v1276, %v1293
  %v1309 = vmul.f32 %v1277, %v1293
  %v1310 = vmul.f32 %v1278, %v1293
  %v1311 = vmul.f32 %v1279, %v1293
  %v1312 = vmul.f32 %v1280, %v1293
  %v1313 = vmul.f32 %v1281, %v1293
  %v1314 = vmul.f32 %v1282, %v1293
  %v1315 = vmul.f32 %v1283, %v1293
  %v1316 = vmul.f32 %v1284, %v1293
  %v1317 = vmul.f32 %v1285, %v1293
  %v1318 = vmul.f32 %v1286, %v1293
  %v1319 = vmul.f32 %v1287, %v1293
  %v1320 = vmul.f32 %v1288, %v1293
  %v1321 = vmul.f32 %v1289, %v1293
  %v1322 = vadd.f32 %v1234, %v1294
  %v1323 = vadd.f32 %v1235, %v1295
  %v1324 = vadd.f32 %v1236, %v1296
  %v1325 = vadd.f32 %v1237, %v1297
  %v1326 = vadd.f32 %v1238, %v1298
  %v1327 = vadd.f32 %v1239, %v1299
  %v1328 = vadd.f32 %v1240, %v1300
  %v1329 = vadd.f32 %v1241, %v1301
  %v1330 = vadd.f32 %v1242, %v1302
  %v1331 = vadd.f32 %v1243, %v1303
  %v1332 = vadd.f32 %v1244, %v1304
  %v1333 = vadd.f32 %v1245, %v1305
  %v1334 = vadd.f32 %v1246, %v1306
  %v1335 = vadd.f32 %v1247, %v1307
  %v1336 = vadd.f32 %v1248, %v1308
  %v1337 = vadd.f32 %v1249, %v1309
  %v1338 = vadd.f32 %v1250, %v1310
  %v1339 = vadd.f32 %v1251, %v1311
  %v1340 = vadd.f32 %v1252, %v1312
  %v1341 = vadd.f32 %v1253, %v1313
  %v1342 = vadd.f32 %v1254, %v1314
  %v1343 = vadd.f32 %v1255, %v1315
  %v1344 = vadd.f32 %v1256, %v1316
  %v1345 = vadd.f32 %v1257, %v1317
  %v1346 = vadd.f32 %v1258, %v1318
  %v1347 = vadd.f32 %v1259, %v1319
  %v1348 = vadd.f32 %v1260, %v1320
  %v1349 = vadd.f32 %v1261, %v1321
  %v1350 = vld [vmem:[%s48 + $0x9] sm:$0xff]
  %v1351 = vld [vmem:[%s48 + $0x11] sm:$0x3f]
  %v1352 = vld [vmem:[%s48 + $0x21] sm:$0xff]
  %v1353 = vld [vmem:[%s48 + $0x29] sm:$0x3f]
  %v1354 = vld [vmem:[%s48 + $0x39] sm:$0xff]
  %v1355 = vld [vmem:[%s48 + $0x41] sm:$0x3f]
  %v1356 = vld [vmem:[%s48 + $0x51] sm:$0xff]
  %v1357 = vld [vmem:[%s48 + $0x59] sm:$0x3f]
  %v1358 = vld [vmem:[%s48 + $0x69] sm:$0xff]
  %v1359 = vld [vmem:[%s48 + $0x71] sm:$0x3f]
  %v1360 = vld [vmem:[%s48 + $0x81] sm:$0xff]
  %v1361 = vld [vmem:[%s48 + $0x89] sm:$0x3f]
  %v1362 = vld [vmem:[%s48 + $0x99] sm:$0xff]
  %v1363 = vld [vmem:[%s48 + $0xa1] sm:$0x3f]
  %v1364 = vld [vmem:[%s48 + $0xb1] sm:$0xff]
  %v1365 = vld [vmem:[%s48 + $0xb9] sm:$0x3f]
  %v1366 = vld [vmem:[%s48 + $0xc9] sm:$0xff]
  %v1367 = vld [vmem:[%s48 + $0xd1] sm:$0x3f]
  %v1368 = vld [vmem:[%s48 + $0xe1] sm:$0xff]
  %v1369 = vld [vmem:[%s48 + $0xe9] sm:$0x3f]
  %v1370 = vld [vmem:[%s48 + $0xf9] sm:$0xff]
  %v1371 = vld [vmem:[%s48 + $0x101] sm:$0x3f]
  %v1372 = vld [vmem:[%s48 + $0x111] sm:$0xff]
  %v1373 = vld [vmem:[%s48 + $0x119] sm:$0x3f]
  %v1374 = vld [vmem:[%s48 + $0x129] sm:$0xff]
  %v1375 = vld [vmem:[%s48 + $0x131] sm:$0x3f]
  %v1376 = vld [vmem:[%s48 + $0x141] sm:$0xff]
  %v1377 = vld [vmem:[%s48 + $0x149] sm:$0x3f]
  %v1378 = vlaneseq
  %v1379 = vshrl.u32 %v1378, 7
  %v1380 = vsub.s32 0, %v1379
  %v1381 = vrot.slane %v34, %v1380
  %v1382 = vmul.f32 %v1350, %v1381
  %v1383 = vmul.f32 %v1351, %v1381
  %v1384 = vmul.f32 %v1352, %v1381
  %v1385 = vmul.f32 %v1353, %v1381
  %v1386 = vmul.f32 %v1354, %v1381
  %v1387 = vmul.f32 %v1355, %v1381
  %v1388 = vmul.f32 %v1356, %v1381
  %v1389 = vmul.f32 %v1357, %v1381
  %v1390 = vmul.f32 %v1358, %v1381
  %v1391 = vmul.f32 %v1359, %v1381
  %v1392 = vmul.f32 %v1360, %v1381
  %v1393 = vmul.f32 %v1361, %v1381
  %v1394 = vmul.f32 %v1362, %v1381
  %v1395 = vmul.f32 %v1363, %v1381
  %v1396 = vmul.f32 %v1364, %v1381
  %v1397 = vmul.f32 %v1365, %v1381
  %v1398 = vmul.f32 %v1366, %v1381
  %v1399 = vmul.f32 %v1367, %v1381
  %v1400 = vmul.f32 %v1368, %v1381
  %v1401 = vmul.f32 %v1369, %v1381
  %v1402 = vmul.f32 %v1370, %v1381
  %v1403 = vmul.f32 %v1371, %v1381
  %v1404 = vmul.f32 %v1372, %v1381
  %v1405 = vmul.f32 %v1373, %v1381
  %v1406 = vmul.f32 %v1374, %v1381
  %v1407 = vmul.f32 %v1375, %v1381
  %v1408 = vmul.f32 %v1376, %v1381
  %v1409 = vmul.f32 %v1377, %v1381
  %v1410 = vadd.f32 %v1322, %v1382
  %v1411 = vadd.f32 %v1323, %v1383
  %v1412 = vadd.f32 %v1324, %v1384
  %v1413 = vadd.f32 %v1325, %v1385
  %v1414 = vadd.f32 %v1326, %v1386
  %v1415 = vadd.f32 %v1327, %v1387
  %v1416 = vadd.f32 %v1328, %v1388
  %v1417 = vadd.f32 %v1329, %v1389
  %v1418 = vadd.f32 %v1330, %v1390
  %v1419 = vadd.f32 %v1331, %v1391
  %v1420 = vadd.f32 %v1332, %v1392
  %v1421 = vadd.f32 %v1333, %v1393
  %v1422 = vadd.f32 %v1334, %v1394
  %v1423 = vadd.f32 %v1335, %v1395
  %v1424 = vadd.f32 %v1336, %v1396
  %v1425 = vadd.f32 %v1337, %v1397
  %v1426 = vadd.f32 %v1338, %v1398
  %v1427 = vadd.f32 %v1339, %v1399
  %v1428 = vadd.f32 %v1340, %v1400
  %v1429 = vadd.f32 %v1341, %v1401
  %v1430 = vadd.f32 %v1342, %v1402
  %v1431 = vadd.f32 %v1343, %v1403
  %v1432 = vadd.f32 %v1344, %v1404
  %v1433 = vadd.f32 %v1345, %v1405
  %v1434 = vadd.f32 %v1346, %v1406
  %v1435 = vadd.f32 %v1347, %v1407
  %v1436 = vadd.f32 %v1348, %v1408
  %v1437 = vadd.f32 %v1349, %v1409
  %s1438 = scalar_lea.vmem [#allocation2], 48
  %v1439 = vld [vmem:[%s1438 + $0x7] sm:$0xff]
  %v1440 = vld [vmem:[%s1438 + $0xf] sm:$0x3f]
  %v1441 = vld [vmem:[%s1438 + $0x1f] sm:$0xff]
  %v1442 = vld [vmem:[%s1438 + $0x27] sm:$0x3f]
  %v1443 = vld [vmem:[%s1438 + $0x37] sm:$0xff]
  %v1444 = vld [vmem:[%s1438 + $0x3f] sm:$0x3f]
  %v1445 = vld [vmem:[%s1438 + $0x4f] sm:$0xff]
  %v1446 = vld [vmem:[%s1438 + $0x57] sm:$0x3f]
  %v1447 = vld [vmem:[%s1438 + $0x67] sm:$0xff]
  %v1448 = vld [vmem:[%s1438 + $0x6f] sm:$0x3f]
  %v1449 = vld [vmem:[%s1438 + $0x7f] sm:$0xff]
  %v1450 = vld [vmem:[%s1438 + $0x87] sm:$0x3f]
  %v1451 = vld [vmem:[%s1438 + $0x97] sm:$0xff]
  %v1452 = vld [vmem:[%s1438 + $0x9f] sm:$0x3f]
  %v1453 = vld [vmem:[%s1438 + $0xaf] sm:$0xff]
  %v1454 = vld [vmem:[%s1438 + $0xb7] sm:$0x3f]
  %v1455 = vld [vmem:[%s1438 + $0xc7] sm:$0xff]
  %v1456 = vld [vmem:[%s1438 + $0xcf] sm:$0x3f]
  %v1457 = vld [vmem:[%s1438 + $0xdf] sm:$0xff]
  %v1458 = vld [vmem:[%s1438 + $0xe7] sm:$0x3f]
  %v1459 = vld [vmem:[%s1438 + $0xf7] sm:$0xff]
  %v1460 = vld [vmem:[%s1438 + $0xff] sm:$0x3f]
  %v1461 = vld [vmem:[%s1438 + $0x10f] sm:$0xff]
  %v1462 = vld [vmem:[%s1438 + $0x117] sm:$0x3f]
  %v1463 = vld [vmem:[%s1438 + $0x127] sm:$0xff]
  %v1464 = vld [vmem:[%s1438 + $0x12f] sm:$0x3f]
  %v1465 = vld [vmem:[%s1438 + $0x13f] sm:$0xff]
  %v1466 = vld [vmem:[%s1438 + $0x147] sm:$0x3f]
  %v1467 = vlaneseq
  %v1468 = vshrl.u32 %v1467, 7
  %v1469 = vsub.s32 0, %v1468
  %v1470 = vrot.slane %v35, %v1469
  %v1471 = vmul.f32 %v1439, %v1470
  %v1472 = vmul.f32 %v1440, %v1470
  %v1473 = vmul.f32 %v1441, %v1470
  %v1474 = vmul.f32 %v1442, %v1470
  %v1475 = vmul.f32 %v1443, %v1470
  %v1476 = vmul.f32 %v1444, %v1470
  %v1477 = vmul.f32 %v1445, %v1470
  %v1478 = vmul.f32 %v1446, %v1470
  %v1479 = vmul.f32 %v1447, %v1470
  %v1480 = vmul.f32 %v1448, %v1470
  %v1481 = vmul.f32 %v1449, %v1470
  %v1482 = vmul.f32 %v1450, %v1470
  %v1483 = vmul.f32 %v1451, %v1470
  %v1484 = vmul.f32 %v1452, %v1470
  %v1485 = vmul.f32 %v1453, %v1470
  %v1486 = vmul.f32 %v1454, %v1470
  %v1487 = vmul.f32 %v1455, %v1470
  %v1488 = vmul.f32 %v1456, %v1470
  %v1489 = vmul.f32 %v1457, %v1470
  %v1490 = vmul.f32 %v1458, %v1470
  %v1491 = vmul.f32 %v1459, %v1470
  %v1492 = vmul.f32 %v1460, %v1470
  %v1493 = vmul.f32 %v1461, %v1470
  %v1494 = vmul.f32 %v1462, %v1470
  %v1495 = vmul.f32 %v1463, %v1470
  %v1496 = vmul.f32 %v1464, %v1470
  %v1497 = vmul.f32 %v1465, %v1470
  %v1498 = vmul.f32 %v1466, %v1470
  %v1499 = vadd.f32 %v1410, %v1471
  %v1500 = vadd.f32 %v1411, %v1472
  %v1501 = vadd.f32 %v1412, %v1473
  %v1502 = vadd.f32 %v1413, %v1474
  %v1503 = vadd.f32 %v1414, %v1475
  %v1504 = vadd.f32 %v1415, %v1476
  %v1505 = vadd.f32 %v1416, %v1477
  %v1506 = vadd.f32 %v1417, %v1478
  %v1507 = vadd.f32 %v1418, %v1479
  %v1508 = vadd.f32 %v1419, %v1480
  %v1509 = vadd.f32 %v1420, %v1481
  %v1510 = vadd.f32 %v1421, %v1482
  %v1511 = vadd.f32 %v1422, %v1483
  %v1512 = vadd.f32 %v1423, %v1484
  %v1513 = vadd.f32 %v1424, %v1485
  %v1514 = vadd.f32 %v1425, %v1486
  %v1515 = vadd.f32 %v1426, %v1487
  %v1516 = vadd.f32 %v1427, %v1488
  %v1517 = vadd.f32 %v1428, %v1489
  %v1518 = vadd.f32 %v1429, %v1490
  %v1519 = vadd.f32 %v1430, %v1491
  %v1520 = vadd.f32 %v1431, %v1492
  %v1521 = vadd.f32 %v1432, %v1493
  %v1522 = vadd.f32 %v1433, %v1494
  %v1523 = vadd.f32 %v1434, %v1495
  %v1524 = vadd.f32 %v1435, %v1496
  %v1525 = vadd.f32 %v1436, %v1497
  %v1526 = vadd.f32 %v1437, %v1498
  %v1527 = vld [vmem:[%s1438 + $0x8] sm:$0xff]
  %v1528 = vld [vmem:[%s1438 + $0x10] sm:$0x3f]
  %v1529 = vld [vmem:[%s1438 + $0x20] sm:$0xff]
  %v1530 = vld [vmem:[%s1438 + $0x28] sm:$0x3f]
  %v1531 = vld [vmem:[%s1438 + $0x38] sm:$0xff]
  %v1532 = vld [vmem:[%s1438 + $0x40] sm:$0x3f]
  %v1533 = vld [vmem:[%s1438 + $0x50] sm:$0xff]
  %v1534 = vld [vmem:[%s1438 + $0x58] sm:$0x3f]
  %v1535 = vld [vmem:[%s1438 + $0x68] sm:$0xff]
  %v1536 = vld [vmem:[%s1438 + $0x70] sm:$0x3f]
  %v1537 = vld [vmem:[%s1438 + $0x80] sm:$0xff]
  %v1538 = vld [vmem:[%s1438 + $0x88] sm:$0x3f]
  %v1539 = vld [vmem:[%s1438 + $0x98] sm:$0xff]
  %v1540 = vld [vmem:[%s1438 + $0xa0] sm:$0x3f]
  %v1541 = vld [vmem:[%s1438 + $0xb0] sm:$0xff]
  %v1542 = vld [vmem:[%s1438 + $0xb8] sm:$0x3f]
  %v1543 = vld [vmem:[%s1438 + $0xc8] sm:$0xff]
  %v1544 = vld [vmem:[%s1438 + $0xd0] sm:$0x3f]
  %v1545 = vld [vmem:[%s1438 + $0xe0] sm:$0xff]
  %v1546 = vld [vmem:[%s1438 + $0xe8] sm:$0x3f]
  %v1547 = vld [vmem:[%s1438 + $0xf8] sm:$0xff]
  %v1548 = vld [vmem:[%s1438 + $0x100] sm:$0x3f]
  %v1549 = vld [vmem:[%s1438 + $0x110] sm:$0xff]
  %v1550 = vld [vmem:[%s1438 + $0x118] sm:$0x3f]
  %v1551 = vld [vmem:[%s1438 + $0x128] sm:$0xff]
  %v1552 = vld [vmem:[%s1438 + $0x130] sm:$0x3f]
  %v1553 = vld [vmem:[%s1438 + $0x140] sm:$0xff]
  %v1554 = vld [vmem:[%s1438 + $0x148] sm:$0x3f]
  %v1555 = vlaneseq
  %v1556 = vshrl.u32 %v1555, 7
  %v1557 = vsub.s32 0, %v1556
  %v1558 = vrot.slane %v36, %v1557
  %v1559 = vmul.f32 %v1527, %v1558
  %v1560 = vmul.f32 %v1528, %v1558
  %v1561 = vmul.f32 %v1529, %v1558
  %v1562 = vmul.f32 %v1530, %v1558
  %v1563 = vmul.f32 %v1531, %v1558
  %v1564 = vmul.f32 %v1532, %v1558
  %v1565 = vmul.f32 %v1533, %v1558
  %v1566 = vmul.f32 %v1534, %v1558
  %v1567 = vmul.f32 %v1535, %v1558
  %v1568 = vmul.f32 %v1536, %v1558
  %v1569 = vmul.f32 %v1537, %v1558
  %v1570 = vmul.f32 %v1538, %v1558
  %v1571 = vmul.f32 %v1539, %v1558
  %v1572 = vmul.f32 %v1540, %v1558
  %v1573 = vmul.f32 %v1541, %v1558
  %v1574 = vmul.f32 %v1542, %v1558
  %v1575 = vmul.f32 %v1543, %v1558
  %v1576 = vmul.f32 %v1544, %v1558
  %v1577 = vmul.f32 %v1545, %v1558
  %v1578 = vmul.f32 %v1546, %v1558
  %v1579 = vmul.f32 %v1547, %v1558
  %v1580 = vmul.f32 %v1548, %v1558
  %v1581 = vmul.f32 %v1549, %v1558
  %v1582 = vmul.f32 %v1550, %v1558
  %v1583 = vmul.f32 %v1551, %v1558
  %v1584 = vmul.f32 %v1552, %v1558
  %v1585 = vmul.f32 %v1553, %v1558
  %v1586 = vmul.f32 %v1554, %v1558
  %v1587 = vadd.f32 %v1499, %v1559
  %v1588 = vadd.f32 %v1500, %v1560
  %v1589 = vadd.f32 %v1501, %v1561
  %v1590 = vadd.f32 %v1502, %v1562
  %v1591 = vadd.f32 %v1503, %v1563
  %v1592 = vadd.f32 %v1504, %v1564
  %v1593 = vadd.f32 %v1505, %v1565
  %v1594 = vadd.f32 %v1506, %v1566
  %v1595 = vadd.f32 %v1507, %v1567
  %v1596 = vadd.f32 %v1508, %v1568
  %v1597 = vadd.f32 %v1509, %v1569
  %v1598 = vadd.f32 %v1510, %v1570
  %v1599 = vadd.f32 %v1511, %v1571
  %v1600 = vadd.f32 %v1512, %v1572
  %v1601 = vadd.f32 %v1513, %v1573
  %v1602 = vadd.f32 %v1514, %v1574
  %v1603 = vadd.f32 %v1515, %v1575
  %v1604 = vadd.f32 %v1516, %v1576
  %v1605 = vadd.f32 %v1517, %v1577
  %v1606 = vadd.f32 %v1518, %v1578
  %v1607 = vadd.f32 %v1519, %v1579
  %v1608 = vadd.f32 %v1520, %v1580
  %v1609 = vadd.f32 %v1521, %v1581
  %v1610 = vadd.f32 %v1522, %v1582
  %v1611 = vadd.f32 %v1523, %v1583
  %v1612 = vadd.f32 %v1524, %v1584
  %v1613 = vadd.f32 %v1525, %v1585
  %v1614 = vadd.f32 %v1526, %v1586
  %v1615 = vld [vmem:[%s1438 + $0x9] sm:$0xff]
  %v1616 = vld [vmem:[%s1438 + $0x11] sm:$0x3f]
  %v1617 = vld [vmem:[%s1438 + $0x21] sm:$0xff]
  %v1618 = vld [vmem:[%s1438 + $0x29] sm:$0x3f]
  %v1619 = vld [vmem:[%s1438 + $0x39] sm:$0xff]
  %v1620 = vld [vmem:[%s1438 + $0x41] sm:$0x3f]
  %v1621 = vld [vmem:[%s1438 + $0x51] sm:$0xff]
  %v1622 = vld [vmem:[%s1438 + $0x59] sm:$0x3f]
  %v1623 = vld [vmem:[%s1438 + $0x69] sm:$0xff]
  %v1624 = vld [vmem:[%s1438 + $0x71] sm:$0x3f]
  %v1625 = vld [vmem:[%s1438 + $0x81] sm:$0xff]
  %v1626 = vld [vmem:[%s1438 + $0x89] sm:$0x3f]
  %v1627 = vld [vmem:[%s1438 + $0x99] sm:$0xff]
  %v1628 = vld [vmem:[%s1438 + $0xa1] sm:$0x3f]
  %v1629 = vld [vmem:[%s1438 + $0xb1] sm:$0xff]
  %v1630 = vld [vmem:[%s1438 + $0xb9] sm:$0x3f]
  %v1631 = vld [vmem:[%s1438 + $0xc9] sm:$0xff]
  %v1632 = vld [vmem:[%s1438 + $0xd1] sm:$0x3f]
  %v1633 = vld [vmem:[%s1438 + $0xe1] sm:$0xff]
  %v1634 = vld [vmem:[%s1438 + $0xe9] sm:$0x3f]
  %v1635 = vld [vmem:[%s1438 + $0xf9] sm:$0xff]
  %v1636 = vld [vmem:[%s1438 + $0x101] sm:$0x3f]
  %v1637 = vld [vmem:[%s1438 + $0x111] sm:$0xff]
  %v1638 = vld [vmem:[%s1438 + $0x119] sm:$0x3f]
  %v1639 = vld [vmem:[%s1438 + $0x129] sm:$0xff]
  %v1640 = vld [vmem:[%s1438 + $0x131] sm:$0x3f]
  %v1641 = vld [vmem:[%s1438 + $0x141] sm:$0xff]
  %v1642 = vld [vmem:[%s1438 + $0x149] sm:$0x3f]
  %v1643 = vlaneseq
  %v1644 = vshrl.u32 %v1643, 7
  %v1645 = vsub.s32 0, %v1644
  %v1646 = vrot.slane %v37, %v1645
  %v1647 = vmul.f32 %v1615, %v1646
  %v1648 = vmul.f32 %v1616, %v1646
  %v1649 = vmul.f32 %v1617, %v1646
  %v1650 = vmul.f32 %v1618, %v1646
  %v1651 = vmul.f32 %v1619, %v1646
  %v1652 = vmul.f32 %v1620, %v1646
  %v1653 = vmul.f32 %v1621, %v1646
  %v1654 = vmul.f32 %v1622, %v1646
  %v1655 = vmul.f32 %v1623, %v1646
  %v1656 = vmul.f32 %v1624, %v1646
  %v1657 = vmul.f32 %v1625, %v1646
  %v1658 = vmul.f32 %v1626, %v1646
  %v1659 = vmul.f32 %v1627, %v1646
  %v1660 = vmul.f32 %v1628, %v1646
  %v1661 = vmul.f32 %v1629, %v1646
  %v1662 = vmul.f32 %v1630, %v1646
  %v1663 = vmul.f32 %v1631, %v1646
  %v1664 = vmul.f32 %v1632, %v1646
  %v1665 = vmul.f32 %v1633, %v1646
  %v1666 = vmul.f32 %v1634, %v1646
  %v1667 = vmul.f32 %v1635, %v1646
  %v1668 = vmul.f32 %v1636, %v1646
  %v1669 = vmul.f32 %v1637, %v1646
  %v1670 = vmul.f32 %v1638, %v1646
  %v1671 = vmul.f32 %v1639, %v1646
  %v1672 = vmul.f32 %v1640, %v1646
  %v1673 = vmul.f32 %v1641, %v1646
  %v1674 = vmul.f32 %v1642, %v1646
  %v1675 = vadd.f32 %v1587, %v1647
  %v1676 = vadd.f32 %v1588, %v1648
  %v1677 = vadd.f32 %v1589, %v1649
  %v1678 = vadd.f32 %v1590, %v1650
  %v1679 = vadd.f32 %v1591, %v1651
  %v1680 = vadd.f32 %v1592, %v1652
  %v1681 = vadd.f32 %v1593, %v1653
  %v1682 = vadd.f32 %v1594, %v1654
  %v1683 = vadd.f32 %v1595, %v1655
  %v1684 = vadd.f32 %v1596, %v1656
  %v1685 = vadd.f32 %v1597, %v1657
  %v1686 = vadd.f32 %v1598, %v1658
  %v1687 = vadd.f32 %v1599, %v1659
  %v1688 = vadd.f32 %v1600, %v1660
  %v1689 = vadd.f32 %v1601, %v1661
  %v1690 = vadd.f32 %v1602, %v1662
  %v1691 = vadd.f32 %v1603, %v1663
  %v1692 = vadd.f32 %v1604, %v1664
  %v1693 = vadd.f32 %v1605, %v1665
  %v1694 = vadd.f32 %v1606, %v1666
  %v1695 = vadd.f32 %v1607, %v1667
  %v1696 = vadd.f32 %v1608, %v1668
  %v1697 = vadd.f32 %v1609, %v1669
  %v1698 = vadd.f32 %v1610, %v1670
  %v1699 = vadd.f32 %v1611, %v1671
  %v1700 = vadd.f32 %v1612, %v1672
  %v1701 = vadd.f32 %v1613, %v1673
  %v1702 = vadd.f32 %v1614, %v1674
  %v1704 = vlaneseq
  %v1705 = vshrl.u32 %v1704, 7
  %v1706 = vsub.s32 0, %v1705
  %v1707 = vrot.slane %v39, %v1706
  %v1709 = vadd.f32 %v1675, %v1707
  %v1710 = vadd.f32 %v1676, %v1707
  %v1711 = vadd.f32 %v1677, %v1707
  %v1712 = vadd.f32 %v1678, %v1707
  %v1713 = vadd.f32 %v1679, %v1707
  %v1714 = vadd.f32 %v1680, %v1707
  %v1715 = vadd.f32 %v1681, %v1707
  %v1716 = vadd.f32 %v1682, %v1707
  %v1717 = vadd.f32 %v1683, %v1707
  %v1718 = vadd.f32 %v1684, %v1707
  %v1719 = vadd.f32 %v1685, %v1707
  %v1720 = vadd.f32 %v1686, %v1707
  %v1721 = vadd.f32 %v1687, %v1707
  %v1722 = vadd.f32 %v1688, %v1707
  %v1723 = vadd.f32 %v1689, %v1707
  %v1724 = vadd.f32 %v1690, %v1707
  %v1725 = vadd.f32 %v1691, %v1707
  %v1726 = vadd.f32 %v1692, %v1707
  %v1727 = vadd.f32 %v1693, %v1707
  %v1728 = vadd.f32 %v1694, %v1707
  %v1729 = vadd.f32 %v1695, %v1707
  %v1730 = vadd.f32 %v1696, %v1707
  %v1731 = vadd.f32 %v1697, %v1707
  %v1732 = vadd.f32 %v1698, %v1707
  %v1733 = vadd.f32 %v1699, %v1707
  %v1734 = vadd.f32 %v1700, %v1707
  %v1735 = vadd.f32 %v1701, %v1707
  %v1736 = vadd.f32 %v1702, %v1707
  %v1737 = vmax.f32 %v1709, 0.0
  %v1738 = vmax.f32 %v1710, 0.0
  %v1739 = vmax.f32 %v1711, 0.0
  %v1740 = vmax.f32 %v1712, 0.0
  %v1741 = vmax.f32 %v1713, 0.0
  %v1742 = vmax.f32 %v1714, 0.0
  %v1743 = vmax.f32 %v1715, 0.0
  %v1744 = vmax.f32 %v1716, 0.0
  %v1745 = vmax.f32 %v1717, 0.0
  %v1746 = vmax.f32 %v1718, 0.0
  %v1747 = vmax.f32 %v1719, 0.0
  %v1748 = vmax.f32 %v1720, 0.0
  %v1749 = vmax.f32 %v1721, 0.0
  %v1750 = vmax.f32 %v1722, 0.0
  %v1751 = vmax.f32 %v1723, 0.0
  %v1752 = vmax.f32 %v1724, 0.0
  %v1753 = vmax.f32 %v1725, 0.0
  %v1754 = vmax.f32 %v1726, 0.0
  %v1755 = vmax.f32 %v1727, 0.0
  %v1756 = vmax.f32 %v1728, 0.0
  %v1757 = vmax.f32 %v1729, 0.0
  %v1758 = vmax.f32 %v1730, 0.0
  %v1759 = vmax.f32 %v1731, 0.0
  %v1760 = vmax.f32 %v1732, 0.0
  %v1761 = vmax.f32 %v1733, 0.0
  %v1762 = vmax.f32 %v1734, 0.0
  %v1763 = vmax.f32 %v1735, 0.0
  %v1764 = vmax.f32 %v1736, 0.0
  %1765 = vst.msk [vmem:[%s5] sm:$0xff] %vm40, %v1737
  %1766 = vst.msk [vmem:[%s5 + $0x8] sm:$0x3f] %vm910, %v1738
  %1767 = vst.msk [vmem:[%s5 + $0x10] sm:$0xff] %vm40, %v1739
  %1768 = vst.msk [vmem:[%s5 + $0x18] sm:$0x3f] %vm910, %v1740
  %1769 = vst.msk [vmem:[%s5 + $0x20] sm:$0xff] %vm40, %v1741
  %1770 = vst.msk [vmem:[%s5 + $0x28] sm:$0x3f] %vm910, %v1742
  %1771 = vst.msk [vmem:[%s5 + $0x30] sm:$0xff] %vm40, %v1743
  %1772 = vst.msk [vmem:[%s5 + $0x38] sm:$0x3f] %vm910, %v1744
  %1773 = vst.msk [vmem:[%s5 + $0x40] sm:$0xff] %vm40, %v1745
  %1774 = vst.msk [vmem:[%s5 + $0x48] sm:$0x3f] %vm910, %v1746
  %1775 = vst.msk [vmem:[%s5 + $0x50] sm:$0xff] %vm40, %v1747
  %1776 = vst.msk [vmem:[%s5 + $0x58] sm:$0x3f] %vm910, %v1748
  %1777 = vst.msk [vmem:[%s5 + $0x60] sm:$0xff] %vm40, %v1749
  %1778 = vst.msk [vmem:[%s5 + $0x68] sm:$0x3f] %vm910, %v1750
  %1779 = vst.msk [vmem:[%s5 + $0x70] sm:$0xff] %vm40, %v1751
  %1780 = vst.msk [vmem:[%s5 + $0x78] sm:$0x3f] %vm910, %v1752
  %1781 = vst.msk [vmem:[%s5 + $0x80] sm:$0xff] %vm40, %v1753
  %1782 = vst.msk [vmem:[%s5 + $0x88] sm:$0x3f] %vm910, %v1754
  %1783 = vst.msk [vmem:[%s5 + $0x90] sm:$0xff] %vm40, %v1755
  %1784 = vst.msk [vmem:[%s5 + $0x98] sm:$0x3f] %vm910, %v1756
  %1785 = vst.msk [vmem:[%s5 + $0xa0] sm:$0xff] %vm40, %v1757
  %1786 = vst.msk [vmem:[%s5 + $0xa8] sm:$0x3f] %vm910, %v1758
  %1787 = vst.msk [vmem:[%s5 + $0xb0] sm:$0xff] %vm40, %v1759
  %1788 = vst.msk [vmem:[%s5 + $0xb8] sm:$0x3f] %vm910, %v1760
  %1789 = vst.msk [vmem:[%s5 + $0xc0] sm:$0xff] %vm40, %v1761
  %1790 = vst.msk [vmem:[%s5 + $0xc8] sm:$0x3f] %vm910, %v1762
  %1791 = vst.msk [vmem:[%s5 + $0xd0] sm:$0xff] %vm40, %v1763
  %1792 = vst.msk [vmem:[%s5 + $0xd8] sm:$0x3f] %vm910, %v1764
  %s1793 = scalar_lea.vmem %s0, 1680
  %v1794 = vld [vmem:[%s1793] sm:$0xff]
  %v1795 = vld [vmem:[%s1793 + $0x8] sm:$0x3f]
  %v1796 = vld [vmem:[%s1793 + $0x10] sm:$0xff]
  %v1797 = vld [vmem:[%s1793 + $0x18] sm:$0x3f]
  %v1798 = vld [vmem:[%s1793 + $0x20] sm:$0xff]
  %v1799 = vld [vmem:[%s1793 + $0x28] sm:$0x3f]
  %v1800 = vld [vmem:[%s1793 + $0x30] sm:$0xff]
  %v1801 = vld [vmem:[%s1793 + $0x38] sm:$0x3f]
  %v1802 = vld [vmem:[%s1793 + $0x40] sm:$0xff]
  %v1803 = vld [vmem:[%s1793 + $0x48] sm:$0x3f]
  %v1804 = vld [vmem:[%s1793 + $0x50] sm:$0xff]
  %v1805 = vld [vmem:[%s1793 + $0x58] sm:$0x3f]
  %v1806 = vld [vmem:[%s1793 + $0x60] sm:$0xff]
  %v1807 = vld [vmem:[%s1793 + $0x68] sm:$0x3f]
  %v1808 = vld [vmem:[%s1793 + $0x70] sm:$0xff]
  %v1809 = vld [vmem:[%s1793 + $0x78] sm:$0x3f]
  %v1810 = vld [vmem:[%s1793 + $0x80] sm:$0xff]
  %v1811 = vld [vmem:[%s1793 + $0x88] sm:$0x3f]
  %v1812 = vld [vmem:[%s1793 + $0x90] sm:$0xff]
  %v1813 = vld [vmem:[%s1793 + $0x98] sm:$0x3f]
  %v1814 = vld [vmem:[%s1793 + $0xa0] sm:$0xff]
  %v1815 = vld [vmem:[%s1793 + $0xa8] sm:$0x3f]
  %v1816 = vld [vmem:[%s1793 + $0xb0] sm:$0xff]
  %v1817 = vld [vmem:[%s1793 + $0xb8] sm:$0x3f]
  %v1818 = vld [vmem:[%s1793 + $0xc0] sm:$0xff]
  %v1819 = vld [vmem:[%s1793 + $0xc8] sm:$0x3f]
  %v1820 = vld [vmem:[%s1793 + $0xd0] sm:$0xff]
  %v1821 = vld [vmem:[%s1793 + $0xd8] sm:$0x3f]
  %v1822 = vmul.f32 %v1794, %v109
  %v1823 = vmul.f32 %v1795, %v109
  %v1824 = vmul.f32 %v1796, %v109
  %v1825 = vmul.f32 %v1797, %v109
  %v1826 = vmul.f32 %v1798, %v109
  %v1827 = vmul.f32 %v1799, %v109
  %v1828 = vmul.f32 %v1800, %v109
  %v1829 = vmul.f32 %v1801, %v109
  %v1830 = vmul.f32 %v1802, %v109
  %v1831 = vmul.f32 %v1803, %v109
  %v1832 = vmul.f32 %v1804, %v109
  %v1833 = vmul.f32 %v1805, %v109
  %v1834 = vmul.f32 %v1806, %v109
  %v1835 = vmul.f32 %v1807, %v109
  %v1836 = vmul.f32 %v1808, %v109
  %v1837 = vmul.f32 %v1809, %v109
  %v1838 = vmul.f32 %v1810, %v109
  %v1839 = vmul.f32 %v1811, %v109
  %v1840 = vmul.f32 %v1812, %v109
  %v1841 = vmul.f32 %v1813, %v109
  %v1842 = vmul.f32 %v1814, %v109
  %v1843 = vmul.f32 %v1815, %v109
  %v1844 = vmul.f32 %v1816, %v109
  %v1845 = vmul.f32 %v1817, %v109
  %v1846 = vmul.f32 %v1818, %v109
  %v1847 = vmul.f32 %v1819, %v109
  %v1848 = vmul.f32 %v1820, %v109
  %v1849 = vmul.f32 %v1821, %v109
  %s1850 = scalar_lea.vmem %s0, 1440
  %v1851 = vld [vmem:[%s1850] sm:$0xff]
  %v1852 = vld [vmem:[%s1850 + $0x8] sm:$0x3f]
  %v1853 = vld [vmem:[%s1850 + $0x10] sm:$0xff]
  %v1854 = vld [vmem:[%s1850 + $0x18] sm:$0x3f]
  %v1855 = vld [vmem:[%s1850 + $0x20] sm:$0xff]
  %v1856 = vld [vmem:[%s1850 + $0x28] sm:$0x3f]
  %v1857 = vld [vmem:[%s1850 + $0x30] sm:$0xff]
  %v1858 = vld [vmem:[%s1850 + $0x38] sm:$0x3f]
  %v1859 = vld [vmem:[%s1850 + $0x40] sm:$0xff]
  %v1860 = vld [vmem:[%s1850 + $0x48] sm:$0x3f]
  %v1861 = vld [vmem:[%s1850 + $0x50] sm:$0xff]
  %v1862 = vld [vmem:[%s1850 + $0x58] sm:$0x3f]
  %v1863 = vld [vmem:[%s1850 + $0x60] sm:$0xff]
  %v1864 = vld [vmem:[%s1850 + $0x68] sm:$0x3f]
  %v1865 = vld [vmem:[%s1850 + $0x70] sm:$0xff]
  %v1866 = vld [vmem:[%s1850 + $0x78] sm:$0x3f]
  %v1867 = vld [vmem:[%s1850 + $0x80] sm:$0xff]
  %v1868 = vld [vmem:[%s1850 + $0x88] sm:$0x3f]
  %v1869 = vld [vmem:[%s1850 + $0x90] sm:$0xff]
  %v1870 = vld [vmem:[%s1850 + $0x98] sm:$0x3f]
  %v1871 = vld [vmem:[%s1850 + $0xa0] sm:$0xff]
  %v1872 = vld [vmem:[%s1850 + $0xa8] sm:$0x3f]
  %v1873 = vld [vmem:[%s1850 + $0xb0] sm:$0xff]
  %v1874 = vld [vmem:[%s1850 + $0xb8] sm:$0x3f]
  %v1875 = vld [vmem:[%s1850 + $0xc0] sm:$0xff]
  %v1876 = vld [vmem:[%s1850 + $0xc8] sm:$0x3f]
  %v1877 = vld [vmem:[%s1850 + $0xd0] sm:$0xff]
  %v1878 = vld [vmem:[%s1850 + $0xd8] sm:$0x3f]
  %v1879 = vmul.f32 %v1851, %v170
  %v1880 = vmul.f32 %v1852, %v170
  %v1881 = vmul.f32 %v1853, %v170
  %v1882 = vmul.f32 %v1854, %v170
  %v1883 = vmul.f32 %v1855, %v170
  %v1884 = vmul.f32 %v1856, %v170
  %v1885 = vmul.f32 %v1857, %v170
  %v1886 = vmul.f32 %v1858, %v170
  %v1887 = vmul.f32 %v1859, %v170
  %v1888 = vmul.f32 %v1860, %v170
  %v1889 = vmul.f32 %v1861, %v170
  %v1890 = vmul.f32 %v1862, %v170
  %v1891 = vmul.f32 %v1863, %v170
  %v1892 = vmul.f32 %v1864, %v170
  %v1893 = vmul.f32 %v1865, %v170
  %v1894 = vmul.f32 %v1866, %v170
  %v1895 = vmul.f32 %v1867, %v170
  %v1896 = vmul.f32 %v1868, %v170
  %v1897 = vmul.f32 %v1869, %v170
  %v1898 = vmul.f32 %v1870, %v170
  %v1899 = vmul.f32 %v1871, %v170
  %v1900 = vmul.f32 %v1872, %v170
  %v1901 = vmul.f32 %v1873, %v170
  %v1902 = vmul.f32 %v1874, %v170
  %v1903 = vmul.f32 %v1875, %v170
  %v1904 = vmul.f32 %v1876, %v170
  %v1905 = vmul.f32 %v1877, %v170
  %v1906 = vmul.f32 %v1878, %v170
  %v1907 = vadd.f32 %v1822, %v1879
  %v1908 = vadd.f32 %v1823, %v1880
  %v1909 = vadd.f32 %v1824, %v1881
  %v1910 = vadd.f32 %v1825, %v1882
  %v1911 = vadd.f32 %v1826, %v1883
  %v1912 = vadd.f32 %v1827, %v1884
  %v1913 = vadd.f32 %v1828, %v1885
  %v1914 = vadd.f32 %v1829, %v1886
  %v1915 = vadd.f32 %v1830, %v1887
  %v1916 = vadd.f32 %v1831, %v1888
  %v1917 = vadd.f32 %v1832, %v1889
  %v1918 = vadd.f32 %v1833, %v1890
  %v1919 = vadd.f32 %v1834, %v1891
  %v1920 = vadd.f32 %v1835, %v1892
  %v1921 = vadd.f32 %v1836, %v1893
  %v1922 = vadd.f32 %v1837, %v1894
  %v1923 = vadd.f32 %v1838, %v1895
  %v1924 = vadd.f32 %v1839, %v1896
  %v1925 = vadd.f32 %v1840, %v1897
  %v1926 = vadd.f32 %v1841, %v1898
  %v1927 = vadd.f32 %v1842, %v1899
  %v1928 = vadd.f32 %v1843, %v1900
  %v1929 = vadd.f32 %v1844, %v1901
  %v1930 = vadd.f32 %v1845, %v1902
  %v1931 = vadd.f32 %v1846, %v1903
  %v1932 = vadd.f32 %v1847, %v1904
  %v1933 = vadd.f32 %v1848, %v1905
  %v1934 = vadd.f32 %v1849, %v1906
  %v1935 = vld [vmem:[%s1793 + $0x1] sm:$0xff]
  %v1936 = vld [vmem:[%s1793 + $0x9] sm:$0x3f]
  %v1937 = vld [vmem:[%s1793 + $0x11] sm:$0xff]
  %v1938 = vld [vmem:[%s1793 + $0x19] sm:$0x3f]
  %v1939 = vld [vmem:[%s1793 + $0x21] sm:$0xff]
  %v1940 = vld [vmem:[%s1793 + $0x29] sm:$0x3f]
  %v1941 = vld [vmem:[%s1793 + $0x31] sm:$0xff]
  %v1942 = vld [vmem:[%s1793 + $0x39] sm:$0x3f]
  %v1943 = vld [vmem:[%s1793 + $0x41] sm:$0xff]
  %v1944 = vld [vmem:[%s1793 + $0x49] sm:$0x3f]
  %v1945 = vld [vmem:[%s1793 + $0x51] sm:$0xff]
  %v1946 = vld [vmem:[%s1793 + $0x59] sm:$0x3f]
  %v1947 = vld [vmem:[%s1793 + $0x61] sm:$0xff]
  %v1948 = vld [vmem:[%s1793 + $0x69] sm:$0x3f]
  %v1949 = vld [vmem:[%s1793 + $0x71] sm:$0xff]
  %v1950 = vld [vmem:[%s1793 + $0x79] sm:$0x3f]
  %v1951 = vld [vmem:[%s1793 + $0x81] sm:$0xff]
  %v1952 = vld [vmem:[%s1793 + $0x89] sm:$0x3f]
  %v1953 = vld [vmem:[%s1793 + $0x91] sm:$0xff]
  %v1954 = vld [vmem:[%s1793 + $0x99] sm:$0x3f]
  %v1955 = vld [vmem:[%s1793 + $0xa1] sm:$0xff]
  %v1956 = vld [vmem:[%s1793 + $0xa9] sm:$0x3f]
  %v1957 = vld [vmem:[%s1793 + $0xb1] sm:$0xff]
  %v1958 = vld [vmem:[%s1793 + $0xb9] sm:$0x3f]
  %v1959 = vld [vmem:[%s1793 + $0xc1] sm:$0xff]
  %v1960 = vld [vmem:[%s1793 + $0xc9] sm:$0x3f]
  %v1961 = vld [vmem:[%s1793 + $0xd1] sm:$0xff]
  %v1962 = vld [vmem:[%s1793 + $0xd9] sm:$0x3f]
  %v1963 = vmul.f32 %v1935, %v258
  %v1964 = vmul.f32 %v1936, %v258
  %v1965 = vmul.f32 %v1937, %v258
  %v1966 = vmul.f32 %v1938, %v258
  %v1967 = vmul.f32 %v1939, %v258
  %v1968 = vmul.f32 %v1940, %v258
  %v1969 = vmul.f32 %v1941, %v258
  %v1970 = vmul.f32 %v1942, %v258
  %v1971 = vmul.f32 %v1943, %v258
  %v1972 = vmul.f32 %v1944, %v258
  %v1973 = vmul.f32 %v1945, %v258
  %v1974 = vmul.f32 %v1946, %v258
  %v1975 = vmul.f32 %v1947, %v258
  %v1976 = vmul.f32 %v1948, %v258
  %v1977 = vmul.f32 %v1949, %v258
  %v1978 = vmul.f32 %v1950, %v258
  %v1979 = vmul.f32 %v1951, %v258
  %v1980 = vmul.f32 %v1952, %v258
  %v1981 = vmul.f32 %v1953, %v258
  %v1982 = vmul.f32 %v1954, %v258
  %v1983 = vmul.f32 %v1955, %v258
  %v1984 = vmul.f32 %v1956, %v258
  %v1985 = vmul.f32 %v1957, %v258
  %v1986 = vmul.f32 %v1958, %v258
  %v1987 = vmul.f32 %v1959, %v258
  %v1988 = vmul.f32 %v1960, %v258
  %v1989 = vmul.f32 %v1961, %v258
  %v1990 = vmul.f32 %v1962, %v258
  %v1991 = vadd.f32 %v1907, %v1963
  %v1992 = vadd.f32 %v1908, %v1964
  %v1993 = vadd.f32 %v1909, %v1965
  %v1994 = vadd.f32 %v1910, %v1966
  %v1995 = vadd.f32 %v1911, %v1967
  %v1996 = vadd.f32 %v1912, %v1968
  %v1997 = vadd.f32 %v1913, %v1969
  %v1998 = vadd.f32 %v1914, %v1970
  %v1999 = vadd.f32 %v1915, %v1971
  %v2000 = vadd.f32 %v1916, %v1972
  %v2001 = vadd.f32 %v1917, %v1973
  %v2002 = vadd.f32 %v1918, %v1974
  %v2003 = vadd.f32 %v1919, %v1975
  %v2004 = vadd.f32 %v1920, %v1976
  %v2005 = vadd.f32 %v1921, %v1977
  %v2006 = vadd.f32 %v1922, %v1978
  %v2007 = vadd.f32 %v1923, %v1979
  %v2008 = vadd.f32 %v1924, %v1980
  %v2009 = vadd.f32 %v1925, %v1981
  %v2010 = vadd.f32 %v1926, %v1982
  %v2011 = vadd.f32 %v1927, %v1983
  %v2012 = vadd.f32 %v1928, %v1984
  %v2013 = vadd.f32 %v1929, %v1985
  %v2014 = vadd.f32 %v1930, %v1986
  %v2015 = vadd.f32 %v1931, %v1987
  %v2016 = vadd.f32 %v1932, %v1988
  %v2017 = vadd.f32 %v1933, %v1989
  %v2018 = vadd.f32 %v1934, %v1990
  %s2019 = scalar_lea.vmem %s0, 1216
  %v2020 = vld [vmem:[%s2019] sm:$0xff]
  %v2021 = vld [vmem:[%s2019 + $0x8] sm:$0x3f]
  %v2022 = vld [vmem:[%s2019 + $0x10] sm:$0xff]
  %v2023 = vld [vmem:[%s2019 + $0x18] sm:$0x3f]
  %v2024 = vld [vmem:[%s2019 + $0x20] sm:$0xff]
  %v2025 = vld [vmem:[%s2019 + $0x28] sm:$0x3f]
  %v2026 = vld [vmem:[%s2019 + $0x30] sm:$0xff]
  %v2027 = vld [vmem:[%s2019 + $0x38] sm:$0x3f]
  %v2028 = vld [vmem:[%s2019 + $0x40] sm:$0xff]
  %v2029 = vld [vmem:[%s2019 + $0x48] sm:$0x3f]
  %v2030 = vld [vmem:[%s2019 + $0x50] sm:$0xff]
  %v2031 = vld [vmem:[%s2019 + $0x58] sm:$0x3f]
  %v2032 = vld [vmem:[%s2019 + $0x60] sm:$0xff]
  %v2033 = vld [vmem:[%s2019 + $0x68] sm:$0x3f]
  %v2034 = vld [vmem:[%s2019 + $0x70] sm:$0xff]
  %v2035 = vld [vmem:[%s2019 + $0x78] sm:$0x3f]
  %v2036 = vld [vmem:[%s2019 + $0x80] sm:$0xff]
  %v2037 = vld [vmem:[%s2019 + $0x88] sm:$0x3f]
  %v2038 = vld [vmem:[%s2019 + $0x90] sm:$0xff]
  %v2039 = vld [vmem:[%s2019 + $0x98] sm:$0x3f]
  %v2040 = vld [vmem:[%s2019 + $0xa0] sm:$0xff]
  %v2041 = vld [vmem:[%s2019 + $0xa8] sm:$0x3f]
  %v2042 = vld [vmem:[%s2019 + $0xb0] sm:$0xff]
  %v2043 = vld [vmem:[%s2019 + $0xb8] sm:$0x3f]
  %v2044 = vld [vmem:[%s2019 + $0xc0] sm:$0xff]
  %v2045 = vld [vmem:[%s2019 + $0xc8] sm:$0x3f]
  %v2046 = vld [vmem:[%s2019 + $0xd0] sm:$0xff]
  %v2047 = vld [vmem:[%s2019 + $0xd8] sm:$0x3f]
  %v2048 = vmul.f32 %v2020, %v347
  %v2049 = vmul.f32 %v2021, %v347
  %v2050 = vmul.f32 %v2022, %v347
  %v2051 = vmul.f32 %v2023, %v347
  %v2052 = vmul.f32 %v2024, %v347
  %v2053 = vmul.f32 %v2025, %v347
  %v2054 = vmul.f32 %v2026, %v347
  %v2055 = vmul.f32 %v2027, %v347
  %v2056 = vmul.f32 %v2028, %v347
  %v2057 = vmul.f32 %v2029, %v347
  %v2058 = vmul.f32 %v2030, %v347
  %v2059 = vmul.f32 %v2031, %v347
  %v2060 = vmul.f32 %v2032, %v347
  %v2061 = vmul.f32 %v2033, %v347
  %v2062 = vmul.f32 %v2034, %v347
  %v2063 = vmul.f32 %v2035, %v347
  %v2064 = vmul.f32 %v2036, %v347
  %v2065 = vmul.f32 %v2037, %v347
  %v2066 = vmul.f32 %v2038, %v347
  %v2067 = vmul.f32 %v2039, %v347
  %v2068 = vmul.f32 %v2040, %v347
  %v2069 = vmul.f32 %v2041, %v347
  %v2070 = vmul.f32 %v2042, %v347
  %v2071 = vmul.f32 %v2043, %v347
  %v2072 = vmul.f32 %v2044, %v347
  %v2073 = vmul.f32 %v2045, %v347
  %v2074 = vmul.f32 %v2046, %v347
  %v2075 = vmul.f32 %v2047, %v347
  %v2076 = vadd.f32 %v1991, %v2048
  %v2077 = vadd.f32 %v1992, %v2049
  %v2078 = vadd.f32 %v1993, %v2050
  %v2079 = vadd.f32 %v1994, %v2051
  %v2080 = vadd.f32 %v1995, %v2052
  %v2081 = vadd.f32 %v1996, %v2053
  %v2082 = vadd.f32 %v1997, %v2054
  %v2083 = vadd.f32 %v1998, %v2055
  %v2084 = vadd.f32 %v1999, %v2056
  %v2085 = vadd.f32 %v2000, %v2057
  %v2086 = vadd.f32 %v2001, %v2058
  %v2087 = vadd.f32 %v2002, %v2059
  %v2088 = vadd.f32 %v2003, %v2060
  %v2089 = vadd.f32 %v2004, %v2061
  %v2090 = vadd.f32 %v2005, %v2062
  %v2091 = vadd.f32 %v2006, %v2063
  %v2092 = vadd.f32 %v2007, %v2064
  %v2093 = vadd.f32 %v2008, %v2065
  %v2094 = vadd.f32 %v2009, %v2066
  %v2095 = vadd.f32 %v2010, %v2067
  %v2096 = vadd.f32 %v2011, %v2068
  %v2097 = vadd.f32 %v2012, %v2069
  %v2098 = vadd.f32 %v2013, %v2070
  %v2099 = vadd.f32 %v2014, %v2071
  %v2100 = vadd.f32 %v2015, %v2072
  %v2101 = vadd.f32 %v2016, %v2073
  %v2102 = vadd.f32 %v2017, %v2074
  %v2103 = vadd.f32 %v2018, %v2075
  %s2104 = scalar_lea.vmem %s0, 976
  %v2105 = vld [vmem:[%s2104] sm:$0xff]
  %v2106 = vld [vmem:[%s2104 + $0x8] sm:$0x3f]
  %v2107 = vld [vmem:[%s2104 + $0x10] sm:$0xff]
  %v2108 = vld [vmem:[%s2104 + $0x18] sm:$0x3f]
  %v2109 = vld [vmem:[%s2104 + $0x20] sm:$0xff]
  %v2110 = vld [vmem:[%s2104 + $0x28] sm:$0x3f]
  %v2111 = vld [vmem:[%s2104 + $0x30] sm:$0xff]
  %v2112 = vld [vmem:[%s2104 + $0x38] sm:$0x3f]
  %v2113 = vld [vmem:[%s2104 + $0x40] sm:$0xff]
  %v2114 = vld [vmem:[%s2104 + $0x48] sm:$0x3f]
  %v2115 = vld [vmem:[%s2104 + $0x50] sm:$0xff]
  %v2116 = vld [vmem:[%s2104 + $0x58] sm:$0x3f]
  %v2117 = vld [vmem:[%s2104 + $0x60] sm:$0xff]
  %v2118 = vld [vmem:[%s2104 + $0x68] sm:$0x3f]
  %v2119 = vld [vmem:[%s2104 + $0x70] sm:$0xff]
  %v2120 = vld [vmem:[%s2104 + $0x78] sm:$0x3f]
  %v2121 = vld [vmem:[%s2104 + $0x80] sm:$0xff]
  %v2122 = vld [vmem:[%s2104 + $0x88] sm:$0x3f]
  %v2123 = vld [vmem:[%s2104 + $0x90] sm:$0xff]
  %v2124 = vld [vmem:[%s2104 + $0x98] sm:$0x3f]
  %v2125 = vld [vmem:[%s2104 + $0xa0] sm:$0xff]
  %v2126 = vld [vmem:[%s2104 + $0xa8] sm:$0x3f]
  %v2127 = vld [vmem:[%s2104 + $0xb0] sm:$0xff]
  %v2128 = vld [vmem:[%s2104 + $0xb8] sm:$0x3f]
  %v2129 = vld [vmem:[%s2104 + $0xc0] sm:$0xff]
  %v2130 = vld [vmem:[%s2104 + $0xc8] sm:$0x3f]
  %v2131 = vld [vmem:[%s2104 + $0xd0] sm:$0xff]
  %v2132 = vld [vmem:[%s2104 + $0xd8] sm:$0x3f]
  %v2133 = vmul.f32 %v2105, %v436
  %v2134 = vmul.f32 %v2106, %v436
  %v2135 = vmul.f32 %v2107, %v436
  %v2136 = vmul.f32 %v2108, %v436
  %v2137 = vmul.f32 %v2109, %v436
  %v2138 = vmul.f32 %v2110, %v436
  %v2139 = vmul.f32 %v2111, %v436
  %v2140 = vmul.f32 %v2112, %v436
  %v2141 = vmul.f32 %v2113, %v436
  %v2142 = vmul.f32 %v2114, %v436
  %v2143 = vmul.f32 %v2115, %v436
  %v2144 = vmul.f32 %v2116, %v436
  %v2145 = vmul.f32 %v2117, %v436
  %v2146 = vmul.f32 %v2118, %v436
  %v2147 = vmul.f32 %v2119, %v436
  %v2148 = vmul.f32 %v2120, %v436
  %v2149 = vmul.f32 %v2121, %v436
  %v2150 = vmul.f32 %v2122, %v436
  %v2151 = vmul.f32 %v2123, %v436
  %v2152 = vmul.f32 %v2124, %v436
  %v2153 = vmul.f32 %v2125, %v436
  %v2154 = vmul.f32 %v2126, %v436
  %v2155 = vmul.f32 %v2127, %v436
  %v2156 = vmul.f32 %v2128, %v436
  %v2157 = vmul.f32 %v2129, %v436
  %v2158 = vmul.f32 %v2130, %v436
  %v2159 = vmul.f32 %v2131, %v436
  %v2160 = vmul.f32 %v2132, %v436
  %v2161 = vadd.f32 %v2076, %v2133
  %v2162 = vadd.f32 %v2077, %v2134
  %v2163 = vadd.f32 %v2078, %v2135
  %v2164 = vadd.f32 %v2079, %v2136
  %v2165 = vadd.f32 %v2080, %v2137
  %v2166 = vadd.f32 %v2081, %v2138
  %v2167 = vadd.f32 %v2082, %v2139
  %v2168 = vadd.f32 %v2083, %v2140
  %v2169 = vadd.f32 %v2084, %v2141
  %v2170 = vadd.f32 %v2085, %v2142
  %v2171 = vadd.f32 %v2086, %v2143
  %v2172 = vadd.f32 %v2087, %v2144
  %v2173 = vadd.f32 %v2088, %v2145
  %v2174 = vadd.f32 %v2089, %v2146
  %v2175 = vadd.f32 %v2090, %v2147
  %v2176 = vadd.f32 %v2091, %v2148
  %v2177 = vadd.f32 %v2092, %v2149
  %v2178 = vadd.f32 %v2093, %v2150
  %v2179 = vadd.f32 %v2094, %v2151
  %v2180 = vadd.f32 %v2095, %v2152
  %v2181 = vadd.f32 %v2096, %v2153
  %v2182 = vadd.f32 %v2097, %v2154
  %v2183 = vadd.f32 %v2098, %v2155
  %v2184 = vadd.f32 %v2099, %v2156
  %v2185 = vadd.f32 %v2100, %v2157
  %v2186 = vadd.f32 %v2101, %v2158
  %v2187 = vadd.f32 %v2102, %v2159
  %v2188 = vadd.f32 %v2103, %v2160
  %v2189 = vld [vmem:[%s2019 + $0x1] sm:$0xff]
  %v2190 = vld [vmem:[%s2019 + $0x9] sm:$0x3f]
  %v2191 = vld [vmem:[%s2019 + $0x11] sm:$0xff]
  %v2192 = vld [vmem:[%s2019 + $0x19] sm:$0x3f]
  %v2193 = vld [vmem:[%s2019 + $0x21] sm:$0xff]
  %v2194 = vld [vmem:[%s2019 + $0x29] sm:$0x3f]
  %v2195 = vld [vmem:[%s2019 + $0x31] sm:$0xff]
  %v2196 = vld [vmem:[%s2019 + $0x39] sm:$0x3f]
  %v2197 = vld [vmem:[%s2019 + $0x41] sm:$0xff]
  %v2198 = vld [vmem:[%s2019 + $0x49] sm:$0x3f]
  %v2199 = vld [vmem:[%s2019 + $0x51] sm:$0xff]
  %v2200 = vld [vmem:[%s2019 + $0x59] sm:$0x3f]
  %v2201 = vld [vmem:[%s2019 + $0x61] sm:$0xff]
  %v2202 = vld [vmem:[%s2019 + $0x69] sm:$0x3f]
  %v2203 = vld [vmem:[%s2019 + $0x71] sm:$0xff]
  %v2204 = vld [vmem:[%s2019 + $0x79] sm:$0x3f]
  %v2205 = vld [vmem:[%s2019 + $0x81] sm:$0xff]
  %v2206 = vld [vmem:[%s2019 + $0x89] sm:$0x3f]
  %v2207 = vld [vmem:[%s2019 + $0x91] sm:$0xff]
  %v2208 = vld [vmem:[%s2019 + $0x99] sm:$0x3f]
  %v2209 = vld [vmem:[%s2019 + $0xa1] sm:$0xff]
  %v2210 = vld [vmem:[%s2019 + $0xa9] sm:$0x3f]
  %v2211 = vld [vmem:[%s2019 + $0xb1] sm:$0xff]
  %v2212 = vld [vmem:[%s2019 + $0xb9] sm:$0x3f]
  %v2213 = vld [vmem:[%s2019 + $0xc1] sm:$0xff]
  %v2214 = vld [vmem:[%s2019 + $0xc9] sm:$0x3f]
  %v2215 = vld [vmem:[%s2019 + $0xd1] sm:$0xff]
  %v2216 = vld [vmem:[%s2019 + $0xd9] sm:$0x3f]
  %v2217 = vmul.f32 %v2189, %v524
  %v2218 = vmul.f32 %v2190, %v524
  %v2219 = vmul.f32 %v2191, %v524
  %v2220 = vmul.f32 %v2192, %v524
  %v2221 = vmul.f32 %v2193, %v524
  %v2222 = vmul.f32 %v2194, %v524
  %v2223 = vmul.f32 %v2195, %v524
  %v2224 = vmul.f32 %v2196, %v524
  %v2225 = vmul.f32 %v2197, %v524
  %v2226 = vmul.f32 %v2198, %v524
  %v2227 = vmul.f32 %v2199, %v524
  %v2228 = vmul.f32 %v2200, %v524
  %v2229 = vmul.f32 %v2201, %v524
  %v2230 = vmul.f32 %v2202, %v524
  %v2231 = vmul.f32 %v2203, %v524
  %v2232 = vmul.f32 %v2204, %v524
  %v2233 = vmul.f32 %v2205, %v524
  %v2234 = vmul.f32 %v2206, %v524
  %v2235 = vmul.f32 %v2207, %v524
  %v2236 = vmul.f32 %v2208, %v524
  %v2237 = vmul.f32 %v2209, %v524
  %v2238 = vmul.f32 %v2210, %v524
  %v2239 = vmul.f32 %v2211, %v524
  %v2240 = vmul.f32 %v2212, %v524
  %v2241 = vmul.f32 %v2213, %v524
  %v2242 = vmul.f32 %v2214, %v524
  %v2243 = vmul.f32 %v2215, %v524
  %v2244 = vmul.f32 %v2216, %v524
  %v2245 = vadd.f32 %v2161, %v2217
  %v2246 = vadd.f32 %v2162, %v2218
  %v2247 = vadd.f32 %v2163, %v2219
  %v2248 = vadd.f32 %v2164, %v2220
  %v2249 = vadd.f32 %v2165, %v2221
  %v2250 = vadd.f32 %v2166, %v2222
  %v2251 = vadd.f32 %v2167, %v2223
  %v2252 = vadd.f32 %v2168, %v2224
  %v2253 = vadd.f32 %v2169, %v2225
  %v2254 = vadd.f32 %v2170, %v2226
  %v2255 = vadd.f32 %v2171, %v2227
  %v2256 = vadd.f32 %v2172, %v2228
  %v2257 = vadd.f32 %v2173, %v2229
  %v2258 = vadd.f32 %v2174, %v2230
  %v2259 = vadd.f32 %v2175, %v2231
  %v2260 = vadd.f32 %v2176, %v2232
  %v2261 = vadd.f32 %v2177, %v2233
  %v2262 = vadd.f32 %v2178, %v2234
  %v2263 = vadd.f32 %v2179, %v2235
  %v2264 = vadd.f32 %v2180, %v2236
  %v2265 = vadd.f32 %v2181, %v2237
  %v2266 = vadd.f32 %v2182, %v2238
  %v2267 = vadd.f32 %v2183, %v2239
  %v2268 = vadd.f32 %v2184, %v2240
  %v2269 = vadd.f32 %v2185, %v2241
  %v2270 = vadd.f32 %v2186, %v2242
  %v2271 = vadd.f32 %v2187, %v2243
  %v2272 = vadd.f32 %v2188, %v2244
  %s2273 = scalar_lea.vmem %s0, 1696
  %v2274 = vld [vmem:[%s2273] sm:$0xff]
  %v2275 = vld [vmem:[%s2273 + $0x8] sm:$0x3f]
  %v2276 = vld [vmem:[%s2273 + $0x10] sm:$0xff]
  %v2277 = vld [vmem:[%s2273 + $0x18] sm:$0x3f]
  %v2278 = vld [vmem:[%s2273 + $0x20] sm:$0xff]
  %v2279 = vld [vmem:[%s2273 + $0x28] sm:$0x3f]
  %v2280 = vld [vmem:[%s2273 + $0x30] sm:$0xff]
  %v2281 = vld [vmem:[%s2273 + $0x38] sm:$0x3f]
  %v2282 = vld [vmem:[%s2273 + $0x40] sm:$0xff]
  %v2283 = vld [vmem:[%s2273 + $0x48] sm:$0x3f]
  %v2284 = vld [vmem:[%s2273 + $0x50] sm:$0xff]
  %v2285 = vld [vmem:[%s2273 + $0x58] sm:$0x3f]
  %v2286 = vld [vmem:[%s2273 + $0x60] sm:$0xff]
  %v2287 = vld [vmem:[%s2273 + $0x68] sm:$0x3f]
  %v2288 = vld [vmem:[%s2273 + $0x70] sm:$0xff]
  %v2289 = vld [vmem:[%s2273 + $0x78] sm:$0x3f]
  %v2290 = vld [vmem:[%s2273 + $0x80] sm:$0xff]
  %v2291 = vld [vmem:[%s2273 + $0x88] sm:$0x3f]
  %v2292 = vld [vmem:[%s2273 + $0x90] sm:$0xff]
  %v2293 = vld [vmem:[%s2273 + $0x98] sm:$0x3f]
  %v2294 = vld [vmem:[%s2273 + $0xa0] sm:$0xff]
  %v2295 = vld [vmem:[%s2273 + $0xa8] sm:$0x3f]
  %v2296 = vld [vmem:[%s2273 + $0xb0] sm:$0xff]
  %v2297 = vld [vmem:[%s2273 + $0xb8] sm:$0x3f]
  %v2298 = vld [vmem:[%s2273 + $0xc0] sm:$0xff]
  %v2299 = vld [vmem:[%s2273 + $0xc8] sm:$0x3f]
  %v2300 = vld [vmem:[%s2273 + $0xd0] sm:$0xff]
  %v2301 = vld [vmem:[%s2273 + $0xd8] sm:$0x3f]
  %v2302 = vmul.f32 %v2274, %v613
  %v2303 = vmul.f32 %v2275, %v613
  %v2304 = vmul.f32 %v2276, %v613
  %v2305 = vmul.f32 %v2277, %v613
  %v2306 = vmul.f32 %v2278, %v613
  %v2307 = vmul.f32 %v2279, %v613
  %v2308 = vmul.f32 %v2280, %v613
  %v2309 = vmul.f32 %v2281, %v613
  %v2310 = vmul.f32 %v2282, %v613
  %v2311 = vmul.f32 %v2283, %v613
  %v2312 = vmul.f32 %v2284, %v613
  %v2313 = vmul.f32 %v2285, %v613
  %v2314 = vmul.f32 %v2286, %v613
  %v2315 = vmul.f32 %v2287, %v613
  %v2316 = vmul.f32 %v2288, %v613
  %v2317 = vmul.f32 %v2289, %v613
  %v2318 = vmul.f32 %v2290, %v613
  %v2319 = vmul.f32 %v2291, %v613
  %v2320 = vmul.f32 %v2292, %v613
  %v2321 = vmul.f32 %v2293, %v613
  %v2322 = vmul.f32 %v2294, %v613
  %v2323 = vmul.f32 %v2295, %v613
  %v2324 = vmul.f32 %v2296, %v613
  %v2325 = vmul.f32 %v2297, %v613
  %v2326 = vmul.f32 %v2298, %v613
  %v2327 = vmul.f32 %v2299, %v613
  %v2328 = vmul.f32 %v2300, %v613
  %v2329 = vmul.f32 %v2301, %v613
  %v2330 = vadd.f32 %v2245, %v2302
  %v2331 = vadd.f32 %v2246, %v2303
  %v2332 = vadd.f32 %v2247, %v2304
  %v2333 = vadd.f32 %v2248, %v2305
  %v2334 = vadd.f32 %v2249, %v2306
  %v2335 = vadd.f32 %v2250, %v2307
  %v2336 = vadd.f32 %v2251, %v2308
  %v2337 = vadd.f32 %v2252, %v2309
  %v2338 = vadd.f32 %v2253, %v2310
  %v2339 = vadd.f32 %v2254, %v2311
  %v2340 = vadd.f32 %v2255, %v2312
  %v2341 = vadd.f32 %v2256, %v2313
  %v2342 = vadd.f32 %v2257, %v2314
  %v2343 = vadd.f32 %v2258, %v2315
  %v2344 = vadd.f32 %v2259, %v2316
  %v2345 = vadd.f32 %v2260, %v2317
  %v2346 = vadd.f32 %v2261, %v2318
  %v2347 = vadd.f32 %v2262, %v2319
  %v2348 = vadd.f32 %v2263, %v2320
  %v2349 = vadd.f32 %v2264, %v2321
  %v2350 = vadd.f32 %v2265, %v2322
  %v2351 = vadd.f32 %v2266, %v2323
  %v2352 = vadd.f32 %v2267, %v2324
  %v2353 = vadd.f32 %v2268, %v2325
  %v2354 = vadd.f32 %v2269, %v2326
  %v2355 = vadd.f32 %v2270, %v2327
  %v2356 = vadd.f32 %v2271, %v2328
  %v2357 = vadd.f32 %v2272, %v2329
  %s2358 = scalar_lea.vmem %s0, 1456
  %v2359 = vld [vmem:[%s2358] sm:$0xff]
  %v2360 = vld [vmem:[%s2358 + $0x8] sm:$0x3f]
  %v2361 = vld [vmem:[%s2358 + $0x10] sm:$0xff]
  %v2362 = vld [vmem:[%s2358 + $0x18] sm:$0x3f]
  %v2363 = vld [vmem:[%s2358 + $0x20] sm:$0xff]
  %v2364 = vld [vmem:[%s2358 + $0x28] sm:$0x3f]
  %v2365 = vld [vmem:[%s2358 + $0x30] sm:$0xff]
  %v2366 = vld [vmem:[%s2358 + $0x38] sm:$0x3f]
  %v2367 = vld [vmem:[%s2358 + $0x40] sm:$0xff]
  %v2368 = vld [vmem:[%s2358 + $0x48] sm:$0x3f]
  %v2369 = vld [vmem:[%s2358 + $0x50] sm:$0xff]
  %v2370 = vld [vmem:[%s2358 + $0x58] sm:$0x3f]
  %v2371 = vld [vmem:[%s2358 + $0x60] sm:$0xff]
  %v2372 = vld [vmem:[%s2358 + $0x68] sm:$0x3f]
  %v2373 = vld [vmem:[%s2358 + $0x70] sm:$0xff]
  %v2374 = vld [vmem:[%s2358 + $0x78] sm:$0x3f]
  %v2375 = vld [vmem:[%s2358 + $0x80] sm:$0xff]
  %v2376 = vld [vmem:[%s2358 + $0x88] sm:$0x3f]
  %v2377 = vld [vmem:[%s2358 + $0x90] sm:$0xff]
  %v2378 = vld [vmem:[%s2358 + $0x98] sm:$0x3f]
  %v2379 = vld [vmem:[%s2358 + $0xa0] sm:$0xff]
  %v2380 = vld [vmem:[%s2358 + $0xa8] sm:$0x3f]
  %v2381 = vld [vmem:[%s2358 + $0xb0] sm:$0xff]
  %v2382 = vld [vmem:[%s2358 + $0xb8] sm:$0x3f]
  %v2383 = vld [vmem:[%s2358 + $0xc0] sm:$0xff]
  %v2384 = vld [vmem:[%s2358 + $0xc8] sm:$0x3f]
  %v2385 = vld [vmem:[%s2358 + $0xd0] sm:$0xff]
  %v2386 = vld [vmem:[%s2358 + $0xd8] sm:$0x3f]
  %v2387 = vmul.f32 %v2359, %v702
  %v2388 = vmul.f32 %v2360, %v702
  %v2389 = vmul.f32 %v2361, %v702
  %v2390 = vmul.f32 %v2362, %v702
  %v2391 = vmul.f32 %v2363, %v702
  %v2392 = vmul.f32 %v2364, %v702
  %v2393 = vmul.f32 %v2365, %v702
  %v2394 = vmul.f32 %v2366, %v702
  %v2395 = vmul.f32 %v2367, %v702
  %v2396 = vmul.f32 %v2368, %v702
  %v2397 = vmul.f32 %v2369, %v702
  %v2398 = vmul.f32 %v2370, %v702
  %v2399 = vmul.f32 %v2371, %v702
  %v2400 = vmul.f32 %v2372, %v702
  %v2401 = vmul.f32 %v2373, %v702
  %v2402 = vmul.f32 %v2374, %v702
  %v2403 = vmul.f32 %v2375, %v702
  %v2404 = vmul.f32 %v2376, %v702
  %v2405 = vmul.f32 %v2377, %v702
  %v2406 = vmul.f32 %v2378, %v702
  %v2407 = vmul.f32 %v2379, %v702
  %v2408 = vmul.f32 %v2380, %v702
  %v2409 = vmul.f32 %v2381, %v702
  %v2410 = vmul.f32 %v2382, %v702
  %v2411 = vmul.f32 %v2383, %v702
  %v2412 = vmul.f32 %v2384, %v702
  %v2413 = vmul.f32 %v2385, %v702
  %v2414 = vmul.f32 %v2386, %v702
  %v2415 = vadd.f32 %v2330, %v2387
  %v2416 = vadd.f32 %v2331, %v2388
  %v2417 = vadd.f32 %v2332, %v2389
  %v2418 = vadd.f32 %v2333, %v2390
  %v2419 = vadd.f32 %v2334, %v2391
  %v2420 = vadd.f32 %v2335, %v2392
  %v2421 = vadd.f32 %v2336, %v2393
  %v2422 = vadd.f32 %v2337, %v2394
  %v2423 = vadd.f32 %v2338, %v2395
  %v2424 = vadd.f32 %v2339, %v2396
  %v2425 = vadd.f32 %v2340, %v2397
  %v2426 = vadd.f32 %v2341, %v2398
  %v2427 = vadd.f32 %v2342, %v2399
  %v2428 = vadd.f32 %v2343, %v2400
  %v2429 = vadd.f32 %v2344, %v2401
  %v2430 = vadd.f32 %v2345, %v2402
  %v2431 = vadd.f32 %v2346, %v2403
  %v2432 = vadd.f32 %v2347, %v2404
  %v2433 = vadd.f32 %v2348, %v2405
  %v2434 = vadd.f32 %v2349, %v2406
  %v2435 = vadd.f32 %v2350, %v2407
  %v2436 = vadd.f32 %v2351, %v2408
  %v2437 = vadd.f32 %v2352, %v2409
  %v2438 = vadd.f32 %v2353, %v2410
  %v2439 = vadd.f32 %v2354, %v2411
  %v2440 = vadd.f32 %v2355, %v2412
  %v2441 = vadd.f32 %v2356, %v2413
  %v2442 = vadd.f32 %v2357, %v2414
  %v2443 = vld [vmem:[%s2273 + $0x1] sm:$0xff]
  %v2444 = vld [vmem:[%s2273 + $0x9] sm:$0x3f]
  %v2445 = vld [vmem:[%s2273 + $0x11] sm:$0xff]
  %v2446 = vld [vmem:[%s2273 + $0x19] sm:$0x3f]
  %v2447 = vld [vmem:[%s2273 + $0x21] sm:$0xff]
  %v2448 = vld [vmem:[%s2273 + $0x29] sm:$0x3f]
  %v2449 = vld [vmem:[%s2273 + $0x31] sm:$0xff]
  %v2450 = vld [vmem:[%s2273 + $0x39] sm:$0x3f]
  %v2451 = vld [vmem:[%s2273 + $0x41] sm:$0xff]
  %v2452 = vld [vmem:[%s2273 + $0x49] sm:$0x3f]
  %v2453 = vld [vmem:[%s2273 + $0x51] sm:$0xff]
  %v2454 = vld [vmem:[%s2273 + $0x59] sm:$0x3f]
  %v2455 = vld [vmem:[%s2273 + $0x61] sm:$0xff]
  %v2456 = vld [vmem:[%s2273 + $0x69] sm:$0x3f]
  %v2457 = vld [vmem:[%s2273 + $0x71] sm:$0xff]
  %v2458 = vld [vmem:[%s2273 + $0x79] sm:$0x3f]
  %v2459 = vld [vmem:[%s2273 + $0x81] sm:$0xff]
  %v2460 = vld [vmem:[%s2273 + $0x89] sm:$0x3f]
  %v2461 = vld [vmem:[%s2273 + $0x91] sm:$0xff]
  %v2462 = vld [vmem:[%s2273 + $0x99] sm:$0x3f]
  %v2463 = vld [vmem:[%s2273 + $0xa1] sm:$0xff]
  %v2464 = vld [vmem:[%s2273 + $0xa9] sm:$0x3f]
  %v2465 = vld [vmem:[%s2273 + $0xb1] sm:$0xff]
  %v2466 = vld [vmem:[%s2273 + $0xb9] sm:$0x3f]
  %v2467 = vld [vmem:[%s2273 + $0xc1] sm:$0xff]
  %v2468 = vld [vmem:[%s2273 + $0xc9] sm:$0x3f]
  %v2469 = vld [vmem:[%s2273 + $0xd1] sm:$0xff]
  %v2470 = vld [vmem:[%s2273 + $0xd9] sm:$0x3f]
  %v2471 = vmul.f32 %v2443, %v790
  %v2472 = vmul.f32 %v2444, %v790
  %v2473 = vmul.f32 %v2445, %v790
  %v2474 = vmul.f32 %v2446, %v790
  %v2475 = vmul.f32 %v2447, %v790
  %v2476 = vmul.f32 %v2448, %v790
  %v2477 = vmul.f32 %v2449, %v790
  %v2478 = vmul.f32 %v2450, %v790
  %v2479 = vmul.f32 %v2451, %v790
  %v2480 = vmul.f32 %v2452, %v790
  %v2481 = vmul.f32 %v2453, %v790
  %v2482 = vmul.f32 %v2454, %v790
  %v2483 = vmul.f32 %v2455, %v790
  %v2484 = vmul.f32 %v2456, %v790
  %v2485 = vmul.f32 %v2457, %v790
  %v2486 = vmul.f32 %v2458, %v790
  %v2487 = vmul.f32 %v2459, %v790
  %v2488 = vmul.f32 %v2460, %v790
  %v2489 = vmul.f32 %v2461, %v790
  %v2490 = vmul.f32 %v2462, %v790
  %v2491 = vmul.f32 %v2463, %v790
  %v2492 = vmul.f32 %v2464, %v790
  %v2493 = vmul.f32 %v2465, %v790
  %v2494 = vmul.f32 %v2466, %v790
  %v2495 = vmul.f32 %v2467, %v790
  %v2496 = vmul.f32 %v2468, %v790
  %v2497 = vmul.f32 %v2469, %v790
  %v2498 = vmul.f32 %v2470, %v790
  %v2499 = vadd.f32 %v2415, %v2471
  %v2500 = vadd.f32 %v2416, %v2472
  %v2501 = vadd.f32 %v2417, %v2473
  %v2502 = vadd.f32 %v2418, %v2474
  %v2503 = vadd.f32 %v2419, %v2475
  %v2504 = vadd.f32 %v2420, %v2476
  %v2505 = vadd.f32 %v2421, %v2477
  %v2506 = vadd.f32 %v2422, %v2478
  %v2507 = vadd.f32 %v2423, %v2479
  %v2508 = vadd.f32 %v2424, %v2480
  %v2509 = vadd.f32 %v2425, %v2481
  %v2510 = vadd.f32 %v2426, %v2482
  %v2511 = vadd.f32 %v2427, %v2483
  %v2512 = vadd.f32 %v2428, %v2484
  %v2513 = vadd.f32 %v2429, %v2485
  %v2514 = vadd.f32 %v2430, %v2486
  %v2515 = vadd.f32 %v2431, %v2487
  %v2516 = vadd.f32 %v2432, %v2488
  %v2517 = vadd.f32 %v2433, %v2489
  %v2518 = vadd.f32 %v2434, %v2490
  %v2519 = vadd.f32 %v2435, %v2491
  %v2520 = vadd.f32 %v2436, %v2492
  %v2521 = vadd.f32 %v2437, %v2493
  %v2522 = vadd.f32 %v2438, %v2494
  %v2523 = vadd.f32 %v2439, %v2495
  %v2524 = vadd.f32 %v2440, %v2496
  %v2525 = vadd.f32 %v2441, %v2497
  %v2526 = vadd.f32 %v2442, %v2498
  %v2527 = vadd.f32 %v2499, %v851
  %v2528 = vadd.f32 %v2500, %v851
  %v2529 = vadd.f32 %v2501, %v851
  %v2530 = vadd.f32 %v2502, %v851
  %v2531 = vadd.f32 %v2503, %v851
  %v2532 = vadd.f32 %v2504, %v851
  %v2533 = vadd.f32 %v2505, %v851
  %v2534 = vadd.f32 %v2506, %v851
  %v2535 = vadd.f32 %v2507, %v851
  %v2536 = vadd.f32 %v2508, %v851
  %v2537 = vadd.f32 %v2509, %v851
  %v2538 = vadd.f32 %v2510, %v851
  %v2539 = vadd.f32 %v2511, %v851
  %v2540 = vadd.f32 %v2512, %v851
  %v2541 = vadd.f32 %v2513, %v851
  %v2542 = vadd.f32 %v2514, %v851
  %v2543 = vadd.f32 %v2515, %v851
  %v2544 = vadd.f32 %v2516, %v851
  %v2545 = vadd.f32 %v2517, %v851
  %v2546 = vadd.f32 %v2518, %v851
  %v2547 = vadd.f32 %v2519, %v851
  %v2548 = vadd.f32 %v2520, %v851
  %v2549 = vadd.f32 %v2521, %v851
  %v2550 = vadd.f32 %v2522, %v851
  %v2551 = vadd.f32 %v2523, %v851
  %v2552 = vadd.f32 %v2524, %v851
  %v2553 = vadd.f32 %v2525, %v851
  %v2554 = vadd.f32 %v2526, %v851
  %v2555 = vmax.f32 %v2527, 0.0
  %v2556 = vmax.f32 %v2528, 0.0
  %v2557 = vmax.f32 %v2529, 0.0
  %v2558 = vmax.f32 %v2530, 0.0
  %v2559 = vmax.f32 %v2531, 0.0
  %v2560 = vmax.f32 %v2532, 0.0
  %v2561 = vmax.f32 %v2533, 0.0
  %v2562 = vmax.f32 %v2534, 0.0
  %v2563 = vmax.f32 %v2535, 0.0
  %v2564 = vmax.f32 %v2536, 0.0
  %v2565 = vmax.f32 %v2537, 0.0
  %v2566 = vmax.f32 %v2538, 0.0
  %v2567 = vmax.f32 %v2539, 0.0
  %v2568 = vmax.f32 %v2540, 0.0
  %v2569 = vmax.f32 %v2541, 0.0
  %v2570 = vmax.f32 %v2542, 0.0
  %v2571 = vmax.f32 %v2543, 0.0
  %v2572 = vmax.f32 %v2544, 0.0
  %v2573 = vmax.f32 %v2545, 0.0
  %v2574 = vmax.f32 %v2546, 0.0
  %v2575 = vmax.f32 %v2547, 0.0
  %v2576 = vmax.f32 %v2548, 0.0
  %v2577 = vmax.f32 %v2549, 0.0
  %v2578 = vmax.f32 %v2550, 0.0
  %v2579 = vmax.f32 %v2551, 0.0
  %v2580 = vmax.f32 %v2552, 0.0
  %v2581 = vmax.f32 %v2553, 0.0
  %v2582 = vmax.f32 %v2554, 0.0
  %2583 = vst.msk [vmem:[%s48 + $0x8] sm:$0xff] %vm40, %v2555
  %2584 = vst.msk [vmem:[%s48 + $0x10] sm:$0x3f] %vm910, %v2556
  %2585 = vst.msk [vmem:[%s48 + $0x20] sm:$0xff] %vm40, %v2557
  %2586 = vst.msk [vmem:[%s48 + $0x28] sm:$0x3f] %vm910, %v2558
  %2587 = vst.msk [vmem:[%s48 + $0x38] sm:$0xff] %vm40, %v2559
  %2588 = vst.msk [vmem:[%s48 + $0x40] sm:$0x3f] %vm910, %v2560
  %2589 = vst.msk [vmem:[%s48 + $0x50] sm:$0xff] %vm40, %v2561
  %2590 = vst.msk [vmem:[%s48 + $0x58] sm:$0x3f] %vm910, %v2562
  %2591 = vst.msk [vmem:[%s48 + $0x68] sm:$0xff] %vm40, %v2563
  %2592 = vst.msk [vmem:[%s48 + $0x70] sm:$0x3f] %vm910, %v2564
  %2593 = vst.msk [vmem:[%s48 + $0x80] sm:$0xff] %vm40, %v2565
  %2594 = vst.msk [vmem:[%s48 + $0x88] sm:$0x3f] %vm910, %v2566
  %2595 = vst.msk [vmem:[%s48 + $0x98] sm:$0xff] %vm40, %v2567
  %2596 = vst.msk [vmem:[%s48 + $0xa0] sm:$0x3f] %vm910, %v2568
  %2597 = vst.msk [vmem:[%s48 + $0xb0] sm:$0xff] %vm40, %v2569
  %2598 = vst.msk [vmem:[%s48 + $0xb8] sm:$0x3f] %vm910, %v2570
  %2599 = vst.msk [vmem:[%s48 + $0xc8] sm:$0xff] %vm40, %v2571
  %2600 = vst.msk [vmem:[%s48 + $0xd0] sm:$0x3f] %vm910, %v2572
  %2601 = vst.msk [vmem:[%s48 + $0xe0] sm:$0xff] %vm40, %v2573
  %2602 = vst.msk [vmem:[%s48 + $0xe8] sm:$0x3f] %vm910, %v2574
  %2603 = vst.msk [vmem:[%s48 + $0xf8] sm:$0xff] %vm40, %v2575
  %2604 = vst.msk [vmem:[%s48 + $0x100] sm:$0x3f] %vm910, %v2576
  %2605 = vst.msk [vmem:[%s48 + $0x110] sm:$0xff] %vm40, %v2577
  %2606 = vst.msk [vmem:[%s48 + $0x118] sm:$0x3f] %vm910, %v2578
  %2607 = vst.msk [vmem:[%s48 + $0x128] sm:$0xff] %vm40, %v2579
  %2608 = vst.msk [vmem:[%s48 + $0x130] sm:$0x3f] %vm910, %v2580
  %2609 = vst.msk [vmem:[%s48 + $0x140] sm:$0xff] %vm40, %v2581
  %2610 = vst.msk [vmem:[%s48 + $0x148] sm:$0x3f] %vm910, %v2582
  %v2611 = vld [vmem:[#allocation2 + $0x7] sm:$0xff]
  %v2612 = vld [vmem:[#allocation2 + $0xf] sm:$0x3f]
  %v2613 = vld [vmem:[#allocation2 + $0x1f] sm:$0xff]
  %v2614 = vld [vmem:[#allocation2 + $0x27] sm:$0x3f]
  %v2615 = vld [vmem:[#allocation2 + $0x37] sm:$0xff]
  %v2616 = vld [vmem:[#allocation2 + $0x3f] sm:$0x3f]
  %v2617 = vld [vmem:[#allocation2 + $0x4f] sm:$0xff]
  %v2618 = vld [vmem:[#allocation2 + $0x57] sm:$0x3f]
  %v2619 = vld [vmem:[#allocation2 + $0x67] sm:$0xff]
  %v2620 = vld [vmem:[#allocation2 + $0x6f] sm:$0x3f]
  %v2621 = vld [vmem:[#allocation2 + $0x7f] sm:$0xff]
  %v2622 = vld [vmem:[#allocation2 + $0x87] sm:$0x3f]
  %v2623 = vld [vmem:[#allocation2 + $0x97] sm:$0xff]
  %v2624 = vld [vmem:[#allocation2 + $0x9f] sm:$0x3f]
  %v2625 = vld [vmem:[#allocation2 + $0xaf] sm:$0xff]
  %v2626 = vld [vmem:[#allocation2 + $0xb7] sm:$0x3f]
  %v2627 = vld [vmem:[#allocation2 + $0xc7] sm:$0xff]
  %v2628 = vld [vmem:[#allocation2 + $0xcf] sm:$0x3f]
  %v2629 = vld [vmem:[#allocation2 + $0xdf] sm:$0xff]
  %v2630 = vld [vmem:[#allocation2 + $0xe7] sm:$0x3f]
  %v2631 = vld [vmem:[#allocation2 + $0xf7] sm:$0xff]
  %v2632 = vld [vmem:[#allocation2 + $0xff] sm:$0x3f]
  %v2633 = vld [vmem:[#allocation2 + $0x10f] sm:$0xff]
  %v2634 = vld [vmem:[#allocation2 + $0x117] sm:$0x3f]
  %v2635 = vld [vmem:[#allocation2 + $0x127] sm:$0xff]
  %v2636 = vld [vmem:[#allocation2 + $0x12f] sm:$0x3f]
  %v2637 = vld [vmem:[#allocation2 + $0x13f] sm:$0xff]
  %v2638 = vld [vmem:[#allocation2 + $0x147] sm:$0x3f]
  %v2639 = vmul.f32 %v2611, %v969
  %v2640 = vmul.f32 %v2612, %v969
  %v2641 = vmul.f32 %v2613, %v969
  %v2642 = vmul.f32 %v2614, %v969
  %v2643 = vmul.f32 %v2615, %v969
  %v2644 = vmul.f32 %v2616, %v969
  %v2645 = vmul.f32 %v2617, %v969
  %v2646 = vmul.f32 %v2618, %v969
  %v2647 = vmul.f32 %v2619, %v969
  %v2648 = vmul.f32 %v2620, %v969
  %v2649 = vmul.f32 %v2621, %v969
  %v2650 = vmul.f32 %v2622, %v969
  %v2651 = vmul.f32 %v2623, %v969
  %v2652 = vmul.f32 %v2624, %v969
  %v2653 = vmul.f32 %v2625, %v969
  %v2654 = vmul.f32 %v2626, %v969
  %v2655 = vmul.f32 %v2627, %v969
  %v2656 = vmul.f32 %v2628, %v969
  %v2657 = vmul.f32 %v2629, %v969
  %v2658 = vmul.f32 %v2630, %v969
  %v2659 = vmul.f32 %v2631, %v969
  %v2660 = vmul.f32 %v2632, %v969
  %v2661 = vmul.f32 %v2633, %v969
  %v2662 = vmul.f32 %v2634, %v969
  %v2663 = vmul.f32 %v2635, %v969
  %v2664 = vmul.f32 %v2636, %v969
  %v2665 = vmul.f32 %v2637, %v969
  %v2666 = vmul.f32 %v2638, %v969
  %v2667 = vld [vmem:[#allocation2 + $0x8] sm:$0xff]
  %v2668 = vld [vmem:[#allocation2 + $0x10] sm:$0x3f]
  %v2669 = vld [vmem:[#allocation2 + $0x20] sm:$0xff]
  %v2670 = vld [vmem:[#allocation2 + $0x28] sm:$0x3f]
  %v2671 = vld [vmem:[#allocation2 + $0x38] sm:$0xff]
  %v2672 = vld [vmem:[#allocation2 + $0x40] sm:$0x3f]
  %v2673 = vld [vmem:[#allocation2 + $0x50] sm:$0xff]
  %v2674 = vld [vmem:[#allocation2 + $0x58] sm:$0x3f]
  %v2675 = vld [vmem:[#allocation2 + $0x68] sm:$0xff]
  %v2676 = vld [vmem:[#allocation2 + $0x70] sm:$0x3f]
  %v2677 = vld [vmem:[#allocation2 + $0x80] sm:$0xff]
  %v2678 = vld [vmem:[#allocation2 + $0x88] sm:$0x3f]
  %v2679 = vld [vmem:[#allocation2 + $0x98] sm:$0xff]
  %v2680 = vld [vmem:[#allocation2 + $0xa0] sm:$0x3f]
  %v2681 = vld [vmem:[#allocation2 + $0xb0] sm:$0xff]
  %v2682 = vld [vmem:[#allocation2 + $0xb8] sm:$0x3f]
  %v2683 = vld [vmem:[#allocation2 + $0xc8] sm:$0xff]
  %v2684 = vld [vmem:[#allocation2 + $0xd0] sm:$0x3f]
  %v2685 = vld [vmem:[#allocation2 + $0xe0] sm:$0xff]
  %v2686 = vld [vmem:[#allocation2 + $0xe8] sm:$0x3f]
  %v2687 = vld [vmem:[#allocation2 + $0xf8] sm:$0xff]
  %v2688 = vld [vmem:[#allocation2 + $0x100] sm:$0x3f]
  %v2689 = vld [vmem:[#allocation2 + $0x110] sm:$0xff]
  %v2690 = vld [vmem:[#allocation2 + $0x118] sm:$0x3f]
  %v2691 = vld [vmem:[#allocation2 + $0x128] sm:$0xff]
  %v2692 = vld [vmem:[#allocation2 + $0x130] sm:$0x3f]
  %v2693 = vld [vmem:[#allocation2 + $0x140] sm:$0xff]
  %v2694 = vld [vmem:[#allocation2 + $0x148] sm:$0x3f]
  %v2695 = vmul.f32 %v2667, %v1029
  %v2696 = vmul.f32 %v2668, %v1029
  %v2697 = vmul.f32 %v2669, %v1029
  %v2698 = vmul.f32 %v2670, %v1029
  %v2699 = vmul.f32 %v2671, %v1029
  %v2700 = vmul.f32 %v2672, %v1029
  %v2701 = vmul.f32 %v2673, %v1029
  %v2702 = vmul.f32 %v2674, %v1029
  %v2703 = vmul.f32 %v2675, %v1029
  %v2704 = vmul.f32 %v2676, %v1029
  %v2705 = vmul.f32 %v2677, %v1029
  %v2706 = vmul.f32 %v2678, %v1029
  %v2707 = vmul.f32 %v2679, %v1029
  %v2708 = vmul.f32 %v2680, %v1029
  %v2709 = vmul.f32 %v2681, %v1029
  %v2710 = vmul.f32 %v2682, %v1029
  %v2711 = vmul.f32 %v2683, %v1029
  %v2712 = vmul.f32 %v2684, %v1029
  %v2713 = vmul.f32 %v2685, %v1029
  %v2714 = vmul.f32 %v2686, %v1029
  %v2715 = vmul.f32 %v2687, %v1029
  %v2716 = vmul.f32 %v2688, %v1029
  %v2717 = vmul.f32 %v2689, %v1029
  %v2718 = vmul.f32 %v2690, %v1029
  %v2719 = vmul.f32 %v2691, %v1029
  %v2720 = vmul.f32 %v2692, %v1029
  %v2721 = vmul.f32 %v2693, %v1029
  %v2722 = vmul.f32 %v2694, %v1029
  %v2723 = vadd.f32 %v2639, %v2695
  %v2724 = vadd.f32 %v2640, %v2696
  %v2725 = vadd.f32 %v2641, %v2697
  %v2726 = vadd.f32 %v2642, %v2698
  %v2727 = vadd.f32 %v2643, %v2699
  %v2728 = vadd.f32 %v2644, %v2700
  %v2729 = vadd.f32 %v2645, %v2701
  %v2730 = vadd.f32 %v2646, %v2702
  %v2731 = vadd.f32 %v2647, %v2703
  %v2732 = vadd.f32 %v2648, %v2704
  %v2733 = vadd.f32 %v2649, %v2705
  %v2734 = vadd.f32 %v2650, %v2706
  %v2735 = vadd.f32 %v2651, %v2707
  %v2736 = vadd.f32 %v2652, %v2708
  %v2737 = vadd.f32 %v2653, %v2709
  %v2738 = vadd.f32 %v2654, %v2710
  %v2739 = vadd.f32 %v2655, %v2711
  %v2740 = vadd.f32 %v2656, %v2712
  %v2741 = vadd.f32 %v2657, %v2713
  %v2742 = vadd.f32 %v2658, %v2714
  %v2743 = vadd.f32 %v2659, %v2715
  %v2744 = vadd.f32 %v2660, %v2716
  %v2745 = vadd.f32 %v2661, %v2717
  %v2746 = vadd.f32 %v2662, %v2718
  %v2747 = vadd.f32 %v2663, %v2719
  %v2748 = vadd.f32 %v2664, %v2720
  %v2749 = vadd.f32 %v2665, %v2721
  %v2750 = vadd.f32 %v2666, %v2722
  %v2751 = vld [vmem:[#allocation2 + $0x9] sm:$0xff]
  %v2752 = vld [vmem:[#allocation2 + $0x11] sm:$0x3f]
  %v2753 = vld [vmem:[#allocation2 + $0x21] sm:$0xff]
  %v2754 = vld [vmem:[#allocation2 + $0x29] sm:$0x3f]
  %v2755 = vld [vmem:[#allocation2 + $0x39] sm:$0xff]
  %v2756 = vld [vmem:[#allocation2 + $0x41] sm:$0x3f]
  %v2757 = vld [vmem:[#allocation2 + $0x51] sm:$0xff]
  %v2758 = vld [vmem:[#allocation2 + $0x59] sm:$0x3f]
  %v2759 = vld [vmem:[#allocation2 + $0x69] sm:$0xff]
  %v2760 = vld [vmem:[#allocation2 + $0x71] sm:$0x3f]
  %v2761 = vld [vmem:[#allocation2 + $0x81] sm:$0xff]
  %v2762 = vld [vmem:[#allocation2 + $0x89] sm:$0x3f]
  %v2763 = vld [vmem:[#allocation2 + $0x99] sm:$0xff]
  %v2764 = vld [vmem:[#allocation2 + $0xa1] sm:$0x3f]
  %v2765 = vld [vmem:[#allocation2 + $0xb1] sm:$0xff]
  %v2766 = vld [vmem:[#allocation2 + $0xb9] sm:$0x3f]
  %v2767 = vld [vmem:[#allocation2 + $0xc9] sm:$0xff]
  %v2768 = vld [vmem:[#allocation2 + $0xd1] sm:$0x3f]
  %v2769 = vld [vmem:[#allocation2 + $0xe1] sm:$0xff]
  %v2770 = vld [vmem:[#allocation2 + $0xe9] sm:$0x3f]
  %v2771 = vld [vmem:[#allocation2 + $0xf9] sm:$0xff]
  %v2772 = vld [vmem:[#allocation2 + $0x101] sm:$0x3f]
  %v2773 = vld [vmem:[#allocation2 + $0x111] sm:$0xff]
  %v2774 = vld [vmem:[#allocation2 + $0x119] sm:$0x3f]
  %v2775 = vld [vmem:[#allocation2 + $0x129] sm:$0xff]
  %v2776 = vld [vmem:[#allocation2 + $0x131] sm:$0x3f]
  %v2777 = vld [vmem:[#allocation2 + $0x141] sm:$0xff]
  %v2778 = vld [vmem:[#allocation2 + $0x149] sm:$0x3f]
  %v2779 = vmul.f32 %v2751, %v1117
  %v2780 = vmul.f32 %v2752, %v1117
  %v2781 = vmul.f32 %v2753, %v1117
  %v2782 = vmul.f32 %v2754, %v1117
  %v2783 = vmul.f32 %v2755, %v1117
  %v2784 = vmul.f32 %v2756, %v1117
  %v2785 = vmul.f32 %v2757, %v1117
  %v2786 = vmul.f32 %v2758, %v1117
  %v2787 = vmul.f32 %v2759, %v1117
  %v2788 = vmul.f32 %v2760, %v1117
  %v2789 = vmul.f32 %v2761, %v1117
  %v2790 = vmul.f32 %v2762, %v1117
  %v2791 = vmul.f32 %v2763, %v1117
  %v2792 = vmul.f32 %v2764, %v1117
  %v2793 = vmul.f32 %v2765, %v1117
  %v2794 = vmul.f32 %v2766, %v1117
  %v2795 = vmul.f32 %v2767, %v1117
  %v2796 = vmul.f32 %v2768, %v1117
  %v2797 = vmul.f32 %v2769, %v1117
  %v2798 = vmul.f32 %v2770, %v1117
  %v2799 = vmul.f32 %v2771, %v1117
  %v2800 = vmul.f32 %v2772, %v1117
  %v2801 = vmul.f32 %v2773, %v1117
  %v2802 = vmul.f32 %v2774, %v1117
  %v2803 = vmul.f32 %v2775, %v1117
  %v2804 = vmul.f32 %v2776, %v1117
  %v2805 = vmul.f32 %v2777, %v1117
  %v2806 = vmul.f32 %v2778, %v1117
  %v2807 = vadd.f32 %v2723, %v2779
  %v2808 = vadd.f32 %v2724, %v2780
  %v2809 = vadd.f32 %v2725, %v2781
  %v2810 = vadd.f32 %v2726, %v2782
  %v2811 = vadd.f32 %v2727, %v2783
  %v2812 = vadd.f32 %v2728, %v2784
  %v2813 = vadd.f32 %v2729, %v2785
  %v2814 = vadd.f32 %v2730, %v2786
  %v2815 = vadd.f32 %v2731, %v2787
  %v2816 = vadd.f32 %v2732, %v2788
  %v2817 = vadd.f32 %v2733, %v2789
  %v2818 = vadd.f32 %v2734, %v2790
  %v2819 = vadd.f32 %v2735, %v2791
  %v2820 = vadd.f32 %v2736, %v2792
  %v2821 = vadd.f32 %v2737, %v2793
  %v2822 = vadd.f32 %v2738, %v2794
  %v2823 = vadd.f32 %v2739, %v2795
  %v2824 = vadd.f32 %v2740, %v2796
  %v2825 = vadd.f32 %v2741, %v2797
  %v2826 = vadd.f32 %v2742, %v2798
  %v2827 = vadd.f32 %v2743, %v2799
  %v2828 = vadd.f32 %v2744, %v2800
  %v2829 = vadd.f32 %v2745, %v2801
  %v2830 = vadd.f32 %v2746, %v2802
  %v2831 = vadd.f32 %v2747, %v2803
  %v2832 = vadd.f32 %v2748, %v2804
  %v2833 = vadd.f32 %v2749, %v2805
  %v2834 = vadd.f32 %v2750, %v2806
  %v2835 = vld [vmem:[%s48 + $0x7] sm:$0xff]
  %v2836 = vld [vmem:[%s48 + $0xf] sm:$0x3f]
  %v2837 = vld [vmem:[%s48 + $0x1f] sm:$0xff]
  %v2838 = vld [vmem:[%s48 + $0x27] sm:$0x3f]
  %v2839 = vld [vmem:[%s48 + $0x37] sm:$0xff]
  %v2840 = vld [vmem:[%s48 + $0x3f] sm:$0x3f]
  %v2841 = vld [vmem:[%s48 + $0x4f] sm:$0xff]
  %v2842 = vld [vmem:[%s48 + $0x57] sm:$0x3f]
  %v2843 = vld [vmem:[%s48 + $0x67] sm:$0xff]
  %v2844 = vld [vmem:[%s48 + $0x6f] sm:$0x3f]
  %v2845 = vld [vmem:[%s48 + $0x7f] sm:$0xff]
  %v2846 = vld [vmem:[%s48 + $0x87] sm:$0x3f]
  %v2847 = vld [vmem:[%s48 + $0x97] sm:$0xff]
  %v2848 = vld [vmem:[%s48 + $0x9f] sm:$0x3f]
  %v2849 = vld [vmem:[%s48 + $0xaf] sm:$0xff]
  %v2850 = vld [vmem:[%s48 + $0xb7] sm:$0x3f]
  %v2851 = vld [vmem:[%s48 + $0xc7] sm:$0xff]
  %v2852 = vld [vmem:[%s48 + $0xcf] sm:$0x3f]
  %v2853 = vld [vmem:[%s48 + $0xdf] sm:$0xff]
  %v2854 = vld [vmem:[%s48 + $0xe7] sm:$0x3f]
  %v2855 = vld [vmem:[%s48 + $0xf7] sm:$0xff]
  %v2856 = vld [vmem:[%s48 + $0xff] sm:$0x3f]
  %v2857 = vld [vmem:[%s48 + $0x10f] sm:$0xff]
  %v2858 = vld [vmem:[%s48 + $0x117] sm:$0x3f]
  %v2859 = vld [vmem:[%s48 + $0x127] sm:$0xff]
  %v2860 = vld [vmem:[%s48 + $0x12f] sm:$0x3f]
  %v2861 = vld [vmem:[%s48 + $0x13f] sm:$0xff]
  %v2862 = vld [vmem:[%s48 + $0x147] sm:$0x3f]
  %v2863 = vmul.f32 %v2835, %v1205
  %v2864 = vmul.f32 %v2836, %v1205
  %v2865 = vmul.f32 %v2837, %v1205
  %v2866 = vmul.f32 %v2838, %v1205
  %v2867 = vmul.f32 %v2839, %v1205
  %v2868 = vmul.f32 %v2840, %v1205
  %v2869 = vmul.f32 %v2841, %v1205
  %v2870 = vmul.f32 %v2842, %v1205
  %v2871 = vmul.f32 %v2843, %v1205
  %v2872 = vmul.f32 %v2844, %v1205
  %v2873 = vmul.f32 %v2845, %v1205
  %v2874 = vmul.f32 %v2846, %v1205
  %v2875 = vmul.f32 %v2847, %v1205
  %v2876 = vmul.f32 %v2848, %v1205
  %v2877 = vmul.f32 %v2849, %v1205
  %v2878 = vmul.f32 %v2850, %v1205
  %v2879 = vmul.f32 %v2851, %v1205
  %v2880 = vmul.f32 %v2852, %v1205
  %v2881 = vmul.f32 %v2853, %v1205
  %v2882 = vmul.f32 %v2854, %v1205
  %v2883 = vmul.f32 %v2855, %v1205
  %v2884 = vmul.f32 %v2856, %v1205
  %v2885 = vmul.f32 %v2857, %v1205
  %v2886 = vmul.f32 %v2858, %v1205
  %v2887 = vmul.f32 %v2859, %v1205
  %v2888 = vmul.f32 %v2860, %v1205
  %v2889 = vmul.f32 %v2861, %v1205
  %v2890 = vmul.f32 %v2862, %v1205
  %v2891 = vadd.f32 %v2807, %v2863
  %v2892 = vadd.f32 %v2808, %v2864
  %v2893 = vadd.f32 %v2809, %v2865
  %v2894 = vadd.f32 %v2810, %v2866
  %v2895 = vadd.f32 %v2811, %v2867
  %v2896 = vadd.f32 %v2812, %v2868
  %v2897 = vadd.f32 %v2813, %v2869
  %v2898 = vadd.f32 %v2814, %v2870
  %v2899 = vadd.f32 %v2815, %v2871
  %v2900 = vadd.f32 %v2816, %v2872
  %v2901 = vadd.f32 %v2817, %v2873
  %v2902 = vadd.f32 %v2818, %v2874
  %v2903 = vadd.f32 %v2819, %v2875
  %v2904 = vadd.f32 %v2820, %v2876
  %v2905 = vadd.f32 %v2821, %v2877
  %v2906 = vadd.f32 %v2822, %v2878
  %v2907 = vadd.f32 %v2823, %v2879
  %v2908 = vadd.f32 %v2824, %v2880
  %v2909 = vadd.f32 %v2825, %v2881
  %v2910 = vadd.f32 %v2826, %v2882
  %v2911 = vadd.f32 %v2827, %v2883
  %v2912 = vadd.f32 %v2828, %v2884
  %v2913 = vadd.f32 %v2829, %v2885
  %v2914 = vadd.f32 %v2830, %v2886
  %v2915 = vadd.f32 %v2831, %v2887
  %v2916 = vadd.f32 %v2832, %v2888
  %v2917 = vadd.f32 %v2833, %v2889
  %v2918 = vadd.f32 %v2834, %v2890
  %v2919 = vld [vmem:[%s48 + $0x8] sm:$0xff]
  %v2920 = vld [vmem:[%s48 + $0x10] sm:$0x3f]
  %v2921 = vld [vmem:[%s48 + $0x20] sm:$0xff]
  %v2922 = vld [vmem:[%s48 + $0x28] sm:$0x3f]
  %v2923 = vld [vmem:[%s48 + $0x38] sm:$0xff]
  %v2924 = vld [vmem:[%s48 + $0x40] sm:$0x3f]
  %v2925 = vld [vmem:[%s48 + $0x50] sm:$0xff]
  %v2926 = vld [vmem:[%s48 + $0x58] sm:$0x3f]
  %v2927 = vld [vmem:[%s48 + $0x68] sm:$0xff]
  %v2928 = vld [vmem:[%s48 + $0x70] sm:$0x3f]
  %v2929 = vld [vmem:[%s48 + $0x80] sm:$0xff]
  %v2930 = vld [vmem:[%s48 + $0x88] sm:$0x3f]
  %v2931 = vld [vmem:[%s48 + $0x98] sm:$0xff]
  %v2932 = vld [vmem:[%s48 + $0xa0] sm:$0x3f]
  %v2933 = vld [vmem:[%s48 + $0xb0] sm:$0xff]
  %v2934 = vld [vmem:[%s48 + $0xb8] sm:$0x3f]
  %v2935 = vld [vmem:[%s48 + $0xc8] sm:$0xff]
  %v2936 = vld [vmem:[%s48 + $0xd0] sm:$0x3f]
  %v2937 = vld [vmem:[%s48 + $0xe0] sm:$0xff]
  %v2938 = vld [vmem:[%s48 + $0xe8] sm:$0x3f]
  %v2939 = vld [vmem:[%s48 + $0xf8] sm:$0xff]
  %v2940 = vld [vmem:[%s48 + $0x100] sm:$0x3f]
  %v2941 = vld [vmem:[%s48 + $0x110] sm:$0xff]
  %v2942 = vld [vmem:[%s48 + $0x118] sm:$0x3f]
  %v2943 = vld [vmem:[%s48 + $0x128] sm:$0xff]
  %v2944 = vld [vmem:[%s48 + $0x130] sm:$0x3f]
  %v2945 = vld [vmem:[%s48 + $0x140] sm:$0xff]
  %v2946 = vld [vmem:[%s48 + $0x148] sm:$0x3f]
  %v2947 = vmul.f32 %v2919, %v1293
  %v2948 = vmul.f32 %v2920, %v1293
  %v2949 = vmul.f32 %v2921, %v1293
  %v2950 = vmul.f32 %v2922, %v1293
  %v2951 = vmul.f32 %v2923, %v1293
  %v2952 = vmul.f32 %v2924, %v1293
  %v2953 = vmul.f32 %v2925, %v1293
  %v2954 = vmul.f32 %v2926, %v1293
  %v2955 = vmul.f32 %v2927, %v1293
  %v2956 = vmul.f32 %v2928, %v1293
  %v2957 = vmul.f32 %v2929, %v1293
  %v2958 = vmul.f32 %v2930, %v1293
  %v2959 = vmul.f32 %v2931, %v1293
  %v2960 = vmul.f32 %v2932, %v1293
  %v2961 = vmul.f32 %v2933, %v1293
  %v2962 = vmul.f32 %v2934, %v1293
  %v2963 = vmul.f32 %v2935, %v1293
  %v2964 = vmul.f32 %v2936, %v1293
  %v2965 = vmul.f32 %v2937, %v1293
  %v2966 = vmul.f32 %v2938, %v1293
  %v2967 = vmul.f32 %v2939, %v1293
  %v2968 = vmul.f32 %v2940, %v1293
  %v2969 = vmul.f32 %v2941, %v1293
  %v2970 = vmul.f32 %v2942, %v1293
  %v2971 = vmul.f32 %v2943, %v1293
  %v2972 = vmul.f32 %v2944, %v1293
  %v2973 = vmul.f32 %v2945, %v1293
  %v2974 = vmul.f32 %v2946, %v1293
  %v2975 = vadd.f32 %v2891, %v2947
  %v2976 = vadd.f32 %v2892, %v2948
  %v2977 = vadd.f32 %v2893, %v2949
  %v2978 = vadd.f32 %v2894, %v2950
  %v2979 = vadd.f32 %v2895, %v2951
  %v2980 = vadd.f32 %v2896, %v2952
  %v2981 = vadd.f32 %v2897, %v2953
  %v2982 = vadd.f32 %v2898, %v2954
  %v2983 = vadd.f32 %v2899, %v2955
  %v2984 = vadd.f32 %v2900, %v2956
  %v2985 = vadd.f32 %v2901, %v2957
  %v2986 = vadd.f32 %v2902, %v2958
  %v2987 = vadd.f32 %v2903, %v2959
  %v2988 = vadd.f32 %v2904, %v2960
  %v2989 = vadd.f32 %v2905, %v2961
  %v2990 = vadd.f32 %v2906, %v2962
  %v2991 = vadd.f32 %v2907, %v2963
  %v2992 = vadd.f32 %v2908, %v2964
  %v2993 = vadd.f32 %v2909, %v2965
  %v2994 = vadd.f32 %v2910, %v2966
  %v2995 = vadd.f32 %v2911, %v2967
  %v2996 = vadd.f32 %v2912, %v2968
  %v2997 = vadd.f32 %v2913, %v2969
  %v2998 = vadd.f32 %v2914, %v2970
  %v2999 = vadd.f32 %v2915, %v2971
  %v3000 = vadd.f32 %v2916, %v2972
  %v3001 = vadd.f32 %v2917, %v2973
  %v3002 = vadd.f32 %v2918, %v2974
  %v3003 = vld [vmem:[%s48 + $0x9] sm:$0xff]
  %v3004 = vld [vmem:[%s48 + $0x11] sm:$0x3f]
  %v3005 = vld [vmem:[%s48 + $0x21] sm:$0xff]
  %v3006 = vld [vmem:[%s48 + $0x29] sm:$0x3f]
  %v3007 = vld [vmem:[%s48 + $0x39] sm:$0xff]
  %v3008 = vld [vmem:[%s48 + $0x41] sm:$0x3f]
  %v3009 = vld [vmem:[%s48 + $0x51] sm:$0xff]
  %v3010 = vld [vmem:[%s48 + $0x59] sm:$0x3f]
  %v3011 = vld [vmem:[%s48 + $0x69] sm:$0xff]
  %v3012 = vld [vmem:[%s48 + $0x71] sm:$0x3f]
  %v3013 = vld [vmem:[%s48 + $0x81] sm:$0xff]
  %v3014 = vld [vmem:[%s48 + $0x89] sm:$0x3f]
  %v3015 = vld [vmem:[%s48 + $0x99] sm:$0xff]
  %v3016 = vld [vmem:[%s48 + $0xa1] sm:$0x3f]
  %v3017 = vld [vmem:[%s48 + $0xb1] sm:$0xff]
  %v3018 = vld [vmem:[%s48 + $0xb9] sm:$0x3f]
  %v3019 = vld [vmem:[%s48 + $0xc9] sm:$0xff]
  %v3020 = vld [vmem:[%s48 + $0xd1] sm:$0x3f]
  %v3021 = vld [vmem:[%s48 + $0xe1] sm:$0xff]
  %v3022 = vld [vmem:[%s48 + $0xe9] sm:$0x3f]
  %v3023 = vld [vmem:[%s48 + $0xf9] sm:$0xff]
  %v3024 = vld [vmem:[%s48 + $0x101] sm:$0x3f]
  %v3025 = vld [vmem:[%s48 + $0x111] sm:$0xff]
  %v3026 = vld [vmem:[%s48 + $0x119] sm:$0x3f]
  %v3027 = vld [vmem:[%s48 + $0x129] sm:$0xff]
  %v3028 = vld [vmem:[%s48 + $0x131] sm:$0x3f]
  %v3029 = vld [vmem:[%s48 + $0x141] sm:$0xff]
  %v3030 = vld [vmem:[%s48 + $0x149] sm:$0x3f]
  %v3031 = vmul.f32 %v3003, %v1381
  %v3032 = vmul.f32 %v3004, %v1381
  %v3033 = vmul.f32 %v3005, %v1381
  %v3034 = vmul.f32 %v3006, %v1381
  %v3035 = vmul.f32 %v3007, %v1381
  %v3036 = vmul.f32 %v3008, %v1381
  %v3037 = vmul.f32 %v3009, %v1381
  %v3038 = vmul.f32 %v3010, %v1381
  %v3039 = vmul.f32 %v3011, %v1381
  %v3040 = vmul.f32 %v3012, %v1381
  %v3041 = vmul.f32 %v3013, %v1381
  %v3042 = vmul.f32 %v3014, %v1381
  %v3043 = vmul.f32 %v3015, %v1381
  %v3044 = vmul.f32 %v3016, %v1381
  %v3045 = vmul.f32 %v3017, %v1381
  %v3046 = vmul.f32 %v3018, %v1381
  %v3047 = vmul.f32 %v3019, %v1381
  %v3048 = vmul.f32 %v3020, %v1381
  %v3049 = vmul.f32 %v3021, %v1381
  %v3050 = vmul.f32 %v3022, %v1381
  %v3051 = vmul.f32 %v3023, %v1381
  %v3052 = vmul.f32 %v3024, %v1381
  %v3053 = vmul.f32 %v3025, %v1381
  %v3054 = vmul.f32 %v3026, %v1381
  %v3055 = vmul.f32 %v3027, %v1381
  %v3056 = vmul.f32 %v3028, %v1381
  %v3057 = vmul.f32 %v3029, %v1381
  %v3058 = vmul.f32 %v3030, %v1381
  %v3059 = vadd.f32 %v2975, %v3031
  %v3060 = vadd.f32 %v2976, %v3032
  %v3061 = vadd.f32 %v2977, %v3033
  %v3062 = vadd.f32 %v2978, %v3034
  %v3063 = vadd.f32 %v2979, %v3035
  %v3064 = vadd.f32 %v2980, %v3036
  %v3065 = vadd.f32 %v2981, %v3037
  %v3066 = vadd.f32 %v2982, %v3038
  %v3067 = vadd.f32 %v2983, %v3039
  %v3068 = vadd.f32 %v2984, %v3040
  %v3069 = vadd.f32 %v2985, %v3041
  %v3070 = vadd.f32 %v2986, %v3042
  %v3071 = vadd.f32 %v2987, %v3043
  %v3072 = vadd.f32 %v2988, %v3044
  %v3073 = vadd.f32 %v2989, %v3045
  %v3074 = vadd.f32 %v2990, %v3046
  %v3075 = vadd.f32 %v2991, %v3047
  %v3076 = vadd.f32 %v2992, %v3048
  %v3077 = vadd.f32 %v2993, %v3049
  %v3078 = vadd.f32 %v2994, %v3050
  %v3079 = vadd.f32 %v2995, %v3051
  %v3080 = vadd.f32 %v2996, %v3052
  %v3081 = vadd.f32 %v2997, %v3053
  %v3082 = vadd.f32 %v2998, %v3054
  %v3083 = vadd.f32 %v2999, %v3055
  %v3084 = vadd.f32 %v3000, %v3056
  %v3085 = vadd.f32 %v3001, %v3057
  %v3086 = vadd.f32 %v3002, %v3058
  %v3087 = vld [vmem:[%s1438 + $0x7] sm:$0xff]
  %v3088 = vld [vmem:[%s1438 + $0xf] sm:$0x3f]
  %v3089 = vld [vmem:[%s1438 + $0x1f] sm:$0xff]
  %v3090 = vld [vmem:[%s1438 + $0x27] sm:$0x3f]
  %v3091 = vld [vmem:[%s1438 + $0x37] sm:$0xff]
  %v3092 = vld [vmem:[%s1438 + $0x3f] sm:$0x3f]
  %v3093 = vld [vmem:[%s1438 + $0x4f] sm:$0xff]
  %v3094 = vld [vmem:[%s1438 + $0x57] sm:$0x3f]
  %v3095 = vld [vmem:[%s1438 + $0x67] sm:$0xff]
  %v3096 = vld [vmem:[%s1438 + $0x6f] sm:$0x3f]
  %v3097 = vld [vmem:[%s1438 + $0x7f] sm:$0xff]
  %v3098 = vld [vmem:[%s1438 + $0x87] sm:$0x3f]
  %v3099 = vld [vmem:[%s1438 + $0x97] sm:$0xff]
  %v3100 = vld [vmem:[%s1438 + $0x9f] sm:$0x3f]
  %v3101 = vld [vmem:[%s1438 + $0xaf] sm:$0xff]
  %v3102 = vld [vmem:[%s1438 + $0xb7] sm:$0x3f]
  %v3103 = vld [vmem:[%s1438 + $0xc7] sm:$0xff]
  %v3104 = vld [vmem:[%s1438 + $0xcf] sm:$0x3f]
  %v3105 = vld [vmem:[%s1438 + $0xdf] sm:$0xff]
  %v3106 = vld [vmem:[%s1438 + $0xe7] sm:$0x3f]
  %v3107 = vld [vmem:[%s1438 + $0xf7] sm:$0xff]
  %v3108 = vld [vmem:[%s1438 + $0xff] sm:$0x3f]
  %v3109 = vld [vmem:[%s1438 + $0x10f] sm:$0xff]
  %v3110 = vld [vmem:[%s1438 + $0x117] sm:$0x3f]
  %v3111 = vld [vmem:[%s1438 + $0x127] sm:$0xff]
  %v3112 = vld [vmem:[%s1438 + $0x12f] sm:$0x3f]
  %v3113 = vld [vmem:[%s1438 + $0x13f] sm:$0xff]
  %v3114 = vld [vmem:[%s1438 + $0x147] sm:$0x3f]
  %v3115 = vmul.f32 %v3087, %v1470
  %v3116 = vmul.f32 %v3088, %v1470
  %v3117 = vmul.f32 %v3089, %v1470
  %v3118 = vmul.f32 %v3090, %v1470
  %v3119 = vmul.f32 %v3091, %v1470
  %v3120 = vmul.f32 %v3092, %v1470
  %v3121 = vmul.f32 %v3093, %v1470
  %v3122 = vmul.f32 %v3094, %v1470
  %v3123 = vmul.f32 %v3095, %v1470
  %v3124 = vmul.f32 %v3096, %v1470
  %v3125 = vmul.f32 %v3097, %v1470
  %v3126 = vmul.f32 %v3098, %v1470
  %v3127 = vmul.f32 %v3099, %v1470
  %v3128 = vmul.f32 %v3100, %v1470
  %v3129 = vmul.f32 %v3101, %v1470
  %v3130 = vmul.f32 %v3102, %v1470
  %v3131 = vmul.f32 %v3103, %v1470
  %v3132 = vmul.f32 %v3104, %v1470
  %v3133 = vmul.f32 %v3105, %v1470
  %v3134 = vmul.f32 %v3106, %v1470
  %v3135 = vmul.f32 %v3107, %v1470
  %v3136 = vmul.f32 %v3108, %v1470
  %v3137 = vmul.f32 %v3109, %v1470
  %v3138 = vmul.f32 %v3110, %v1470
  %v3139 = vmul.f32 %v3111, %v1470
  %v3140 = vmul.f32 %v3112, %v1470
  %v3141 = vmul.f32 %v3113, %v1470
  %v3142 = vmul.f32 %v3114, %v1470
  %v3143 = vadd.f32 %v3059, %v3115
  %v3144 = vadd.f32 %v3060, %v3116
  %v3145 = vadd.f32 %v3061, %v3117
  %v3146 = vadd.f32 %v3062, %v3118
  %v3147 = vadd.f32 %v3063, %v3119
  %v3148 = vadd.f32 %v3064, %v3120
  %v3149 = vadd.f32 %v3065, %v3121
  %v3150 = vadd.f32 %v3066, %v3122
  %v3151 = vadd.f32 %v3067, %v3123
  %v3152 = vadd.f32 %v3068, %v3124
  %v3153 = vadd.f32 %v3069, %v3125
  %v3154 = vadd.f32 %v3070, %v3126
  %v3155 = vadd.f32 %v3071, %v3127
  %v3156 = vadd.f32 %v3072, %v3128
  %v3157 = vadd.f32 %v3073, %v3129
  %v3158 = vadd.f32 %v3074, %v3130
  %v3159 = vadd.f32 %v3075, %v3131
  %v3160 = vadd.f32 %v3076, %v3132
  %v3161 = vadd.f32 %v3077, %v3133
  %v3162 = vadd.f32 %v3078, %v3134
  %v3163 = vadd.f32 %v3079, %v3135
  %v3164 = vadd.f32 %v3080, %v3136
  %v3165 = vadd.f32 %v3081, %v3137
  %v3166 = vadd.f32 %v3082, %v3138
  %v3167 = vadd.f32 %v3083, %v3139
  %v3168 = vadd.f32 %v3084, %v3140
  %v3169 = vadd.f32 %v3085, %v3141
  %v3170 = vadd.f32 %v3086, %v3142
  %v3171 = vld [vmem:[%s1438 + $0x8] sm:$0xff]
  %v3172 = vld [vmem:[%s1438 + $0x10] sm:$0x3f]
  %v3173 = vld [vmem:[%s1438 + $0x20] sm:$0xff]
  %v3174 = vld [vmem:[%s1438 + $0x28] sm:$0x3f]
  %v3175 = vld [vmem:[%s1438 + $0x38] sm:$0xff]
  %v3176 = vld [vmem:[%s1438 + $0x40] sm:$0x3f]
  %v3177 = vld [vmem:[%s1438 + $0x50] sm:$0xff]
  %v3178 = vld [vmem:[%s1438 + $0x58] sm:$0x3f]
  %v3179 = vld [vmem:[%s1438 + $0x68] sm:$0xff]
  %v3180 = vld [vmem:[%s1438 + $0x70] sm:$0x3f]
  %v3181 = vld [vmem:[%s1438 + $0x80] sm:$0xff]
  %v3182 = vld [vmem:[%s1438 + $0x88] sm:$0x3f]
  %v3183 = vld [vmem:[%s1438 + $0x98] sm:$0xff]
  %v3184 = vld [vmem:[%s1438 + $0xa0] sm:$0x3f]
  %v3185 = vld [vmem:[%s1438 + $0xb0] sm:$0xff]
  %v3186 = vld [vmem:[%s1438 + $0xb8] sm:$0x3f]
  %v3187 = vld [vmem:[%s1438 + $0xc8] sm:$0xff]
  %v3188 = vld [vmem:[%s1438 + $0xd0] sm:$0x3f]
  %v3189 = vld [vmem:[%s1438 + $0xe0] sm:$0xff]
  %v3190 = vld [vmem:[%s1438 + $0xe8] sm:$0x3f]
  %v3191 = vld [vmem:[%s1438 + $0xf8] sm:$0xff]
  %v3192 = vld [vmem:[%s1438 + $0x100] sm:$0x3f]
  %v3193 = vld [vmem:[%s1438 + $0x110] sm:$0xff]
  %v3194 = vld [vmem:[%s1438 + $0x118] sm:$0x3f]
  %v3195 = vld [vmem:[%s1438 + $0x128] sm:$0xff]
  %v3196 = vld [vmem:[%s1438 + $0x130] sm:$0x3f]
  %v3197 = vld [vmem:[%s1438 + $0x140] sm:$0xff]
  %v3198 = vld [vmem:[%s1438 + $0x148] sm:$0x3f]
  %v3199 = vmul.f32 %v3171, %v1558
  %v3200 = vmul.f32 %v3172, %v1558
  %v3201 = vmul.f32 %v3173, %v1558
  %v3202 = vmul.f32 %v3174, %v1558
  %v3203 = vmul.f32 %v3175, %v1558
  %v3204 = vmul.f32 %v3176, %v1558
  %v3205 = vmul.f32 %v3177, %v1558
  %v3206 = vmul.f32 %v3178, %v1558
  %v3207 = vmul.f32 %v3179, %v1558
  %v3208 = vmul.f32 %v3180, %v1558
  %v3209 = vmul.f32 %v3181, %v1558
  %v3210 = vmul.f32 %v3182, %v1558
  %v3211 = vmul.f32 %v3183, %v1558
  %v3212 = vmul.f32 %v3184, %v1558
  %v3213 = vmul.f32 %v3185, %v1558
  %v3214 = vmul.f32 %v3186, %v1558
  %v3215 = vmul.f32 %v3187, %v1558
  %v3216 = vmul.f32 %v3188, %v1558
  %v3217 = vmul.f32 %v3189, %v1558
  %v3218 = vmul.f32 %v3190, %v1558
  %v3219 = vmul.f32 %v3191, %v1558
  %v3220 = vmul.f32 %v3192, %v1558
  %v3221 = vmul.f32 %v3193, %v1558
  %v3222 = vmul.f32 %v3194, %v1558
  %v3223 = vmul.f32 %v3195, %v1558
  %v3224 = vmul.f32 %v3196, %v1558
  %v3225 = vmul.f32 %v3197, %v1558
  %v3226 = vmul.f32 %v3198, %v1558
  %v3227 = vadd.f32 %v3143, %v3199
  %v3228 = vadd.f32 %v3144, %v3200
  %v3229 = vadd.f32 %v3145, %v3201
  %v3230 = vadd.f32 %v3146, %v3202
  %v3231 = vadd.f32 %v3147, %v3203
  %v3232 = vadd.f32 %v3148, %v3204
  %v3233 = vadd.f32 %v3149, %v3205
  %v3234 = vadd.f32 %v3150, %v3206
  %v3235 = vadd.f32 %v3151, %v3207
  %v3236 = vadd.f32 %v3152, %v3208
  %v3237 = vadd.f32 %v3153, %v3209
  %v3238 = vadd.f32 %v3154, %v3210
  %v3239 = vadd.f32 %v3155, %v3211
  %v3240 = vadd.f32 %v3156, %v3212
  %v3241 = vadd.f32 %v3157, %v3213
  %v3242 = vadd.f32 %v3158, %v3214
  %v3243 = vadd.f32 %v3159, %v3215
  %v3244 = vadd.f32 %v3160, %v3216
  %v3245 = vadd.f32 %v3161, %v3217
  %v3246 = vadd.f32 %v3162, %v3218
  %v3247 = vadd.f32 %v3163, %v3219
  %v3248 = vadd.f32 %v3164, %v3220
  %v3249 = vadd.f32 %v3165, %v3221
  %v3250 = vadd.f32 %v3166, %v3222
  %v3251 = vadd.f32 %v3167, %v3223
  %v3252 = vadd.f32 %v3168, %v3224
  %v3253 = vadd.f32 %v3169, %v3225
  %v3254 = vadd.f32 %v3170, %v3226
  %v3255 = vld [vmem:[%s1438 + $0x9] sm:$0xff]
  %v3256 = vld [vmem:[%s1438 + $0x11] sm:$0x3f]
  %v3257 = vld [vmem:[%s1438 + $0x21] sm:$0xff]
  %v3258 = vld [vmem:[%s1438 + $0x29] sm:$0x3f]
  %v3259 = vld [vmem:[%s1438 + $0x39] sm:$0xff]
  %v3260 = vld [vmem:[%s1438 + $0x41] sm:$0x3f]
  %v3261 = vld [vmem:[%s1438 + $0x51] sm:$0xff]
  %v3262 = vld [vmem:[%s1438 + $0x59] sm:$0x3f]
  %v3263 = vld [vmem:[%s1438 + $0x69] sm:$0xff]
  %v3264 = vld [vmem:[%s1438 + $0x71] sm:$0x3f]
  %v3265 = vld [vmem:[%s1438 + $0x81] sm:$0xff]
  %v3266 = vld [vmem:[%s1438 + $0x89] sm:$0x3f]
  %v3267 = vld [vmem:[%s1438 + $0x99] sm:$0xff]
  %v3268 = vld [vmem:[%s1438 + $0xa1] sm:$0x3f]
  %v3269 = vld [vmem:[%s1438 + $0xb1] sm:$0xff]
  %v3270 = vld [vmem:[%s1438 + $0xb9] sm:$0x3f]
  %v3271 = vld [vmem:[%s1438 + $0xc9] sm:$0xff]
  %v3272 = vld [vmem:[%s1438 + $0xd1] sm:$0x3f]
  %v3273 = vld [vmem:[%s1438 + $0xe1] sm:$0xff]
  %v3274 = vld [vmem:[%s1438 + $0xe9] sm:$0x3f]
  %v3275 = vld [vmem:[%s1438 + $0xf9] sm:$0xff]
  %v3276 = vld [vmem:[%s1438 + $0x101] sm:$0x3f]
  %v3277 = vld [vmem:[%s1438 + $0x111] sm:$0xff]
  %v3278 = vld [vmem:[%s1438 + $0x119] sm:$0x3f]
  %v3279 = vld [vmem:[%s1438 + $0x129] sm:$0xff]
  %v3280 = vld [vmem:[%s1438 + $0x131] sm:$0x3f]
  %v3281 = vld [vmem:[%s1438 + $0x141] sm:$0xff]
  %v3282 = vld [vmem:[%s1438 + $0x149] sm:$0x3f]
  %v3283 = vmul.f32 %v3255, %v1646
  %v3284 = vmul.f32 %v3256, %v1646
  %v3285 = vmul.f32 %v3257, %v1646
  %v3286 = vmul.f32 %v3258, %v1646
  %v3287 = vmul.f32 %v3259, %v1646
  %v3288 = vmul.f32 %v3260, %v1646
  %v3289 = vmul.f32 %v3261, %v1646
  %v3290 = vmul.f32 %v3262, %v1646
  %v3291 = vmul.f32 %v3263, %v1646
  %v3292 = vmul.f32 %v3264, %v1646
  %v3293 = vmul.f32 %v3265, %v1646
  %v3294 = vmul.f32 %v3266, %v1646
  %v3295 = vmul.f32 %v3267, %v1646
  %v3296 = vmul.f32 %v3268, %v1646
  %v3297 = vmul.f32 %v3269, %v1646
  %v3298 = vmul.f32 %v3270, %v1646
  %v3299 = vmul.f32 %v3271, %v1646
  %v3300 = vmul.f32 %v3272, %v1646
  %v3301 = vmul.f32 %v3273, %v1646
  %v3302 = vmul.f32 %v3274, %v1646
  %v3303 = vmul.f32 %v3275, %v1646
  %v3304 = vmul.f32 %v3276, %v1646
  %v3305 = vmul.f32 %v3277, %v1646
  %v3306 = vmul.f32 %v3278, %v1646
  %v3307 = vmul.f32 %v3279, %v1646
  %v3308 = vmul.f32 %v3280, %v1646
  %v3309 = vmul.f32 %v3281, %v1646
  %v3310 = vmul.f32 %v3282, %v1646
  %v3311 = vadd.f32 %v3227, %v3283
  %v3312 = vadd.f32 %v3228, %v3284
  %v3313 = vadd.f32 %v3229, %v3285
  %v3314 = vadd.f32 %v3230, %v3286
  %v3315 = vadd.f32 %v3231, %v3287
  %v3316 = vadd.f32 %v3232, %v3288
  %v3317 = vadd.f32 %v3233, %v3289
  %v3318 = vadd.f32 %v3234, %v3290
  %v3319 = vadd.f32 %v3235, %v3291
  %v3320 = vadd.f32 %v3236, %v3292
  %v3321 = vadd.f32 %v3237, %v3293
  %v3322 = vadd.f32 %v3238, %v3294
  %v3323 = vadd.f32 %v3239, %v3295
  %v3324 = vadd.f32 %v3240, %v3296
  %v3325 = vadd.f32 %v3241, %v3297
  %v3326 = vadd.f32 %v3242, %v3298
  %v3327 = vadd.f32 %v3243, %v3299
  %v3328 = vadd.f32 %v3244, %v3300
  %v3329 = vadd.f32 %v3245, %v3301
  %v3330 = vadd.f32 %v3246, %v3302
  %v3331 = vadd.f32 %v3247, %v3303
  %v3332 = vadd.f32 %v3248, %v3304
  %v3333 = vadd.f32 %v3249, %v3305
  %v3334 = vadd.f32 %v3250, %v3306
  %v3335 = vadd.f32 %v3251, %v3307
  %v3336 = vadd.f32 %v3252, %v3308
  %v3337 = vadd.f32 %v3253, %v3309
  %v3338 = vadd.f32 %v3254, %v3310
  %v3339 = vadd.f32 %v3311, %v1707
  %v3340 = vadd.f32 %v3312, %v1707
  %v3341 = vadd.f32 %v3313, %v1707
  %v3342 = vadd.f32 %v3314, %v1707
  %v3343 = vadd.f32 %v3315, %v1707
  %v3344 = vadd.f32 %v3316, %v1707
  %v3345 = vadd.f32 %v3317, %v1707
  %v3346 = vadd.f32 %v3318, %v1707
  %v3347 = vadd.f32 %v3319, %v1707
  %v3348 = vadd.f32 %v3320, %v1707
  %v3349 = vadd.f32 %v3321, %v1707
  %v3350 = vadd.f32 %v3322, %v1707
  %v3351 = vadd.f32 %v3323, %v1707
  %v3352 = vadd.f32 %v3324, %v1707
  %v3353 = vadd.f32 %v3325, %v1707
  %v3354 = vadd.f32 %v3326, %v1707
  %v3355 = vadd.f32 %v3327, %v1707
  %v3356 = vadd.f32 %v3328, %v1707
  %v3357 = vadd.f32 %v3329, %v1707
  %v3358 = vadd.f32 %v3330, %v1707
  %v3359 = vadd.f32 %v3331, %v1707
  %v3360 = vadd.f32 %v3332, %v1707
  %v3361 = vadd.f32 %v3333, %v1707
  %v3362 = vadd.f32 %v3334, %v1707
  %v3363 = vadd.f32 %v3335, %v1707
  %v3364 = vadd.f32 %v3336, %v1707
  %v3365 = vadd.f32 %v3337, %v1707
  %v3366 = vadd.f32 %v3338, %v1707
  %v3367 = vmax.f32 %v3339, 0.0
  %v3368 = vmax.f32 %v3340, 0.0
  %v3369 = vmax.f32 %v3341, 0.0
  %v3370 = vmax.f32 %v3342, 0.0
  %v3371 = vmax.f32 %v3343, 0.0
  %v3372 = vmax.f32 %v3344, 0.0
  %v3373 = vmax.f32 %v3345, 0.0
  %v3374 = vmax.f32 %v3346, 0.0
  %v3375 = vmax.f32 %v3347, 0.0
  %v3376 = vmax.f32 %v3348, 0.0
  %v3377 = vmax.f32 %v3349, 0.0
  %v3378 = vmax.f32 %v3350, 0.0
  %v3379 = vmax.f32 %v3351, 0.0
  %v3380 = vmax.f32 %v3352, 0.0
  %v3381 = vmax.f32 %v3353, 0.0
  %v3382 = vmax.f32 %v3354, 0.0
  %v3383 = vmax.f32 %v3355, 0.0
  %v3384 = vmax.f32 %v3356, 0.0
  %v3385 = vmax.f32 %v3357, 0.0
  %v3386 = vmax.f32 %v3358, 0.0
  %v3387 = vmax.f32 %v3359, 0.0
  %v3388 = vmax.f32 %v3360, 0.0
  %v3389 = vmax.f32 %v3361, 0.0
  %v3390 = vmax.f32 %v3362, 0.0
  %v3391 = vmax.f32 %v3363, 0.0
  %v3392 = vmax.f32 %v3364, 0.0
  %v3393 = vmax.f32 %v3365, 0.0
  %v3394 = vmax.f32 %v3366, 0.0
  %s3395 = scalar_lea.vmem %s5, 224
  %3396 = vst.msk [vmem:[%s3395] sm:$0xff] %vm40, %v3367
  %3397 = vst.msk [vmem:[%s3395 + $0x8] sm:$0x3f] %vm910, %v3368
  %3398 = vst.msk [vmem:[%s3395 + $0x10] sm:$0xff] %vm40, %v3369
  %3399 = vst.msk [vmem:[%s3395 + $0x18] sm:$0x3f] %vm910, %v3370
  %3400 = vst.msk [vmem:[%s3395 + $0x20] sm:$0xff] %vm40, %v3371
  %3401 = vst.msk [vmem:[%s3395 + $0x28] sm:$0x3f] %vm910, %v3372
  %3402 = vst.msk [vmem:[%s3395 + $0x30] sm:$0xff] %vm40, %v3373
  %3403 = vst.msk [vmem:[%s3395 + $0x38] sm:$0x3f] %vm910, %v3374
  %3404 = vst.msk [vmem:[%s3395 + $0x40] sm:$0xff] %vm40, %v3375
  %3405 = vst.msk [vmem:[%s3395 + $0x48] sm:$0x3f] %vm910, %v3376
  %3406 = vst.msk [vmem:[%s3395 + $0x50] sm:$0xff] %vm40, %v3377
  %3407 = vst.msk [vmem:[%s3395 + $0x58] sm:$0x3f] %vm910, %v3378
  %3408 = vst.msk [vmem:[%s3395 + $0x60] sm:$0xff] %vm40, %v3379
  %3409 = vst.msk [vmem:[%s3395 + $0x68] sm:$0x3f] %vm910, %v3380
  %3410 = vst.msk [vmem:[%s3395 + $0x70] sm:$0xff] %vm40, %v3381
  %3411 = vst.msk [vmem:[%s3395 + $0x78] sm:$0x3f] %vm910, %v3382
  %3412 = vst.msk [vmem:[%s3395 + $0x80] sm:$0xff] %vm40, %v3383
  %3413 = vst.msk [vmem:[%s3395 + $0x88] sm:$0x3f] %vm910, %v3384
  %3414 = vst.msk [vmem:[%s3395 + $0x90] sm:$0xff] %vm40, %v3385
  %3415 = vst.msk [vmem:[%s3395 + $0x98] sm:$0x3f] %vm910, %v3386
  %3416 = vst.msk [vmem:[%s3395 + $0xa0] sm:$0xff] %vm40, %v3387
  %3417 = vst.msk [vmem:[%s3395 + $0xa8] sm:$0x3f] %vm910, %v3388
  %3418 = vst.msk [vmem:[%s3395 + $0xb0] sm:$0xff] %vm40, %v3389
  %3419 = vst.msk [vmem:[%s3395 + $0xb8] sm:$0x3f] %vm910, %v3390
  %3420 = vst.msk [vmem:[%s3395 + $0xc0] sm:$0xff] %vm40, %v3391
  %3421 = vst.msk [vmem:[%s3395 + $0xc8] sm:$0x3f] %vm910, %v3392
  %3422 = vst.msk [vmem:[%s3395 + $0xd0] sm:$0xff] %vm40, %v3393
  %3423 = vst.msk [vmem:[%s3395 + $0xd8] sm:$0x3f] %vm910, %v3394
  // Predicated region
  $region22: #{_lambda_.1} parent=0 // pred_check
    _
  $region23: #{_lambda_.1} parent=0 // pred_check_branch
    %3425 = sbr.rel (0) target = $region25
  $region24: #{_lambda_.1} parent=0 // pred_region
    _
  $region25: #{_lambda_.1} parent=0 // pred_fallthru
    _
  // Predicated region
  $region26: #{_lambda_.1} parent=0 // pred_check
    _
  $region27: #{_lambda_.1} parent=0 // pred_check_branch
    %3427 = sbr.rel (0) target = $region29
  $region28: #{_lambda_.1} parent=0 // pred_region
    _
  $region29: #{_lambda_.1} parent=0 // pred_fallthru
    _

</llo_original>
